<compile_context>
chip_gen: v7x
topology: tpu7x:2x2x1
jax: 0.10.0
libtpu: 0.0.40
codegen_flags: <defaults>
</compile_context>

<pallas_src>
import functools

import jax
import jax.numpy as jnp
from jax.experimental import pallas as pl
from jax.experimental.pallas import tpu as pltpu


# Below this many output elements, XLA's own elementwise fusion wins (Pallas launch +
# per-step overhead >= 0.35us while the HBM time for such shapes is tens of ns).
_PALLAS_MIN_ELEMS = 1 << 17


def _fused_kernel(w_ref, b_ref, x1_ref, x2_ref, o_ref, *, min_value, max_value):
    """One row-tile of affine -> clamp -> affine -> clamp -> (t + x2) * x2.

    All blocks are (tm, Wo) and aligned; the 2-px crop of x1 already happened upstream
    (wrapper slice, fused into the input DMA via allow_input_fusion when possible).
    """
    w = w_ref[0].astype(jnp.float32)
    b = b_ref[0].astype(jnp.float32)

    x1 = x1_ref[...].astype(jnp.float32)
    x2 = x2_ref[...].astype(jnp.float32)

    t = jnp.clip(x1 * w + b, min_value, max_value)      # convt #1 (1x1, pad=1) + clamp
    t = jnp.clip(t * w + b, min_value, max_value)        # convt #2 + clamp
    o_ref[...] = ((t + x2) * x2).astype(o_ref.dtype)


def _pick_row_tile(Ho, Wo, itemsize):
    """Rows per grid step.

    Budget the double-buffered working set (x1, x2, out tiles, each 2 buffers) at ~8 MiB
    so that, together with the f32 in-kernel temporaries and Mosaic internal scratch, we
    stay well under the default scoped-VMEM limit on every generation (v5e 16 MiB,
    v6e 32 MiB, v7x 32 MiB of a 64 MiB VMEM).
    """
    budget_bytes = 8 * 1024 * 1024
    per_row = 6 * Wo * itemsize                  # 3 arrays x 2 buffers, per tile row
    tm = budget_bytes // max(per_row, 1)
    tm = min(tm, 512)                            # diminishing returns past ~512 rows
    # Prefer >= 2 grid steps: lets v7x's two TensorCores split the rows and gives the
    # DMA pipeline something to overlap.  ("parallel" is a no-op on single-TC chips.)
    tm = min(tm, ((pl.cdiv(Ho, 2) + 7) // 8) * 8)
    tm = (tm // 8) * 8                           # sublane multiple
    if tm <= 0:
        tm = 8
    return Ho if tm >= Ho else tm


def _xla_forward(x1, x2, w, b, min_value, max_value):
    H, W = x1.shape[-2:]
    x1c = x1[:, :, 2:H - 2, 2:W - 2]
    t = jnp.clip(x1c * w[0] + b[0], min_value, max_value)
    t = jnp.clip(t * w[0] + b[0], min_value, max_value)
    return (t + x2) * x2


def model_forward(x1, x2, w, b, min_value=0.005, max_value=0.6,
                  tile_rows=None, force_pallas=None):
    """x1: (1,1,H,W) NCHW; x2: (1,1,H-4,W-4) NCHW. Returns (1,1,H-4,W-4)."""
    n, c, H, W = x1.shape
    assert n == 1 and c == 1
    Ho, Wo = H - 4, W - 4                    # each convt (k=1, pad=1) crops 1 px/side
    assert Ho > 0 and Wo > 0, "spatial dims too small for two padding=1 transposed convs"
    assert x2.shape == (1, 1, Ho, Wo)
    out_dtype = x1.dtype
    itemsize = jnp.dtype(out_dtype).itemsize

    use_pallas = force_pallas
    if use_pallas is None:
        # Tiny problems: XLA fusion wins. Absurdly wide rows: even an 8-row tile would
        # not fit comfortably in scoped VMEM (this 1-D row grid does not tile columns).
        use_pallas = (Ho * Wo >= _PALLAS_MIN_ELEMS
                      and 6 * 8 * Wo * itemsize <= 12 * 1024 * 1024)
    if not use_pallas:
        return _xla_forward(x1, x2, w, b, min_value, max_value).astype(out_dtype)

    # Full 2-px crop in the wrapper (free reshape + slice).  With allow_input_fusion on
    # this operand, XLA fuses the slice into the kernel's input DMA instead of writing a
    # separate (Ho, Wo) buffer, so the kernel reads x1 straight from its original buffer.
    x1c = x1.reshape(H, W)[2:H - 2, 2:W - 2]     # (Ho, Wo)
    x2s = x2.reshape(Ho, Wo)                     # (Ho, Wo), free reshape

    if tile_rows is None:
        tm = _pick_row_tile(Ho, Wo, itemsize)
    else:
        tm = min(int(tile_rows), Ho)
        if tm < Ho:
            tm = max(8, (tm // 8) * 8)           # keep the (8, 128) block-shape rule

    grid = (pl.cdiv(Ho, tm),)

    kernel = functools.partial(_fused_kernel,
                               min_value=min_value, max_value=max_value)

    out = pl.pallas_call(
        kernel,
        out_shape=jax.ShapeDtypeStruct((Ho, Wo), out_dtype),
        grid=grid,
        in_specs=[
            pl.BlockSpec(memory_space=pltpu.SMEM),        # w (1,) scalar
            pl.BlockSpec(memory_space=pltpu.SMEM),        # b (1,) scalar
            pl.BlockSpec((tm, Wo), lambda i: (i, 0)),     # cropped x1 rows
            pl.BlockSpec((tm, Wo), lambda i: (i, 0)),     # x2
        ],
        out_specs=pl.BlockSpec((tm, Wo), lambda i: (i, 0)),
        compiler_params=pltpu.CompilerParams(
            # Row tiles are independent -> split across v7x's two TensorCores.
            dimension_semantics=("parallel",),
            # Allow XLA to fuse the wrapper-side crop of x1 into the input DMA.
            allow_input_fusion=[False, False, True, False],
        ),
        cost_estimate=pl.CostEstimate(
            flops=8 * Ho * Wo,
            transcendentals=0,
            bytes_accessed=3 * Ho * Wo * itemsize,
        ),
    )(w, b, x1c, x2s)

    return out.reshape(1, 1, Ho, Wo)


def _reference(x1, x2, w, b, min_value=0.005, max_value=0.6):
    # Pure-JAX reference with the same semantics as the PyTorch module.
    t1 = x1[:, :, 1:-1, 1:-1] * w[0] + b[0]              # ConvTranspose2d(1,1,1,p=1)
    t2 = jnp.clip(t1, min_value, max_value)
    t3 = t2[:, :, 1:-1, 1:-1] * w[0] + b[0]
    t4 = jnp.clip(t3, min_value, max_value)
    return (t4 + x2) * x2


if __name__ == "__main__":
    key = jax.random.PRNGKey(0)
    k1, k2, kw, kb = jax.random.split(key, 4)

    # ConvTranspose2d(1,1,1) params: weight (1,1,1,1) -> scalar, bias (1,) -> scalar.
    w = jax.random.uniform(kw, (1,), jnp.float32, -1.0, 1.0)
    b = jax.random.uniform(kb, (1,), jnp.float32, -1.0, 1.0)

    fwd = jax.jit(model_forward,
                  static_argnames=("min_value", "max_value", "tile_rows", "force_pallas"))

    # 1) Main Pallas path: Ho = Wo = 512 (lane-dense), auto row tiling -> 2 grid steps.
    H = W = 516
    x1 = jax.random.normal(k1, (1, 1, H, W), dtype=jnp.float32)
    x2 = jax.random.normal(k2, (1, 1, H - 4, W - 4), dtype=jnp.float32)
    out = jax.block_until_ready(fwd(x1, x2, w, b))
    assert out.shape == (1, 1, H - 4, W - 4)
    assert jnp.allclose(out, _reference(x1, x2, w, b), atol=1e-5, rtol=1e-5)

    # 2) Partial last row tile + non-128-multiple width (masked stores), forced Pallas.
    H2 = W2 = 180                                  # Ho = Wo = 176; tm=48 -> 4 steps, last partial
    x1b = jax.random.normal(k1, (1, 1, H2, W2), dtype=jnp.float32)
    x2b = jax.random.normal(k2, (1, 1, H2 - 4, W2 - 4), dtype=jnp.float32)
    outb = jax.block_until_ready(fwd(x1b, x2b, w, b, tile_rows=48, force_pallas=True))
    assert jnp.allclose(outb, _reference(x1b, x2b, w, b), atol=1e-5, rtol=1e-5)

    # 3) Tiny shape takes the XLA fallback path (Pallas per-step overhead would dominate).
    x1t = jax.random.normal(k1, (1, 1, 16, 16), dtype=jnp.float32)
    x2t = jax.random.normal(k2, (1, 1, 12, 12), dtype=jnp.float32)
    outt = jax.block_until_ready(fwd(x1t, x2t, w, b))
    assert jnp.allclose(outt, _reference(x1t, x2t, w, b), atol=1e-5, rtol=1e-5)

    print("KERNEL_OK")
</pallas_src>

<mosaic_0001>
module attributes {stable_mosaic.version = 11 : i64} {
  func.func @_fused_kernel(%arg0: i32, %arg1: memref<1xf32, #tpu.memory_space<smem>>, %arg2: memref<1xf32, #tpu.memory_space<smem>>, %arg3: memref<256x512xf32, #tpu.memory_space<vmem>>, %arg4: memref<256x512xf32, #tpu.memory_space<vmem>>, %arg5: memref<256x512xf32, #tpu.memory_space<vmem>>) attributes {dimension_semantics = [#tpu.dimension_semantics<parallel>], iteration_bounds = array<i64: 2>, scalar_prefetch = 0 : i64, scratch_operands = 0 : i64, tpu.core_type = #tpu.core_type<tc>, window_params = [{transform_indices = @transform_0, window_bounds = array<i64: 1>}, {transform_indices = @transform_1, window_bounds = array<i64: 1>}, {transform_indices = @transform_2, window_bounds = array<i64: 256, 512>}, {transform_indices = @transform_3, window_bounds = array<i64: 256, 512>}, {transform_indices = @transform_4, window_bounds = array<i64: 256, 512>}]} {
    %c0 = arith.constant 0 : index
    %0 = memref.load %arg1[%c0] : memref<1xf32, #tpu.memory_space<smem>>
    %c0_0 = arith.constant 0 : index
    %1 = memref.load %arg2[%c0_0] : memref<1xf32, #tpu.memory_space<smem>>
    %c0_1 = arith.constant 0 : index
    %c0_2 = arith.constant 0 : index
    %2 = vector.load %arg3[%c0_1, %c0_2] : memref<256x512xf32, #tpu.memory_space<vmem>>, vector<256x512xf32>
    %c0_3 = arith.constant 0 : index
    %c0_4 = arith.constant 0 : index
    %3 = vector.load %arg4[%c0_3, %c0_4] : memref<256x512xf32, #tpu.memory_space<vmem>>, vector<256x512xf32>
    %4 = vector.broadcast %0 : f32 to vector<256x512xf32>
    %5 = arith.mulf %2, %4 : vector<256x512xf32>
    %6 = vector.broadcast %1 : f32 to vector<256x512xf32>
    %7 = arith.addf %5, %6 : vector<256x512xf32>
    %cst = arith.constant 5.000000e-03 : f32
    %cst_5 = arith.constant 6.000000e-01 : f32
    %8 = vector.broadcast %cst : f32 to vector<256x512xf32>
    %9 = arith.maximumf %8, %7 : vector<256x512xf32>
    %10 = vector.broadcast %cst_5 : f32 to vector<256x512xf32>
    %11 = arith.minimumf %10, %9 : vector<256x512xf32>
    %12 = vector.broadcast %0 : f32 to vector<256x512xf32>
    %13 = arith.mulf %11, %12 : vector<256x512xf32>
    %14 = vector.broadcast %1 : f32 to vector<256x512xf32>
    %15 = arith.addf %13, %14 : vector<256x512xf32>
    %cst_6 = arith.constant 5.000000e-03 : f32
    %cst_7 = arith.constant 6.000000e-01 : f32
    %16 = vector.broadcast %cst_6 : f32 to vector<256x512xf32>
    %17 = arith.maximumf %16, %15 : vector<256x512xf32>
    %18 = vector.broadcast %cst_7 : f32 to vector<256x512xf32>
    %19 = arith.minimumf %18, %17 : vector<256x512xf32>
    %20 = arith.addf %19, %3 : vector<256x512xf32>
    %21 = arith.mulf %20, %3 : vector<256x512xf32>
    %c0_8 = arith.constant 0 : index
    %c0_9 = arith.constant 0 : index
    %22 = vector.load %arg5[%c0_8, %c0_9] : memref<256x512xf32, #tpu.memory_space<vmem>>, vector<256x512xf32>
    tpu.vector_store %arg5[%c0_8, %c0_9], %21 {strides = array<i32>} : memref<256x512xf32, #tpu.memory_space<vmem>>, vector<256x512xf32>,
    return
  }
  func.func @transform_0(%arg0: i32) -> i32 {
    %c0_i32 = arith.constant 0 : i32
    %c0_i32_0 = arith.constant 0 : i32
    return %c0_i32 : i32
  }
  func.func @transform_1(%arg0: i32) -> i32 {
    %c0_i32 = arith.constant 0 : i32
    %c0_i32_0 = arith.constant 0 : i32
    return %c0_i32 : i32
  }
  func.func @transform_2(%arg0: i32) -> (i32, i32) {
    %c0_i32 = arith.constant 0 : i32
    %c0_i32_0 = arith.constant 0 : i32
    return %arg0, %c0_i32 : i32, i32
  }
  func.func @transform_3(%arg0: i32) -> (i32, i32) {
    %c0_i32 = arith.constant 0 : i32
    %c0_i32_0 = arith.constant 0 : i32
    return %arg0, %c0_i32 : i32, i32
  }
  func.func @transform_4(%arg0: i32) -> (i32, i32) {
    %c0_i32 = arith.constant 0 : i32
    %c0_i32_0 = arith.constant 0 : i32
    return %arg0, %c0_i32 : i32, i32
  }
}

</mosaic_0001>

<llo_original>
// kernel: model_forward.2
$region0: #{model_forward.2}
  #allocation0 [shape = 'u32[]', space=smem, size = 0x4, offset = 0x4, fixed_abs, tag = 'smem constant byte address 0x4 - core index']
  #allocation1 [shape = 'u32[144,128]{1,0:T(1,128)}', space=vmem, size = 0x12000, scoped, tag = 'internal scratch']
  #allocation2 [shape = 'f32[1]{0:T(128)S(6)}', space=smem, size = 0x200, scoped, tag = 'scoped memory for model_forward.2']
  #allocation3 [shape = 'f32[1]{0:T(128)S(6)}', space=smem, size = 0x200, scoped, tag = 'scoped memory for model_forward.2']
  #allocation4 [shape = 'u32[2048]{0}', space=vmem, size = 0x2000, scoped, tag = 'scoped memory for model_forward.2']
  #allocation5 [shape = 'u32[2048]{0}', space=vmem, size = 0x2000, scoped, tag = 'scoped memory for model_forward.2']
  #allocation6 [shape = 'u32[2048]{0}', space=vmem, size = 0x2000, scoped, tag = 'scoped memory for model_forward.2']
  #allocation7 [shape = 'u32[2048]{0}', space=vmem, size = 0x2000, scoped, tag = 'scoped memory for model_forward.2']
  #allocation8 [shape = 'u32[2048]{0}', space=vmem, size = 0x2000, scoped, tag = 'scoped memory for model_forward.2']
  %s0 = inlined_call_operand.<no memory space> [shape: f32[1], index: 0, kind: input, shape index: {}]
  %s1 = inlined_call_operand.<no memory space> [shape: f32[1], index: 1, kind: input, shape index: {}]
  %s2 = inlined_call_operand.vmem [shape: f32[512,512], index: 2, kind: input, shape index: {}]
  %s3 = inlined_call_operand.vmem [shape: f32[516,516], index: 3, kind: input, shape index: {}]
  %s4 = inlined_call_operand.hbm [shape: f32[512,512], index: 4, kind: output, shape index: {}]
  %s5 = sld [smem:[#allocation0]]
  $region49: #{model_forward.2} parent=0
    _
  %s7 = ssub.s32 1, %s5
  %s8 = scalar_select 0, %s7, %s5
  %9 = sst [smem:[#allocation2]] %s0
  %10 = sst [smem:[#allocation3]] %s1
  $region1: #{model_forward.2} parent=0
    #allocation9 [shape = 'u8[1048576]{0}', space=vmem, size = 0x100000, scoped, tag = 'output window, operand 0']
    #allocation10 [shape = 's32[2]{0}', space=sflag, size = 0x8, scoped, tag = 'scoped memory for model_forward.2']
    %11 = vsyncpa [#allocation10], 0
    %s12 = scalar_lea.sflag [#allocation10], 1
    %13 = vsyncpa %s12, 0
    loop: start=0, step=1, limit=4
    $region2: #{model_forward.2} parent=1 // loop_pre_header
      _
    $region3: #{model_forward.2} parent=1 // loop_header
      %s15 = sphi 0, %s19
      %p16 = scmp.ge.s32.totalorder %s15, 4
      %s23 = sphi 0, %s23
      %s25 = sphi 0, %s23
      %s26 = sphi 0, %s25
      %s40 = sphi 0, %s26
      %s44 = sphi 0, %s44
      %s46 = sphi 0, %s44
      %s47 = sphi 0, %s46
      %s61 = sphi 0, %s47
      %s67 = sphi 0, %s69
      %s70 = sphi 0, %s67
      %s71 = sphi 0, %s70
      %s87 = sphi 0, %s71
      %s93 = sphi 0, %s95
      %s96 = sphi 0, %s93
      %s97 = sphi 0, %s96
      %s113 = sphi 0, %s97
      %s119 = sphi 0, %s121
      %s122 = sphi 0, %s119
      %s123 = sphi 0, %s122
      %s139 = sphi 0, %s123
    $region4: #{model_forward.2} parent=1 // loop_header_branch
      %18 = sbr.rel (%p16) target = $region8
    $region5: #{model_forward.2} parent=1 // loop_body
      %s20 = ssub.s32 %s15, 1
      %s21 = ssub.s32 %s15, 2
      %s22 = sadd.s32 %s15, 1
      %s24 = sadd.s32 %s23, 1
      %p27 = scmp.eq.s32.totalorder %s15, 1
      %p28 = scmp.ne.s32.totalorder %s23, %s25
      %p29 = scmp.eq.s32.totalorder %s15, 0
      %p30 = por %p28, %p29
      %p31 = scmp.ne.s32.totalorder %s23, %s25
      %p32 = scmp.eq.s32.totalorder %s20, 1
      %p33 = por %p31, %p32
      %p34 = scmp.ne.s32.totalorder %s25, %s26
      %p35 = scmp.eq.s32.totalorder %s20, 0
      %p36 = por %p34, %p35
      %p37 = scmp.ne.s32.totalorder %s25, %s26
      %p38 = scmp.eq.s32.totalorder %s21, 1
      %p39 = por %p37, %p38
      %p41 = scmp.ne.s32.totalorder %s26, %s40
      %p42 = scmp.eq.s32.totalorder %s21, 0
      %p43 = por %p41, %p42
      %s45 = sadd.s32 %s44, 1
      %p48 = scmp.eq.s32.totalorder %s15, 1
      %p49 = scmp.ne.s32.totalorder %s44, %s46
      %p50 = scmp.eq.s32.totalorder %s15, 0
      %p51 = por %p49, %p50
      %p52 = scmp.ne.s32.totalorder %s44, %s46
      %p53 = scmp.eq.s32.totalorder %s20, 1
      %p54 = por %p52, %p53
      %p55 = scmp.ne.s32.totalorder %s46, %s47
      %p56 = scmp.eq.s32.totalorder %s20, 0
      %p57 = por %p55, %p56
      %p58 = scmp.ne.s32.totalorder %s46, %s47
      %p59 = scmp.eq.s32.totalorder %s21, 1
      %p60 = por %p58, %p59
      %p62 = scmp.ne.s32.totalorder %s47, %s61
      %p63 = scmp.eq.s32.totalorder %s21, 0
      %p64 = por %p62, %p63
      %s65 = ssub.s32 %s15, %s22
      %p66 = scmp.eq.s32.totalorder %s65, 0
      %s68 = sadd.s32 %s67, 1
      %s69 = scalar_select %p66, %s67, %s68
      %p72 = pneg %p66
      %p73 = scmp.eq.s32.totalorder %s15, 1
      %p74 = por %p72, %p73
      %p75 = scmp.ne.s32.totalorder %s67, %s70
      %p76 = scmp.eq.s32.totalorder %s15, 0
      %p77 = por %p75, %p76
      %p78 = scmp.ne.s32.totalorder %s67, %s70
      %p79 = scmp.eq.s32.totalorder %s20, 1
      %p80 = por %p78, %p79
      %p81 = scmp.ne.s32.totalorder %s70, %s71
      %p82 = scmp.eq.s32.totalorder %s20, 0
      %p83 = por %p81, %p82
      %p84 = scmp.ne.s32.totalorder %s70, %s71
      %p85 = scmp.eq.s32.totalorder %s21, 1
      %p86 = por %p84, %p85
      %p88 = scmp.ne.s32.totalorder %s71, %s87
      %p89 = scmp.eq.s32.totalorder %s21, 0
      %p90 = por %p88, %p89
      %s91 = ssub.s32 %s15, %s22
      %p92 = scmp.eq.s32.totalorder %s91, 0
      %s94 = sadd.s32 %s93, 1
      %s95 = scalar_select %p92, %s93, %s94
      %p98 = pneg %p92
      %p99 = scmp.eq.s32.totalorder %s15, 1
      %p100 = por %p98, %p99
      %p101 = scmp.ne.s32.totalorder %s93, %s96
      %p102 = scmp.eq.s32.totalorder %s15, 0
      %p103 = por %p101, %p102
      %p104 = scmp.ne.s32.totalorder %s93, %s96
      %p105 = scmp.eq.s32.totalorder %s20, 1
      %p106 = por %p104, %p105
      %p107 = scmp.ne.s32.totalorder %s96, %s97
      %p108 = scmp.eq.s32.totalorder %s20, 0
      %p109 = por %p107, %p108
      %p110 = scmp.ne.s32.totalorder %s96, %s97
      %p111 = scmp.eq.s32.totalorder %s21, 1
      %p112 = por %p110, %p111
      %p114 = scmp.ne.s32.totalorder %s97, %s113
      %p115 = scmp.eq.s32.totalorder %s21, 0
      %p116 = por %p114, %p115
      %s117 = ssub.s32 %s15, %s22
      %p118 = scmp.eq.s32.totalorder %s117, 0
      %s120 = sadd.s32 %s119, 1
      %s121 = scalar_select %p118, %s119, %s120
      %p124 = pneg %p118
      %p125 = scmp.eq.s32.totalorder %s15, 1
      %p126 = por %p124, %p125
      %p127 = scmp.ne.s32.totalorder %s119, %s122
      %p128 = scmp.eq.s32.totalorder %s15, 0
      %p129 = por %p127, %p128
      %p130 = scmp.ne.s32.totalorder %s119, %s122
      %p131 = scmp.eq.s32.totalorder %s20, 1
      %p132 = por %p130, %p131
      %p133 = scmp.ne.s32.totalorder %s122, %s123
      %p134 = scmp.eq.s32.totalorder %s20, 0
      %p135 = por %p133, %p134
      %p136 = scmp.ne.s32.totalorder %s122, %s123
      %p137 = scmp.eq.s32.totalorder %s21, 1
      %p138 = por %p136, %p137
      %p140 = scmp.ne.s32.totalorder %s123, %s139
      %p141 = scmp.eq.s32.totalorder %s21, 0
      %p142 = por %p140, %p141
      %p143 = scmp.le.s32.totalorder 1, %s15
      %p144 = scmp.lt.s32.totalorder %s15, 3
      %p145 = pnand %p143, %p144
      %p146 = pneg %p145
      // Predicated region
      $region9: #{model_forward.2} parent=5 // pred_check
        _
      $region10: #{model_forward.2} parent=5 // pred_check_branch
        %148 = sbr.rel (%p145) target = $region12
      $region11: #{model_forward.2} parent=5 // pred_region
        %s149 = ssub.s32 %s15, 1
        // Predicated region
        $region13: #{model_forward.2} parent=11 // pred_check
          %p150 = pneg %p36
        $region14: #{model_forward.2} parent=11 // pred_check_branch
          %152 = sbr.rel (%p150) target = $region16
        $region15: #{model_forward.2} parent=11 // pred_region
          _
        $region16: #{model_forward.2} parent=11 // pred_fallthru
          _
        // Predicated region
        $region17: #{model_forward.2} parent=11 // pred_check
          %p153 = pneg %p57
        $region18: #{model_forward.2} parent=11 // pred_check_branch
          %155 = sbr.rel (%p153) target = $region20
        $region19: #{model_forward.2} parent=11 // pred_region
          _
        $region20: #{model_forward.2} parent=11 // pred_fallthru
          _
      $region12: #{model_forward.2} parent=5 // pred_fallthru
        _
      %p156 = scmp.lt.s32.totalorder %s15, 2
      // Predicated region
      $region21: #{model_forward.2} parent=5 // pred_check
        %p157 = pneg %p156
      $region22: #{model_forward.2} parent=5 // pred_check_branch
        %159 = sbr.rel (%p157) target = $region24
      $region23: #{model_forward.2} parent=5 // pred_region
        // Predicated region
        $region25: #{model_forward.2} parent=23 // pred_check
          %p160 = pneg %p77
        $region26: #{model_forward.2} parent=23 // pred_check_branch
          %162 = sbr.rel (%p160) target = $region28
        $region27: #{model_forward.2} parent=23 // pred_region
          %s163 = smul.u32 32, %s15
          %s164 = ssub.s32 65, %s163
          %p165 = scmp.lt.s32.totalorder %s164, 33
          %s166 = scalar_select %p165, %s164, 33
          %s167 = smul.u32 128, %s166
          %s168 = smul.u32 %s167, 5
          %p169 = scmp.lt.s32.totalorder %s163, 64
          %s170 = scalar_select %p169, %s163, 64
          %s171 = smul.addr %s170, 5
          %s172 = smul.addr %s171, 8
          %s173 = scalar_lea.vmem %s3, %s172
          %s174 = smul.u32 32, %s15
          %s175 = ssub.s32 65, %s174
          %p176 = scmp.lt.s32.totalorder %s175, 33
          %s177 = scalar_select %p176, %s175, 33
          %s178 = smul.u32 128, %s177
          %s179 = smul.u32 %s178, 5
        $region28: #{model_forward.2} parent=23 // pred_fallthru
          _
        // Predicated region
        $region29: #{model_forward.2} parent=23 // pred_check
          %p180 = pneg %p103
        $region30: #{model_forward.2} parent=23 // pred_check_branch
          %182 = sbr.rel (%p180) target = $region32
        $region31: #{model_forward.2} parent=23 // pred_region
          %s183 = smul.u32 32, %s15
          %p184 = scmp.lt.s32.totalorder %s183, 63
          %s185 = scalar_select %p184, %s183, 63
          %s186 = smul.addr %s185, 4
          %s187 = smul.addr %s186, 8
          %s188 = scalar_lea.vmem %s2, %s187
          %s189 = smul.u32 32, %s15
        $region32: #{model_forward.2} parent=23 // pred_fallthru
          _
      $region24: #{model_forward.2} parent=5 // pred_fallthru
        _
      %p190 = scmp.le.s32.totalorder 1, %s15
      %p191 = scmp.lt.s32.totalorder %s15, 3
      %p192 = pnand %p190, %p191
      %p193 = pneg %p192
      // Predicated region
      $region33: #{model_forward.2} parent=5 // pred_check
        _
      $region34: #{model_forward.2} parent=5 // pred_check_branch
        %195 = sbr.rel (%p192) target = $region36
      $region35: #{model_forward.2} parent=5 // pred_region
        #allocation11 [shape = 'u8[524288]{0}', space=vmem, size = 0x80000, dematerialized = true, scoped, tag = 'FusionAdapter Buffer %fusion.1 = f32[512,512]{1,0:T(8,128)} fusion(%param_3.1), kind=kLoop, calls=%fused_computation.2.clone, metadata={op_name="jit(model_forward)/slice" stack_frame_id=7}']
        %s196 = ssub.s32 %s15, 1
        %p197 = pneg %p36
        %p198 = pneg %p33
        %p199 = pneg %p57
        %p200 = pneg %p54
        %s201 = smul.u32 32, %s20
        %s202 = ssub.s32 65, %s201
        %p203 = scmp.lt.s32.totalorder %s202, 33
        %s204 = scalar_select %p203, %s202, 33
        %s205 = smul.u32 128, %s204
        %s206 = smul.u32 %s205, 5
        %p207 = scmp.lt.s32.totalorder %s201, 64
        %s208 = scalar_select %p207, %s201, 64
        %s209 = smul.addr %s208, 5
        %s210 = smul.addr %s209, 8
        %s211 = scalar_lea.vmem %s3, %s210
        %p212 = pneg %p83
        %p213 = pneg %p80
        %s214 = smul.u32 32, %s20
        %p215 = scmp.lt.s32.totalorder %s214, 63
        %s216 = scalar_select %p215, %s214, 63
        %s217 = smul.addr %s216, 4
        %s218 = smul.addr %s217, 8
        %s219 = scalar_lea.vmem %s2, %s218
        %p220 = pneg %p109
        %p221 = pneg %p106
        %p222 = pneg %p135
        %p223 = pneg %p132
        %s224 = sand.u32 %s122, 1
        %s225 = scalar_lea.sflag [#allocation10], %s224
        %s226 = sand.u32 %s122, 1
        %s227 = smul.addr %s226, 1024
        %s228 = scalar_lea.vmem [#allocation9], %s227
        %s229 = smul.u32 32, %s20
        %s230 = ssub.s32 65, %s229
        %p231 = scmp.lt.s32.totalorder %s230, 33
        %s232 = scalar_select %p231, %s230, 33
        %s233 = smul.u32 128, %s232
        %s234 = smul.u32 %s233, 5
        %p235 = scmp.lt.s32.totalorder %s229, 64
        %s236 = scalar_select %p235, %s229, 64
        %s237 = smul.addr %s236, 5
        %s238 = smul.addr %s237, 8
        %s239 = scalar_lea.vmem %s3, %s238
        %s240 = smul.u32 32, %s20
        %s241 = ssub.s32 65, %s240
        %p242 = scmp.lt.s32.totalorder %s241, 33
        %s243 = scalar_select %p242, %s241, 33
        %s244 = smul.u32 128, %s243
        %s245 = smul.u32 %s244, 5
        %s246 = smul.u32 32, %s20
        %p247 = scmp.lt.s32.totalorder %s246, 63
        %s248 = scalar_select %p247, %s246, 63
        %s249 = smul.addr %s248, 4
        %s250 = smul.addr %s249, 8
        %s251 = scalar_lea.vmem %s2, %s250
        %s252 = smul.u32 32, %s20
        %s253 = smul.u32 32, %s20
        %v254 = vld [vmem:[%s239] sm:$0xff]
        %s255 = scalar_lea.vmem %s239, 40
        %v256 = vld [vmem:[%s255] sm:$0xff]
        %vm257 = vcmask 1041408
        %v258 = vsel %vm257, %v256, %v254
        %v259 = vrot.slane %v258, 2
        %s260 = scalar_lea.vmem %s239, 8
        %v261 = vld [vmem:[%s260] sm:$0xff]
        %s262 = scalar_lea.vmem %s239, 48
        %v263 = vld [vmem:[%s262] sm:$0xff]
        %vm264 = vcmask 1041408
        %v265 = vsel %vm264, %v263, %v261
        %v266 = vrot.slane %v265, 2
        %v267 = vlaneseq
        %v268 = vand.u32 %v267, 127
        %vm269 = vcmp.lt.s32.totalorder %v268, 2
        %v270 = vsel %vm269, %v266, %v259
        %271 = vrot.lane.b32.xlu0 %v270, 126
        %v272 = vpop.permute.xlu0 %271
        %274 = vst [vmem:[#allocation11] sm:$0xff] %v272
        %vm275 = vcmask 1041408
        %v276 = vsel %vm275, %v263, %v261
        %v277 = vrot.slane %v276, 2
        %s278 = scalar_lea.vmem %s239, 16
        %v279 = vld [vmem:[%s278] sm:$0xff]
        %s280 = scalar_lea.vmem %s239, 56
        %v281 = vld [vmem:[%s280] sm:$0xff]
        %vm282 = vcmask 1041408
        %v283 = vsel %vm282, %v281, %v279
        %v284 = vrot.slane %v283, 2
        %v285 = vlaneseq
        %v286 = vand.u32 %v285, 127
        %vm287 = vcmp.lt.s32.totalorder %v286, 2
        %v288 = vsel %vm287, %v284, %v277
        %289 = vrot.lane.b32.xlu0 %v288, 126
        %v290 = vpop.permute.xlu0 %289
        %s291 = scalar_lea.vmem [#allocation11], 8
        %293 = vst [vmem:[%s291] sm:$0xff] %v290
        %vm294 = vcmask 1041408
        %v295 = vsel %vm294, %v281, %v279
        %v296 = vrot.slane %v295, 2
        %s297 = scalar_lea.vmem %s239, 24
        %v298 = vld [vmem:[%s297] sm:$0xff]
        %s299 = scalar_lea.vmem %s239, 64
        %v300 = vld [vmem:[%s299] sm:$0xff]
        %vm301 = vcmask 1041408
        %v302 = vsel %vm301, %v300, %v298
        %v303 = vrot.slane %v302, 2
        %v304 = vlaneseq
        %v305 = vand.u32 %v304, 127
        %vm306 = vcmp.lt.s32.totalorder %v305, 2
        %v307 = vsel %vm306, %v303, %v296
        %308 = vrot.lane.b32.xlu0 %v307, 126
        %v309 = vpop.permute.xlu0 %308
        %s310 = scalar_lea.vmem [#allocation11], 16
        %312 = vst [vmem:[%s310] sm:$0xff] %v309
        %vm313 = vcmask 1041408
        %v314 = vsel %vm313, %v300, %v298
        %v315 = vrot.slane %v314, 2
        %s316 = scalar_lea.vmem %s239, 32
        %v317 = vld [vmem:[%s316] sm:$0xff]
        %s318 = scalar_lea.vmem %s239, 72
        %v319 = vld [vmem:[%s318] sm:$0xff]
        %vm320 = vcmask 1041408
        %v321 = vsel %vm320, %v319, %v317
        %v322 = vrot.slane %v321, 2
        %v323 = vlaneseq
        %v324 = vand.u32 %v323, 127
        %vm325 = vcmp.lt.s32.totalorder %v324, 2
        %v326 = vsel %vm325, %v322, %v315
        %327 = vrot.lane.b32.xlu0 %v326, 126
        %v328 = vpop.permute.xlu0 %327
        %s329 = scalar_lea.vmem [#allocation11], 24
        %331 = vst [vmem:[%s329] sm:$0xff] %v328
        %s332 = scalar_lea.vmem %s239, 80
        %v333 = vld [vmem:[%s332] sm:$0xff]
        %vm334 = vcmask 1041408
        %v335 = vsel %vm334, %v333, %v256
        %v336 = vrot.slane %v335, 2
        %s337 = scalar_lea.vmem %s239, 88
        %v338 = vld [vmem:[%s337] sm:$0xff]
        %vm339 = vcmask 1041408
        %v340 = vsel %vm339, %v338, %v263
        %v341 = vrot.slane %v340, 2
        %v342 = vlaneseq
        %v343 = vand.u32 %v342, 127
        %vm344 = vcmp.lt.s32.totalorder %v343, 2
        %v345 = vsel %vm344, %v341, %v336
        %346 = vrot.lane.b32.xlu0 %v345, 126
        %v347 = vpop.permute.xlu0 %346
        %s348 = scalar_lea.vmem [#allocation11], 32
        %350 = vst [vmem:[%s348] sm:$0xff] %v347
        %vm351 = vcmask 1041408
        %v352 = vsel %vm351, %v338, %v263
        %v353 = vrot.slane %v352, 2
        %s354 = scalar_lea.vmem %s239, 96
        %v355 = vld [vmem:[%s354] sm:$0xff]
        %vm356 = vcmask 1041408
        %v357 = vsel %vm356, %v355, %v281
        %v358 = vrot.slane %v357, 2
        %v359 = vlaneseq
        %v360 = vand.u32 %v359, 127
        %vm361 = vcmp.lt.s32.totalorder %v360, 2
        %v362 = vsel %vm361, %v358, %v353
        %363 = vrot.lane.b32.xlu0 %v362, 126
        %v364 = vpop.permute.xlu0 %363
        %s365 = scalar_lea.vmem [#allocation11], 40
        %367 = vst [vmem:[%s365] sm:$0xff] %v364
        %vm368 = vcmask 1041408
        %v369 = vsel %vm368, %v355, %v281
        %v370 = vrot.slane %v369, 2
        %s371 = scalar_lea.vmem %s239, 104
        %v372 = vld [vmem:[%s371] sm:$0xff]
        %vm373 = vcmask 1041408
        %v374 = vsel %vm373, %v372, %v300
        %v375 = vrot.slane %v374, 2
        %v376 = vlaneseq
        %v377 = vand.u32 %v376, 127
        %vm378 = vcmp.lt.s32.totalorder %v377, 2
        %v379 = vsel %vm378, %v375, %v370
        %380 = vrot.lane.b32.xlu0 %v379, 126
        %v381 = vpop.permute.xlu0 %380
        %s382 = scalar_lea.vmem [#allocation11], 48
        %384 = vst [vmem:[%s382] sm:$0xff] %v381
        %vm385 = vcmask 1041408
        %v386 = vsel %vm385, %v372, %v300
        %v387 = vrot.slane %v386, 2
        %s388 = scalar_lea.vmem %s239, 112
        %v389 = vld [vmem:[%s388] sm:$0xff]
        %vm390 = vcmask 1041408
        %v391 = vsel %vm390, %v389, %v319
        %v392 = vrot.slane %v391, 2
        %v393 = vlaneseq
        %v394 = vand.u32 %v393, 127
        %vm395 = vcmp.lt.s32.totalorder %v394, 2
        %v396 = vsel %vm395, %v392, %v387
        %397 = vrot.lane.b32.xlu0 %v396, 126
        %v398 = vpop.permute.xlu0 %397
        %s399 = scalar_lea.vmem [#allocation11], 56
        %401 = vst [vmem:[%s399] sm:$0xff] %v398
        %s402 = scalar_lea.vmem %s239, 120
        %v403 = vld [vmem:[%s402] sm:$0xff]
        %vm404 = vcmask 1041408
        %v405 = vsel %vm404, %v403, %v333
        %v406 = vrot.slane %v405, 2
        %s407 = scalar_lea.vmem %s239, 128
        %v408 = vld [vmem:[%s407] sm:$0xff]
        %vm409 = vcmask 1041408
        %v410 = vsel %vm409, %v408, %v338
        %v411 = vrot.slane %v410, 2
        %v412 = vlaneseq
        %v413 = vand.u32 %v412, 127
        %vm414 = vcmp.lt.s32.totalorder %v413, 2
        %v415 = vsel %vm414, %v411, %v406
        %416 = vrot.lane.b32.xlu0 %v415, 126
        %v417 = vpop.permute.xlu0 %416
        %s418 = scalar_lea.vmem [#allocation11], 64
        %420 = vst [vmem:[%s418] sm:$0xff] %v417
        %vm421 = vcmask 1041408
        %v422 = vsel %vm421, %v408, %v338
        %v423 = vrot.slane %v422, 2
        %s424 = scalar_lea.vmem %s239, 136
        %v425 = vld [vmem:[%s424] sm:$0xff]
        %vm426 = vcmask 1041408
        %v427 = vsel %vm426, %v425, %v355
        %v428 = vrot.slane %v427, 2
        %v429 = vlaneseq
        %v430 = vand.u32 %v429, 127
        %vm431 = vcmp.lt.s32.totalorder %v430, 2
        %v432 = vsel %vm431, %v428, %v423
        %433 = vrot.lane.b32.xlu0 %v432, 126
        %v434 = vpop.permute.xlu0 %433
        %s435 = scalar_lea.vmem [#allocation11], 72
        %437 = vst [vmem:[%s435] sm:$0xff] %v434
        %vm438 = vcmask 1041408
        %v439 = vsel %vm438, %v425, %v355
        %v440 = vrot.slane %v439, 2
        %s441 = scalar_lea.vmem %s239, 144
        %v442 = vld [vmem:[%s441] sm:$0xff]
        %vm443 = vcmask 1041408
        %v444 = vsel %vm443, %v442, %v372
        %v445 = vrot.slane %v444, 2
        %v446 = vlaneseq
        %v447 = vand.u32 %v446, 127
        %vm448 = vcmp.lt.s32.totalorder %v447, 2
        %v449 = vsel %vm448, %v445, %v440
        %450 = vrot.lane.b32.xlu0 %v449, 126
        %v451 = vpop.permute.xlu0 %450
        %s452 = scalar_lea.vmem [#allocation11], 80
        %454 = vst [vmem:[%s452] sm:$0xff] %v451
        %vm455 = vcmask 1041408
        %v456 = vsel %vm455, %v442, %v372
        %v457 = vrot.slane %v456, 2
        %s458 = scalar_lea.vmem %s239, 152
        %v459 = vld [vmem:[%s458] sm:$0xff]
        %vm460 = vcmask 1041408
        %v461 = vsel %vm460, %v459, %v389
        %v462 = vrot.slane %v461, 2
        %v463 = vlaneseq
        %v464 = vand.u32 %v463, 127
        %vm465 = vcmp.lt.s32.totalorder %v464, 2
        %v466 = vsel %vm465, %v462, %v457
        %467 = vrot.lane.b32.xlu0 %v466, 126
        %v468 = vpop.permute.xlu0 %467
        %s469 = scalar_lea.vmem [#allocation11], 88
        %471 = vst [vmem:[%s469] sm:$0xff] %v468
        %s472 = scalar_lea.vmem %s239, 160
        %v473 = vld [vmem:[%s472] sm:$0xff]
        %vm474 = vcmask 1041408
        %v475 = vsel %vm474, %v473, %v403
        %v476 = vrot.slane %v475, 2
        %s477 = scalar_lea.vmem %s239, 168
        %v478 = vld [vmem:[%s477] sm:$0xff]
        %vm479 = vcmask 1041408
        %v480 = vsel %vm479, %v478, %v408
        %v481 = vrot.slane %v480, 2
        %v482 = vlaneseq
        %v483 = vand.u32 %v482, 127
        %vm484 = vcmp.lt.s32.totalorder %v483, 2
        %v485 = vsel %vm484, %v481, %v476
        %486 = vrot.lane.b32.xlu0 %v485, 126
        %v487 = vpop.permute.xlu0 %486
        %s488 = scalar_lea.vmem [#allocation11], 96
        %490 = vst [vmem:[%s488] sm:$0xff] %v487
        %vm491 = vcmask 1041408
        %v492 = vsel %vm491, %v478, %v408
        %v493 = vrot.slane %v492, 2
        %s494 = scalar_lea.vmem %s239, 176
        %v495 = vld [vmem:[%s494] sm:$0xff]
        %vm496 = vcmask 1041408
        %v497 = vsel %vm496, %v495, %v425
        %v498 = vrot.slane %v497, 2
        %v499 = vlaneseq
        %v500 = vand.u32 %v499, 127
        %vm501 = vcmp.lt.s32.totalorder %v500, 2
        %v502 = vsel %vm501, %v498, %v493
        %503 = vrot.lane.b32.xlu0 %v502, 126
        %v504 = vpop.permute.xlu0 %503
        %s505 = scalar_lea.vmem [#allocation11], 104
        %507 = vst [vmem:[%s505] sm:$0xff] %v504
        %vm508 = vcmask 1041408
        %v509 = vsel %vm508, %v495, %v425
        %v510 = vrot.slane %v509, 2
        %s511 = scalar_lea.vmem %s239, 184
        %v512 = vld [vmem:[%s511] sm:$0xff]
        %vm513 = vcmask 1041408
        %v514 = vsel %vm513, %v512, %v442
        %v515 = vrot.slane %v514, 2
        %v516 = vlaneseq
        %v517 = vand.u32 %v516, 127
        %vm518 = vcmp.lt.s32.totalorder %v517, 2
        %v519 = vsel %vm518, %v515, %v510
        %520 = vrot.lane.b32.xlu0 %v519, 126
        %v521 = vpop.permute.xlu0 %520
        %s522 = scalar_lea.vmem [#allocation11], 112
        %524 = vst [vmem:[%s522] sm:$0xff] %v521
        %vm525 = vcmask 1041408
        %v526 = vsel %vm525, %v512, %v442
        %v527 = vrot.slane %v526, 2
        %s528 = scalar_lea.vmem %s239, 192
        %v529 = vld [vmem:[%s528] sm:$0xff]
        %vm530 = vcmask 1041408
        %v531 = vsel %vm530, %v529, %v459
        %v532 = vrot.slane %v531, 2
        %v533 = vlaneseq
        %v534 = vand.u32 %v533, 127
        %vm535 = vcmp.lt.s32.totalorder %v534, 2
        %v536 = vsel %vm535, %v532, %v527
        %537 = vrot.lane.b32.xlu0 %v536, 126
        %v538 = vpop.permute.xlu0 %537
        %s539 = scalar_lea.vmem [#allocation11], 120
        %541 = vst [vmem:[%s539] sm:$0xff] %v538
        %s542 = scalar_lea.vmem %s239, 200
        %v543 = vld [vmem:[%s542] sm:$0xff]
        %vm544 = vcmask 1041408
        %v545 = vsel %vm544, %v543, %v473
        %v546 = vrot.slane %v545, 2
        %s547 = scalar_lea.vmem %s239, 208
        %v548 = vld [vmem:[%s547] sm:$0xff]
        %vm549 = vcmask 1041408
        %v550 = vsel %vm549, %v548, %v478
        %v551 = vrot.slane %v550, 2
        %v552 = vlaneseq
        %v553 = vand.u32 %v552, 127
        %vm554 = vcmp.lt.s32.totalorder %v553, 2
        %v555 = vsel %vm554, %v551, %v546
        %556 = vrot.lane.b32.xlu0 %v555, 126
        %v557 = vpop.permute.xlu0 %556
        %s558 = scalar_lea.vmem [#allocation11], 128
        %560 = vst [vmem:[%s558] sm:$0xff] %v557
        %vm561 = vcmask 1041408
        %v562 = vsel %vm561, %v548, %v478
        %v563 = vrot.slane %v562, 2
        %s564 = scalar_lea.vmem %s239, 216
        %v565 = vld [vmem:[%s564] sm:$0xff]
        %vm566 = vcmask 1041408
        %v567 = vsel %vm566, %v565, %v495
        %v568 = vrot.slane %v567, 2
        %v569 = vlaneseq
        %v570 = vand.u32 %v569, 127
        %vm571 = vcmp.lt.s32.totalorder %v570, 2
        %v572 = vsel %vm571, %v568, %v563
        %573 = vrot.lane.b32.xlu0 %v572, 126
        %v574 = vpop.permute.xlu0 %573
        %s575 = scalar_lea.vmem [#allocation11], 136
        %577 = vst [vmem:[%s575] sm:$0xff] %v574
        %vm578 = vcmask 1041408
        %v579 = vsel %vm578, %v565, %v495
        %v580 = vrot.slane %v579, 2
        %s581 = scalar_lea.vmem %s239, 224
        %v582 = vld [vmem:[%s581] sm:$0xff]
        %vm583 = vcmask 1041408
        %v584 = vsel %vm583, %v582, %v512
        %v585 = vrot.slane %v584, 2
        %v586 = vlaneseq
        %v587 = vand.u32 %v586, 127
        %vm588 = vcmp.lt.s32.totalorder %v587, 2
        %v589 = vsel %vm588, %v585, %v580
        %590 = vrot.lane.b32.xlu0 %v589, 126
        %v591 = vpop.permute.xlu0 %590
        %s592 = scalar_lea.vmem [#allocation11], 144
        %594 = vst [vmem:[%s592] sm:$0xff] %v591
        %vm595 = vcmask 1041408
        %v596 = vsel %vm595, %v582, %v512
        %v597 = vrot.slane %v596, 2
        %s598 = scalar_lea.vmem %s239, 232
        %v599 = vld [vmem:[%s598] sm:$0xff]
        %vm600 = vcmask 1041408
        %v601 = vsel %vm600, %v599, %v529
        %v602 = vrot.slane %v601, 2
        %v603 = vlaneseq
        %v604 = vand.u32 %v603, 127
        %vm605 = vcmp.lt.s32.totalorder %v604, 2
        %v606 = vsel %vm605, %v602, %v597
        %607 = vrot.lane.b32.xlu0 %v606, 126
        %v608 = vpop.permute.xlu0 %607
        %s609 = scalar_lea.vmem [#allocation11], 152
        %611 = vst [vmem:[%s609] sm:$0xff] %v608
        %s612 = scalar_lea.vmem %s239, 240
        %v613 = vld [vmem:[%s612] sm:$0xff]
        %vm614 = vcmask 1041408
        %v615 = vsel %vm614, %v613, %v543
        %v616 = vrot.slane %v615, 2
        %s617 = scalar_lea.vmem %s239, 248
        %v618 = vld [vmem:[%s617] sm:$0xff]
        %vm619 = vcmask 1041408
        %v620 = vsel %vm619, %v618, %v548
        %v621 = vrot.slane %v620, 2
        %v622 = vlaneseq
        %v623 = vand.u32 %v622, 127
        %vm624 = vcmp.lt.s32.totalorder %v623, 2
        %v625 = vsel %vm624, %v621, %v616
        %626 = vrot.lane.b32.xlu0 %v625, 126
        %v627 = vpop.permute.xlu0 %626
        %s628 = scalar_lea.vmem [#allocation11], 160
        %630 = vst [vmem:[%s628] sm:$0xff] %v627
        %vm631 = vcmask 1041408
        %v632 = vsel %vm631, %v618, %v548
        %v633 = vrot.slane %v632, 2
        %s634 = scalar_lea.vmem %s239, 256
        %v635 = vld [vmem:[%s634] sm:$0xff]
        %vm636 = vcmask 1041408
        %v637 = vsel %vm636, %v635, %v565
        %v638 = vrot.slane %v637, 2
        %v639 = vlaneseq
        %v640 = vand.u32 %v639, 127
        %vm641 = vcmp.lt.s32.totalorder %v640, 2
        %v642 = vsel %vm641, %v638, %v633
        %643 = vrot.lane.b32.xlu0 %v642, 126
        %v644 = vpop.permute.xlu0 %643
        %s645 = scalar_lea.vmem [#allocation11], 168
        %647 = vst [vmem:[%s645] sm:$0xff] %v644
        %vm648 = vcmask 1041408
        %v649 = vsel %vm648, %v635, %v565
        %v650 = vrot.slane %v649, 2
        %s651 = scalar_lea.vmem %s239, 264
        %v652 = vld [vmem:[%s651] sm:$0xff]
        %vm653 = vcmask 1041408
        %v654 = vsel %vm653, %v652, %v582
        %v655 = vrot.slane %v654, 2
        %v656 = vlaneseq
        %v657 = vand.u32 %v656, 127
        %vm658 = vcmp.lt.s32.totalorder %v657, 2
        %v659 = vsel %vm658, %v655, %v650
        %660 = vrot.lane.b32.xlu0 %v659, 126
        %v661 = vpop.permute.xlu0 %660
        %s662 = scalar_lea.vmem [#allocation11], 176
        %664 = vst [vmem:[%s662] sm:$0xff] %v661
        %vm665 = vcmask 1041408
        %v666 = vsel %vm665, %v652, %v582
        %v667 = vrot.slane %v666, 2
        %s668 = scalar_lea.vmem %s239, 272
        %v669 = vld [vmem:[%s668] sm:$0xff]
        %vm670 = vcmask 1041408
        %v671 = vsel %vm670, %v669, %v599
        %v672 = vrot.slane %v671, 2
        %v673 = vlaneseq
        %v674 = vand.u32 %v673, 127
        %vm675 = vcmp.lt.s32.totalorder %v674, 2
        %v676 = vsel %vm675, %v672, %v667
        %677 = vrot.lane.b32.xlu0 %v676, 126
        %v678 = vpop.permute.xlu0 %677
        %s679 = scalar_lea.vmem [#allocation11], 184
        %681 = vst [vmem:[%s679] sm:$0xff] %v678
        %s682 = scalar_lea.vmem %s239, 280
        %v683 = vld [vmem:[%s682] sm:$0xff]
        %vm684 = vcmask 1041408
        %v685 = vsel %vm684, %v683, %v613
        %v686 = vrot.slane %v685, 2
        %s687 = scalar_lea.vmem %s239, 288
        %v688 = vld [vmem:[%s687] sm:$0xff]
        %vm689 = vcmask 1041408
        %v690 = vsel %vm689, %v688, %v618
        %v691 = vrot.slane %v690, 2
        %v692 = vlaneseq
        %v693 = vand.u32 %v692, 127
        %vm694 = vcmp.lt.s32.totalorder %v693, 2
        %v695 = vsel %vm694, %v691, %v686
        %696 = vrot.lane.b32.xlu0 %v695, 126
        %v697 = vpop.permute.xlu0 %696
        %s698 = scalar_lea.vmem [#allocation11], 192
        %700 = vst [vmem:[%s698] sm:$0xff] %v697
        %vm701 = vcmask 1041408
        %v702 = vsel %vm701, %v688, %v618
        %v703 = vrot.slane %v702, 2
        %s704 = scalar_lea.vmem %s239, 296
        %v705 = vld [vmem:[%s704] sm:$0xff]
        %vm706 = vcmask 1041408
        %v707 = vsel %vm706, %v705, %v635
        %v708 = vrot.slane %v707, 2
        %v709 = vlaneseq
        %v710 = vand.u32 %v709, 127
        %vm711 = vcmp.lt.s32.totalorder %v710, 2
        %v712 = vsel %vm711, %v708, %v703
        %713 = vrot.lane.b32.xlu0 %v712, 126
        %v714 = vpop.permute.xlu0 %713
        %s715 = scalar_lea.vmem [#allocation11], 200
        %717 = vst [vmem:[%s715] sm:$0xff] %v714
        %vm718 = vcmask 1041408
        %v719 = vsel %vm718, %v705, %v635
        %v720 = vrot.slane %v719, 2
        %s721 = scalar_lea.vmem %s239, 304
        %v722 = vld [vmem:[%s721] sm:$0xff]
        %vm723 = vcmask 1041408
        %v724 = vsel %vm723, %v722, %v652
        %v725 = vrot.slane %v724, 2
        %v726 = vlaneseq
        %v727 = vand.u32 %v726, 127
        %vm728 = vcmp.lt.s32.totalorder %v727, 2
        %v729 = vsel %vm728, %v725, %v720
        %730 = vrot.lane.b32.xlu0 %v729, 126
        %v731 = vpop.permute.xlu0 %730
        %s732 = scalar_lea.vmem [#allocation11], 208
        %734 = vst [vmem:[%s732] sm:$0xff] %v731
        %vm735 = vcmask 1041408
        %v736 = vsel %vm735, %v722, %v652
        %v737 = vrot.slane %v736, 2
        %s738 = scalar_lea.vmem %s239, 312
        %v739 = vld [vmem:[%s738] sm:$0xff]
        %vm740 = vcmask 1041408
        %v741 = vsel %vm740, %v739, %v669
        %v742 = vrot.slane %v741, 2
        %v743 = vlaneseq
        %v744 = vand.u32 %v743, 127
        %vm745 = vcmp.lt.s32.totalorder %v744, 2
        %v746 = vsel %vm745, %v742, %v737
        %747 = vrot.lane.b32.xlu0 %v746, 126
        %v748 = vpop.permute.xlu0 %747
        %s749 = scalar_lea.vmem [#allocation11], 216
        %751 = vst [vmem:[%s749] sm:$0xff] %v748
        %s752 = scalar_lea.vmem %s239, 320
        %v753 = vld [vmem:[%s752] sm:$0xff]
        %vm754 = vcmask 1041408
        %v755 = vsel %vm754, %v753, %v683
        %v756 = vrot.slane %v755, 2
        %s757 = scalar_lea.vmem %s239, 328
        %v758 = vld [vmem:[%s757] sm:$0xff]
        %vm759 = vcmask 1041408
        %v760 = vsel %vm759, %v758, %v688
        %v761 = vrot.slane %v760, 2
        %v762 = vlaneseq
        %v763 = vand.u32 %v762, 127
        %vm764 = vcmp.lt.s32.totalorder %v763, 2
        %v765 = vsel %vm764, %v761, %v756
        %766 = vrot.lane.b32.xlu0 %v765, 126
        %v767 = vpop.permute.xlu0 %766
        %s768 = scalar_lea.vmem [#allocation11], 224
        %770 = vst [vmem:[%s768] sm:$0xff] %v767
        %vm771 = vcmask 1041408
        %v772 = vsel %vm771, %v758, %v688
        %v773 = vrot.slane %v772, 2
        %s774 = scalar_lea.vmem %s239, 336
        %v775 = vld [vmem:[%s774] sm:$0xff]
        %vm776 = vcmask 1041408
        %v777 = vsel %vm776, %v775, %v705
        %v778 = vrot.slane %v777, 2
        %v779 = vlaneseq
        %v780 = vand.u32 %v779, 127
        %vm781 = vcmp.lt.s32.totalorder %v780, 2
        %v782 = vsel %vm781, %v778, %v773
        %783 = vrot.lane.b32.xlu0 %v782, 126
        %v784 = vpop.permute.xlu0 %783
        %s785 = scalar_lea.vmem [#allocation11], 232
        %787 = vst [vmem:[%s785] sm:$0xff] %v784
        %vm788 = vcmask 1041408
        %v789 = vsel %vm788, %v775, %v705
        %v790 = vrot.slane %v789, 2
        %s791 = scalar_lea.vmem %s239, 344
        %v792 = vld [vmem:[%s791] sm:$0xff]
        %vm793 = vcmask 1041408
        %v794 = vsel %vm793, %v792, %v722
        %v795 = vrot.slane %v794, 2
        %v796 = vlaneseq
        %v797 = vand.u32 %v796, 127
        %vm798 = vcmp.lt.s32.totalorder %v797, 2
        %v799 = vsel %vm798, %v795, %v790
        %800 = vrot.lane.b32.xlu0 %v799, 126
        %v801 = vpop.permute.xlu0 %800
        %s802 = scalar_lea.vmem [#allocation11], 240
        %804 = vst [vmem:[%s802] sm:$0xff] %v801
        %vm805 = vcmask 1041408
        %v806 = vsel %vm805, %v792, %v722
        %v807 = vrot.slane %v806, 2
        %s808 = scalar_lea.vmem %s239, 352
        %v809 = vld [vmem:[%s808] sm:$0xff]
        %vm810 = vcmask 1041408
        %v811 = vsel %vm810, %v809, %v739
        %v812 = vrot.slane %v811, 2
        %v813 = vlaneseq
        %v814 = vand.u32 %v813, 127
        %vm815 = vcmp.lt.s32.totalorder %v814, 2
        %v816 = vsel %vm815, %v812, %v807
        %817 = vrot.lane.b32.xlu0 %v816, 126
        %v818 = vpop.permute.xlu0 %817
        %s819 = scalar_lea.vmem [#allocation11], 248
        %821 = vst [vmem:[%s819] sm:$0xff] %v818
        %s822 = scalar_lea.vmem %s239, 360
        %v823 = vld [vmem:[%s822] sm:$0xff]
        %vm824 = vcmask 1041408
        %v825 = vsel %vm824, %v823, %v753
        %v826 = vrot.slane %v825, 2
        %s827 = scalar_lea.vmem %s239, 368
        %v828 = vld [vmem:[%s827] sm:$0xff]
        %vm829 = vcmask 1041408
        %v830 = vsel %vm829, %v828, %v758
        %v831 = vrot.slane %v830, 2
        %v832 = vlaneseq
        %v833 = vand.u32 %v832, 127
        %vm834 = vcmp.lt.s32.totalorder %v833, 2
        %v835 = vsel %vm834, %v831, %v826
        %836 = vrot.lane.b32.xlu0 %v835, 126
        %v837 = vpop.permute.xlu0 %836
        %s838 = scalar_lea.vmem [#allocation11], 256
        %840 = vst [vmem:[%s838] sm:$0xff] %v837
        %vm841 = vcmask 1041408
        %v842 = vsel %vm841, %v828, %v758
        %v843 = vrot.slane %v842, 2
        %s844 = scalar_lea.vmem %s239, 376
        %v845 = vld [vmem:[%s844] sm:$0xff]
        %vm846 = vcmask 1041408
        %v847 = vsel %vm846, %v845, %v775
        %v848 = vrot.slane %v847, 2
        %v849 = vlaneseq
        %v850 = vand.u32 %v849, 127
        %vm851 = vcmp.lt.s32.totalorder %v850, 2
        %v852 = vsel %vm851, %v848, %v843
        %853 = vrot.lane.b32.xlu0 %v852, 126
        %v854 = vpop.permute.xlu0 %853
        %s855 = scalar_lea.vmem [#allocation11], 264
        %857 = vst [vmem:[%s855] sm:$0xff] %v854
        %vm858 = vcmask 1041408
        %v859 = vsel %vm858, %v845, %v775
        %v860 = vrot.slane %v859, 2
        %s861 = scalar_lea.vmem %s239, 384
        %v862 = vld [vmem:[%s861] sm:$0xff]
        %vm863 = vcmask 1041408
        %v864 = vsel %vm863, %v862, %v792
        %v865 = vrot.slane %v864, 2
        %v866 = vlaneseq
        %v867 = vand.u32 %v866, 127
        %vm868 = vcmp.lt.s32.totalorder %v867, 2
        %v869 = vsel %vm868, %v865, %v860
        %870 = vrot.lane.b32.xlu0 %v869, 126
        %v871 = vpop.permute.xlu0 %870
        %s872 = scalar_lea.vmem [#allocation11], 272
        %874 = vst [vmem:[%s872] sm:$0xff] %v871
        %vm875 = vcmask 1041408
        %v876 = vsel %vm875, %v862, %v792
        %v877 = vrot.slane %v876, 2
        %s878 = scalar_lea.vmem %s239, 392
        %v879 = vld [vmem:[%s878] sm:$0xff]
        %vm880 = vcmask 1041408
        %v881 = vsel %vm880, %v879, %v809
        %v882 = vrot.slane %v881, 2
        %v883 = vlaneseq
        %v884 = vand.u32 %v883, 127
        %vm885 = vcmp.lt.s32.totalorder %v884, 2
        %v886 = vsel %vm885, %v882, %v877
        %887 = vrot.lane.b32.xlu0 %v886, 126
        %v888 = vpop.permute.xlu0 %887
        %s889 = scalar_lea.vmem [#allocation11], 280
        %891 = vst [vmem:[%s889] sm:$0xff] %v888
        %s892 = scalar_lea.vmem %s239, 400
        %v893 = vld [vmem:[%s892] sm:$0xff]
        %vm894 = vcmask 1041408
        %v895 = vsel %vm894, %v893, %v823
        %v896 = vrot.slane %v895, 2
        %s897 = scalar_lea.vmem %s239, 408
        %v898 = vld [vmem:[%s897] sm:$0xff]
        %vm899 = vcmask 1041408
        %v900 = vsel %vm899, %v898, %v828
        %v901 = vrot.slane %v900, 2
        %v902 = vlaneseq
        %v903 = vand.u32 %v902, 127
        %vm904 = vcmp.lt.s32.totalorder %v903, 2
        %v905 = vsel %vm904, %v901, %v896
        %906 = vrot.lane.b32.xlu0 %v905, 126
        %v907 = vpop.permute.xlu0 %906
        %s908 = scalar_lea.vmem [#allocation11], 288
        %910 = vst [vmem:[%s908] sm:$0xff] %v907
        %vm911 = vcmask 1041408
        %v912 = vsel %vm911, %v898, %v828
        %v913 = vrot.slane %v912, 2
        %s914 = scalar_lea.vmem %s239, 416
        %v915 = vld [vmem:[%s914] sm:$0xff]
        %vm916 = vcmask 1041408
        %v917 = vsel %vm916, %v915, %v845
        %v918 = vrot.slane %v917, 2
        %v919 = vlaneseq
        %v920 = vand.u32 %v919, 127
        %vm921 = vcmp.lt.s32.totalorder %v920, 2
        %v922 = vsel %vm921, %v918, %v913
        %923 = vrot.lane.b32.xlu0 %v922, 126
        %v924 = vpop.permute.xlu0 %923
        %s925 = scalar_lea.vmem [#allocation11], 296
        %927 = vst [vmem:[%s925] sm:$0xff] %v924
        %vm928 = vcmask 1041408
        %v929 = vsel %vm928, %v915, %v845
        %v930 = vrot.slane %v929, 2
        %s931 = scalar_lea.vmem %s239, 424
        %v932 = vld [vmem:[%s931] sm:$0xff]
        %vm933 = vcmask 1041408
        %v934 = vsel %vm933, %v932, %v862
        %v935 = vrot.slane %v934, 2
        %v936 = vlaneseq
        %v937 = vand.u32 %v936, 127
        %vm938 = vcmp.lt.s32.totalorder %v937, 2
        %v939 = vsel %vm938, %v935, %v930
        %940 = vrot.lane.b32.xlu0 %v939, 126
        %v941 = vpop.permute.xlu0 %940
        %s942 = scalar_lea.vmem [#allocation11], 304
        %944 = vst [vmem:[%s942] sm:$0xff] %v941
        %vm945 = vcmask 1041408
        %v946 = vsel %vm945, %v932, %v862
        %v947 = vrot.slane %v946, 2
        %s948 = scalar_lea.vmem %s239, 432
        %v949 = vld [vmem:[%s948] sm:$0xff]
        %vm950 = vcmask 1041408
        %v951 = vsel %vm950, %v949, %v879
        %v952 = vrot.slane %v951, 2
        %v953 = vlaneseq
        %v954 = vand.u32 %v953, 127
        %vm955 = vcmp.lt.s32.totalorder %v954, 2
        %v956 = vsel %vm955, %v952, %v947
        %957 = vrot.lane.b32.xlu0 %v956, 126
        %v958 = vpop.permute.xlu0 %957
        %s959 = scalar_lea.vmem [#allocation11], 312
        %961 = vst [vmem:[%s959] sm:$0xff] %v958
        %s962 = scalar_lea.vmem %s239, 440
        %v963 = vld [vmem:[%s962] sm:$0xff]
        %vm964 = vcmask 1041408
        %v965 = vsel %vm964, %v963, %v893
        %v966 = vrot.slane %v965, 2
        %s967 = scalar_lea.vmem %s239, 448
        %v968 = vld [vmem:[%s967] sm:$0xff]
        %vm969 = vcmask 1041408
        %v970 = vsel %vm969, %v968, %v898
        %v971 = vrot.slane %v970, 2
        %v972 = vlaneseq
        %v973 = vand.u32 %v972, 127
        %vm974 = vcmp.lt.s32.totalorder %v973, 2
        %v975 = vsel %vm974, %v971, %v966
        %976 = vrot.lane.b32.xlu0 %v975, 126
        %v977 = vpop.permute.xlu0 %976
        %s978 = scalar_lea.vmem [#allocation11], 320
        %980 = vst [vmem:[%s978] sm:$0xff] %v977
        %vm981 = vcmask 1041408
        %v982 = vsel %vm981, %v968, %v898
        %v983 = vrot.slane %v982, 2
        %s984 = scalar_lea.vmem %s239, 456
        %v985 = vld [vmem:[%s984] sm:$0xff]
        %vm986 = vcmask 1041408
        %v987 = vsel %vm986, %v985, %v915
        %v988 = vrot.slane %v987, 2
        %v989 = vlaneseq
        %v990 = vand.u32 %v989, 127
        %vm991 = vcmp.lt.s32.totalorder %v990, 2
        %v992 = vsel %vm991, %v988, %v983
        %993 = vrot.lane.b32.xlu0 %v992, 126
        %v994 = vpop.permute.xlu0 %993
        %s995 = scalar_lea.vmem [#allocation11], 328
        %997 = vst [vmem:[%s995] sm:$0xff] %v994
        %vm998 = vcmask 1041408
        %v999 = vsel %vm998, %v985, %v915
        %v1000 = vrot.slane %v999, 2
        %s1001 = scalar_lea.vmem %s239, 464
        %v1002 = vld [vmem:[%s1001] sm:$0xff]
        %vm1003 = vcmask 1041408
        %v1004 = vsel %vm1003, %v1002, %v932
        %v1005 = vrot.slane %v1004, 2
        %v1006 = vlaneseq
        %v1007 = vand.u32 %v1006, 127
        %vm1008 = vcmp.lt.s32.totalorder %v1007, 2
        %v1009 = vsel %vm1008, %v1005, %v1000
        %1010 = vrot.lane.b32.xlu0 %v1009, 126
        %v1011 = vpop.permute.xlu0 %1010
        %s1012 = scalar_lea.vmem [#allocation11], 336
        %1014 = vst [vmem:[%s1012] sm:$0xff] %v1011
        %vm1015 = vcmask 1041408
        %v1016 = vsel %vm1015, %v1002, %v932
        %v1017 = vrot.slane %v1016, 2
        %s1018 = scalar_lea.vmem %s239, 472
        %v1019 = vld [vmem:[%s1018] sm:$0xff]
        %vm1020 = vcmask 1041408
        %v1021 = vsel %vm1020, %v1019, %v949
        %v1022 = vrot.slane %v1021, 2
        %v1023 = vlaneseq
        %v1024 = vand.u32 %v1023, 127
        %vm1025 = vcmp.lt.s32.totalorder %v1024, 2
        %v1026 = vsel %vm1025, %v1022, %v1017
        %1027 = vrot.lane.b32.xlu0 %v1026, 126
        %v1028 = vpop.permute.xlu0 %1027
        %s1029 = scalar_lea.vmem [#allocation11], 344
        %1031 = vst [vmem:[%s1029] sm:$0xff] %v1028
        %s1032 = scalar_lea.vmem %s239, 480
        %v1033 = vld [vmem:[%s1032] sm:$0xff]
        %vm1034 = vcmask 1041408
        %v1035 = vsel %vm1034, %v1033, %v963
        %v1036 = vrot.slane %v1035, 2
        %s1037 = scalar_lea.vmem %s239, 488
        %v1038 = vld [vmem:[%s1037] sm:$0xff]
        %vm1039 = vcmask 1041408
        %v1040 = vsel %vm1039, %v1038, %v968
        %v1041 = vrot.slane %v1040, 2
        %v1042 = vlaneseq
        %v1043 = vand.u32 %v1042, 127
        %vm1044 = vcmp.lt.s32.totalorder %v1043, 2
        %v1045 = vsel %vm1044, %v1041, %v1036
        %1046 = vrot.lane.b32.xlu0 %v1045, 126
        %v1047 = vpop.permute.xlu0 %1046
        %s1048 = scalar_lea.vmem [#allocation11], 352
        %1050 = vst [vmem:[%s1048] sm:$0xff] %v1047
        %vm1051 = vcmask 1041408
        %v1052 = vsel %vm1051, %v1038, %v968
        %v1053 = vrot.slane %v1052, 2
        %s1054 = scalar_lea.vmem %s239, 496
        %v1055 = vld [vmem:[%s1054] sm:$0xff]
        %vm1056 = vcmask 1041408
        %v1057 = vsel %vm1056, %v1055, %v985
        %v1058 = vrot.slane %v1057, 2
        %v1059 = vlaneseq
        %v1060 = vand.u32 %v1059, 127
        %vm1061 = vcmp.lt.s32.totalorder %v1060, 2
        %v1062 = vsel %vm1061, %v1058, %v1053
        %1063 = vrot.lane.b32.xlu0 %v1062, 126
        %v1064 = vpop.permute.xlu0 %1063
        %s1065 = scalar_lea.vmem [#allocation11], 360
        %1067 = vst [vmem:[%s1065] sm:$0xff] %v1064
        %vm1068 = vcmask 1041408
        %v1069 = vsel %vm1068, %v1055, %v985
        %v1070 = vrot.slane %v1069, 2
        %s1071 = scalar_lea.vmem %s239, 504
        %v1072 = vld [vmem:[%s1071] sm:$0xff]
        %vm1073 = vcmask 1041408
        %v1074 = vsel %vm1073, %v1072, %v1002
        %v1075 = vrot.slane %v1074, 2
        %v1076 = vlaneseq
        %v1077 = vand.u32 %v1076, 127
        %vm1078 = vcmp.lt.s32.totalorder %v1077, 2
        %v1079 = vsel %vm1078, %v1075, %v1070
        %1080 = vrot.lane.b32.xlu0 %v1079, 126
        %v1081 = vpop.permute.xlu0 %1080
        %s1082 = scalar_lea.vmem [#allocation11], 368
        %1084 = vst [vmem:[%s1082] sm:$0xff] %v1081
        %vm1085 = vcmask 1041408
        %v1086 = vsel %vm1085, %v1072, %v1002
        %v1087 = vrot.slane %v1086, 2
        %s1088 = scalar_lea.vmem %s239, 512
        %v1089 = vld [vmem:[%s1088] sm:$0xff]
        %vm1090 = vcmask 1041408
        %v1091 = vsel %vm1090, %v1089, %v1019
        %v1092 = vrot.slane %v1091, 2
        %v1093 = vlaneseq
        %v1094 = vand.u32 %v1093, 127
        %vm1095 = vcmp.lt.s32.totalorder %v1094, 2
        %v1096 = vsel %vm1095, %v1092, %v1087
        %1097 = vrot.lane.b32.xlu0 %v1096, 126
        %v1098 = vpop.permute.xlu0 %1097
        %s1099 = scalar_lea.vmem [#allocation11], 376
        %1101 = vst [vmem:[%s1099] sm:$0xff] %v1098
        %s1102 = scalar_lea.vmem %s239, 520
        %v1103 = vld [vmem:[%s1102] sm:$0xff]
        %vm1104 = vcmask 1041408
        %v1105 = vsel %vm1104, %v1103, %v1033
        %v1106 = vrot.slane %v1105, 2
        %s1107 = scalar_lea.vmem %s239, 528
        %v1108 = vld [vmem:[%s1107] sm:$0xff]
        %vm1109 = vcmask 1041408
        %v1110 = vsel %vm1109, %v1108, %v1038
        %v1111 = vrot.slane %v1110, 2
        %v1112 = vlaneseq
        %v1113 = vand.u32 %v1112, 127
        %vm1114 = vcmp.lt.s32.totalorder %v1113, 2
        %v1115 = vsel %vm1114, %v1111, %v1106
        %1116 = vrot.lane.b32.xlu0 %v1115, 126
        %v1117 = vpop.permute.xlu0 %1116
        %s1118 = scalar_lea.vmem [#allocation11], 384
        %1120 = vst [vmem:[%s1118] sm:$0xff] %v1117
        %vm1121 = vcmask 1041408
        %v1122 = vsel %vm1121, %v1108, %v1038
        %v1123 = vrot.slane %v1122, 2
        %s1124 = scalar_lea.vmem %s239, 536
        %v1125 = vld [vmem:[%s1124] sm:$0xff]
        %vm1126 = vcmask 1041408
        %v1127 = vsel %vm1126, %v1125, %v1055
        %v1128 = vrot.slane %v1127, 2
        %v1129 = vlaneseq
        %v1130 = vand.u32 %v1129, 127
        %vm1131 = vcmp.lt.s32.totalorder %v1130, 2
        %v1132 = vsel %vm1131, %v1128, %v1123
        %1133 = vrot.lane.b32.xlu0 %v1132, 126
        %v1134 = vpop.permute.xlu0 %1133
        %s1135 = scalar_lea.vmem [#allocation11], 392
        %1137 = vst [vmem:[%s1135] sm:$0xff] %v1134
        %vm1138 = vcmask 1041408
        %v1139 = vsel %vm1138, %v1125, %v1055
        %v1140 = vrot.slane %v1139, 2
        %s1141 = scalar_lea.vmem %s239, 544
        %v1142 = vld [vmem:[%s1141] sm:$0xff]
        %vm1143 = vcmask 1041408
        %v1144 = vsel %vm1143, %v1142, %v1072
        %v1145 = vrot.slane %v1144, 2
        %v1146 = vlaneseq
        %v1147 = vand.u32 %v1146, 127
        %vm1148 = vcmp.lt.s32.totalorder %v1147, 2
        %v1149 = vsel %vm1148, %v1145, %v1140
        %1150 = vrot.lane.b32.xlu0 %v1149, 126
        %v1151 = vpop.permute.xlu0 %1150
        %s1152 = scalar_lea.vmem [#allocation11], 400
        %1154 = vst [vmem:[%s1152] sm:$0xff] %v1151
        %vm1155 = vcmask 1041408
        %v1156 = vsel %vm1155, %v1142, %v1072
        %v1157 = vrot.slane %v1156, 2
        %s1158 = scalar_lea.vmem %s239, 552
        %v1159 = vld [vmem:[%s1158] sm:$0xff]
        %vm1160 = vcmask 1041408
        %v1161 = vsel %vm1160, %v1159, %v1089
        %v1162 = vrot.slane %v1161, 2
        %v1163 = vlaneseq
        %v1164 = vand.u32 %v1163, 127
        %vm1165 = vcmp.lt.s32.totalorder %v1164, 2
        %v1166 = vsel %vm1165, %v1162, %v1157
        %1167 = vrot.lane.b32.xlu0 %v1166, 126
        %v1168 = vpop.permute.xlu0 %1167
        %s1169 = scalar_lea.vmem [#allocation11], 408
        %1171 = vst [vmem:[%s1169] sm:$0xff] %v1168
        %s1172 = scalar_lea.vmem %s239, 560
        %v1173 = vld [vmem:[%s1172] sm:$0xff]
        %vm1174 = vcmask 1041408
        %v1175 = vsel %vm1174, %v1173, %v1103
        %v1176 = vrot.slane %v1175, 2
        %s1177 = scalar_lea.vmem %s239, 568
        %v1178 = vld [vmem:[%s1177] sm:$0xff]
        %vm1179 = vcmask 1041408
        %v1180 = vsel %vm1179, %v1178, %v1108
        %v1181 = vrot.slane %v1180, 2
        %v1182 = vlaneseq
        %v1183 = vand.u32 %v1182, 127
        %vm1184 = vcmp.lt.s32.totalorder %v1183, 2
        %v1185 = vsel %vm1184, %v1181, %v1176
        %1186 = vrot.lane.b32.xlu0 %v1185, 126
        %v1187 = vpop.permute.xlu0 %1186
        %s1188 = scalar_lea.vmem [#allocation11], 416
        %1190 = vst [vmem:[%s1188] sm:$0xff] %v1187
        %vm1191 = vcmask 1041408
        %v1192 = vsel %vm1191, %v1178, %v1108
        %v1193 = vrot.slane %v1192, 2
        %s1194 = scalar_lea.vmem %s239, 576
        %v1195 = vld [vmem:[%s1194] sm:$0xff]
        %vm1196 = vcmask 1041408
        %v1197 = vsel %vm1196, %v1195, %v1125
        %v1198 = vrot.slane %v1197, 2
        %v1199 = vlaneseq
        %v1200 = vand.u32 %v1199, 127
        %vm1201 = vcmp.lt.s32.totalorder %v1200, 2
        %v1202 = vsel %vm1201, %v1198, %v1193
        %1203 = vrot.lane.b32.xlu0 %v1202, 126
        %v1204 = vpop.permute.xlu0 %1203
        %s1205 = scalar_lea.vmem [#allocation11], 424
        %1207 = vst [vmem:[%s1205] sm:$0xff] %v1204
        %vm1208 = vcmask 1041408
        %v1209 = vsel %vm1208, %v1195, %v1125
        %v1210 = vrot.slane %v1209, 2
        %s1211 = scalar_lea.vmem %s239, 584
        %v1212 = vld [vmem:[%s1211] sm:$0xff]
        %vm1213 = vcmask 1041408
        %v1214 = vsel %vm1213, %v1212, %v1142
        %v1215 = vrot.slane %v1214, 2
        %v1216 = vlaneseq
        %v1217 = vand.u32 %v1216, 127
        %vm1218 = vcmp.lt.s32.totalorder %v1217, 2
        %v1219 = vsel %vm1218, %v1215, %v1210
        %1220 = vrot.lane.b32.xlu0 %v1219, 126
        %v1221 = vpop.permute.xlu0 %1220
        %s1222 = scalar_lea.vmem [#allocation11], 432
        %1224 = vst [vmem:[%s1222] sm:$0xff] %v1221
        %vm1225 = vcmask 1041408
        %v1226 = vsel %vm1225, %v1212, %v1142
        %v1227 = vrot.slane %v1226, 2
        %s1228 = scalar_lea.vmem %s239, 592
        %v1229 = vld [vmem:[%s1228] sm:$0xff]
        %vm1230 = vcmask 1041408
        %v1231 = vsel %vm1230, %v1229, %v1159
        %v1232 = vrot.slane %v1231, 2
        %v1233 = vlaneseq
        %v1234 = vand.u32 %v1233, 127
        %vm1235 = vcmp.lt.s32.totalorder %v1234, 2
        %v1236 = vsel %vm1235, %v1232, %v1227
        %1237 = vrot.lane.b32.xlu0 %v1236, 126
        %v1238 = vpop.permute.xlu0 %1237
        %s1239 = scalar_lea.vmem [#allocation11], 440
        %1241 = vst [vmem:[%s1239] sm:$0xff] %v1238
        %s1242 = scalar_lea.vmem %s239, 600
        %v1243 = vld [vmem:[%s1242] sm:$0xff]
        %vm1244 = vcmask 1041408
        %v1245 = vsel %vm1244, %v1243, %v1173
        %v1246 = vrot.slane %v1245, 2
        %s1247 = scalar_lea.vmem %s239, 608
        %v1248 = vld [vmem:[%s1247] sm:$0xff]
        %vm1249 = vcmask 1041408
        %v1250 = vsel %vm1249, %v1248, %v1178
        %v1251 = vrot.slane %v1250, 2
        %v1252 = vlaneseq
        %v1253 = vand.u32 %v1252, 127
        %vm1254 = vcmp.lt.s32.totalorder %v1253, 2
        %v1255 = vsel %vm1254, %v1251, %v1246
        %1256 = vrot.lane.b32.xlu0 %v1255, 126
        %v1257 = vpop.permute.xlu0 %1256
        %s1258 = scalar_lea.vmem [#allocation11], 448
        %1260 = vst [vmem:[%s1258] sm:$0xff] %v1257
        %vm1261 = vcmask 1041408
        %v1262 = vsel %vm1261, %v1248, %v1178
        %v1263 = vrot.slane %v1262, 2
        %s1264 = scalar_lea.vmem %s239, 616
        %v1265 = vld [vmem:[%s1264] sm:$0xff]
        %vm1266 = vcmask 1041408
        %v1267 = vsel %vm1266, %v1265, %v1195
        %v1268 = vrot.slane %v1267, 2
        %v1269 = vlaneseq
        %v1270 = vand.u32 %v1269, 127
        %vm1271 = vcmp.lt.s32.totalorder %v1270, 2
        %v1272 = vsel %vm1271, %v1268, %v1263
        %1273 = vrot.lane.b32.xlu0 %v1272, 126
        %v1274 = vpop.permute.xlu0 %1273
        %s1275 = scalar_lea.vmem [#allocation11], 456
        %1277 = vst [vmem:[%s1275] sm:$0xff] %v1274
        %vm1278 = vcmask 1041408
        %v1279 = vsel %vm1278, %v1265, %v1195
        %v1280 = vrot.slane %v1279, 2
        %s1281 = scalar_lea.vmem %s239, 624
        %v1282 = vld [vmem:[%s1281] sm:$0xff]
        %vm1283 = vcmask 1041408
        %v1284 = vsel %vm1283, %v1282, %v1212
        %v1285 = vrot.slane %v1284, 2
        %v1286 = vlaneseq
        %v1287 = vand.u32 %v1286, 127
        %vm1288 = vcmp.lt.s32.totalorder %v1287, 2
        %v1289 = vsel %vm1288, %v1285, %v1280
        %1290 = vrot.lane.b32.xlu0 %v1289, 126
        %v1291 = vpop.permute.xlu0 %1290
        %s1292 = scalar_lea.vmem [#allocation11], 464
        %1294 = vst [vmem:[%s1292] sm:$0xff] %v1291
        %vm1295 = vcmask 1041408
        %v1296 = vsel %vm1295, %v1282, %v1212
        %v1297 = vrot.slane %v1296, 2
        %s1298 = scalar_lea.vmem %s239, 632
        %v1299 = vld [vmem:[%s1298] sm:$0xff]
        %vm1300 = vcmask 1041408
        %v1301 = vsel %vm1300, %v1299, %v1229
        %v1302 = vrot.slane %v1301, 2
        %v1303 = vlaneseq
        %v1304 = vand.u32 %v1303, 127
        %vm1305 = vcmp.lt.s32.totalorder %v1304, 2
        %v1306 = vsel %vm1305, %v1302, %v1297
        %1307 = vrot.lane.b32.xlu0 %v1306, 126
        %v1308 = vpop.permute.xlu0 %1307
        %s1309 = scalar_lea.vmem [#allocation11], 472
        %1311 = vst [vmem:[%s1309] sm:$0xff] %v1308
        %s1312 = scalar_lea.vmem %s239, 640
        %v1313 = vld [vmem:[%s1312] sm:$0xff]
        %vm1314 = vcmask 1041408
        %v1315 = vsel %vm1314, %v1313, %v1243
        %v1316 = vrot.slane %v1315, 2
        %s1317 = scalar_lea.vmem %s239, 648
        %v1318 = vld [vmem:[%s1317] sm:$0xff]
        %vm1319 = vcmask 1041408
        %v1320 = vsel %vm1319, %v1318, %v1248
        %v1321 = vrot.slane %v1320, 2
        %v1322 = vlaneseq
        %v1323 = vand.u32 %v1322, 127
        %vm1324 = vcmp.lt.s32.totalorder %v1323, 2
        %v1325 = vsel %vm1324, %v1321, %v1316
        %1326 = vrot.lane.b32.xlu0 %v1325, 126
        %v1327 = vpop.permute.xlu0 %1326
        %s1328 = scalar_lea.vmem [#allocation11], 480
        %1330 = vst [vmem:[%s1328] sm:$0xff] %v1327
        %vm1331 = vcmask 1041408
        %v1332 = vsel %vm1331, %v1318, %v1248
        %v1333 = vrot.slane %v1332, 2
        %s1334 = scalar_lea.vmem %s239, 656
        %v1335 = vld [vmem:[%s1334] sm:$0xff]
        %vm1336 = vcmask 1041408
        %v1337 = vsel %vm1336, %v1335, %v1265
        %v1338 = vrot.slane %v1337, 2
        %v1339 = vlaneseq
        %v1340 = vand.u32 %v1339, 127
        %vm1341 = vcmp.lt.s32.totalorder %v1340, 2
        %v1342 = vsel %vm1341, %v1338, %v1333
        %1343 = vrot.lane.b32.xlu0 %v1342, 126
        %v1344 = vpop.permute.xlu0 %1343
        %s1345 = scalar_lea.vmem [#allocation11], 488
        %1347 = vst [vmem:[%s1345] sm:$0xff] %v1344
        %vm1348 = vcmask 1041408
        %v1349 = vsel %vm1348, %v1335, %v1265
        %v1350 = vrot.slane %v1349, 2
        %s1351 = scalar_lea.vmem %s239, 664
        %v1352 = vld [vmem:[%s1351] sm:$0xff]
        %vm1353 = vcmask 1041408
        %v1354 = vsel %vm1353, %v1352, %v1282
        %v1355 = vrot.slane %v1354, 2
        %v1356 = vlaneseq
        %v1357 = vand.u32 %v1356, 127
        %vm1358 = vcmp.lt.s32.totalorder %v1357, 2
        %v1359 = vsel %vm1358, %v1355, %v1350
        %1360 = vrot.lane.b32.xlu0 %v1359, 126
        %v1361 = vpop.permute.xlu0 %1360
        %s1362 = scalar_lea.vmem [#allocation11], 496
        %1364 = vst [vmem:[%s1362] sm:$0xff] %v1361
        %vm1365 = vcmask 1041408
        %v1366 = vsel %vm1365, %v1352, %v1282
        %v1367 = vrot.slane %v1366, 2
        %s1368 = scalar_lea.vmem %s239, 672
        %v1369 = vld [vmem:[%s1368] sm:$0xff]
        %vm1370 = vcmask 1041408
        %v1371 = vsel %vm1370, %v1369, %v1299
        %v1372 = vrot.slane %v1371, 2
        %v1373 = vlaneseq
        %v1374 = vand.u32 %v1373, 127
        %vm1375 = vcmp.lt.s32.totalorder %v1374, 2
        %v1376 = vsel %vm1375, %v1372, %v1367
        %1377 = vrot.lane.b32.xlu0 %v1376, 126
        %v1378 = vpop.permute.xlu0 %1377
        %s1379 = scalar_lea.vmem [#allocation11], 504
        %1381 = vst [vmem:[%s1379] sm:$0xff] %v1378
        %s1382 = scalar_lea.vmem %s239, 680
        %v1383 = vld [vmem:[%s1382] sm:$0xff]
        %vm1384 = vcmask 1041408
        %v1385 = vsel %vm1384, %v1383, %v1313
        %v1386 = vrot.slane %v1385, 2
        %s1387 = scalar_lea.vmem %s239, 688
        %v1388 = vld [vmem:[%s1387] sm:$0xff]
        %vm1389 = vcmask 1041408
        %v1390 = vsel %vm1389, %v1388, %v1318
        %v1391 = vrot.slane %v1390, 2
        %v1392 = vlaneseq
        %v1393 = vand.u32 %v1392, 127
        %vm1394 = vcmp.lt.s32.totalorder %v1393, 2
        %v1395 = vsel %vm1394, %v1391, %v1386
        %1396 = vrot.lane.b32.xlu0 %v1395, 126
        %v1397 = vpop.permute.xlu0 %1396
        %s1398 = scalar_lea.vmem [#allocation11], 512
        %1400 = vst [vmem:[%s1398] sm:$0xff] %v1397
        %vm1401 = vcmask 1041408
        %v1402 = vsel %vm1401, %v1388, %v1318
        %v1403 = vrot.slane %v1402, 2
        %s1404 = scalar_lea.vmem %s239, 696
        %v1405 = vld [vmem:[%s1404] sm:$0xff]
        %vm1406 = vcmask 1041408
        %v1407 = vsel %vm1406, %v1405, %v1335
        %v1408 = vrot.slane %v1407, 2
        %v1409 = vlaneseq
        %v1410 = vand.u32 %v1409, 127
        %vm1411 = vcmp.lt.s32.totalorder %v1410, 2
        %v1412 = vsel %vm1411, %v1408, %v1403
        %1413 = vrot.lane.b32.xlu0 %v1412, 126
        %v1414 = vpop.permute.xlu0 %1413
        %s1415 = scalar_lea.vmem [#allocation11], 520
        %1417 = vst [vmem:[%s1415] sm:$0xff] %v1414
        %vm1418 = vcmask 1041408
        %v1419 = vsel %vm1418, %v1405, %v1335
        %v1420 = vrot.slane %v1419, 2
        %s1421 = scalar_lea.vmem %s239, 704
        %v1422 = vld [vmem:[%s1421] sm:$0xff]
        %vm1423 = vcmask 1041408
        %v1424 = vsel %vm1423, %v1422, %v1352
        %v1425 = vrot.slane %v1424, 2
        %v1426 = vlaneseq
        %v1427 = vand.u32 %v1426, 127
        %vm1428 = vcmp.lt.s32.totalorder %v1427, 2
        %v1429 = vsel %vm1428, %v1425, %v1420
        %1430 = vrot.lane.b32.xlu0 %v1429, 126
        %v1431 = vpop.permute.xlu0 %1430
        %s1432 = scalar_lea.vmem [#allocation11], 528
        %1434 = vst [vmem:[%s1432] sm:$0xff] %v1431
        %vm1435 = vcmask 1041408
        %v1436 = vsel %vm1435, %v1422, %v1352
        %v1437 = vrot.slane %v1436, 2
        %s1438 = scalar_lea.vmem %s239, 712
        %v1439 = vld [vmem:[%s1438] sm:$0xff]
        %vm1440 = vcmask 1041408
        %v1441 = vsel %vm1440, %v1439, %v1369
        %v1442 = vrot.slane %v1441, 2
        %v1443 = vlaneseq
        %v1444 = vand.u32 %v1443, 127
        %vm1445 = vcmp.lt.s32.totalorder %v1444, 2
        %v1446 = vsel %vm1445, %v1442, %v1437
        %1447 = vrot.lane.b32.xlu0 %v1446, 126
        %v1448 = vpop.permute.xlu0 %1447
        %s1449 = scalar_lea.vmem [#allocation11], 536
        %1451 = vst [vmem:[%s1449] sm:$0xff] %v1448
        %s1452 = scalar_lea.vmem %s239, 720
        %v1453 = vld [vmem:[%s1452] sm:$0xff]
        %vm1454 = vcmask 1041408
        %v1455 = vsel %vm1454, %v1453, %v1383
        %v1456 = vrot.slane %v1455, 2
        %s1457 = scalar_lea.vmem %s239, 728
        %v1458 = vld [vmem:[%s1457] sm:$0xff]
        %vm1459 = vcmask 1041408
        %v1460 = vsel %vm1459, %v1458, %v1388
        %v1461 = vrot.slane %v1460, 2
        %v1462 = vlaneseq
        %v1463 = vand.u32 %v1462, 127
        %vm1464 = vcmp.lt.s32.totalorder %v1463, 2
        %v1465 = vsel %vm1464, %v1461, %v1456
        %1466 = vrot.lane.b32.xlu0 %v1465, 126
        %v1467 = vpop.permute.xlu0 %1466
        %s1468 = scalar_lea.vmem [#allocation11], 544
        %1470 = vst [vmem:[%s1468] sm:$0xff] %v1467
        %vm1471 = vcmask 1041408
        %v1472 = vsel %vm1471, %v1458, %v1388
        %v1473 = vrot.slane %v1472, 2
        %s1474 = scalar_lea.vmem %s239, 736
        %v1475 = vld [vmem:[%s1474] sm:$0xff]
        %vm1476 = vcmask 1041408
        %v1477 = vsel %vm1476, %v1475, %v1405
        %v1478 = vrot.slane %v1477, 2
        %v1479 = vlaneseq
        %v1480 = vand.u32 %v1479, 127
        %vm1481 = vcmp.lt.s32.totalorder %v1480, 2
        %v1482 = vsel %vm1481, %v1478, %v1473
        %1483 = vrot.lane.b32.xlu0 %v1482, 126
        %v1484 = vpop.permute.xlu0 %1483
        %s1485 = scalar_lea.vmem [#allocation11], 552
        %1487 = vst [vmem:[%s1485] sm:$0xff] %v1484
        %vm1488 = vcmask 1041408
        %v1489 = vsel %vm1488, %v1475, %v1405
        %v1490 = vrot.slane %v1489, 2
        %s1491 = scalar_lea.vmem %s239, 744
        %v1492 = vld [vmem:[%s1491] sm:$0xff]
        %vm1493 = vcmask 1041408
        %v1494 = vsel %vm1493, %v1492, %v1422
        %v1495 = vrot.slane %v1494, 2
        %v1496 = vlaneseq
        %v1497 = vand.u32 %v1496, 127
        %vm1498 = vcmp.lt.s32.totalorder %v1497, 2
        %v1499 = vsel %vm1498, %v1495, %v1490
        %1500 = vrot.lane.b32.xlu0 %v1499, 126
        %v1501 = vpop.permute.xlu0 %1500
        %s1502 = scalar_lea.vmem [#allocation11], 560
        %1504 = vst [vmem:[%s1502] sm:$0xff] %v1501
        %vm1505 = vcmask 1041408
        %v1506 = vsel %vm1505, %v1492, %v1422
        %v1507 = vrot.slane %v1506, 2
        %s1508 = scalar_lea.vmem %s239, 752
        %v1509 = vld [vmem:[%s1508] sm:$0xff]
        %vm1510 = vcmask 1041408
        %v1511 = vsel %vm1510, %v1509, %v1439
        %v1512 = vrot.slane %v1511, 2
        %v1513 = vlaneseq
        %v1514 = vand.u32 %v1513, 127
        %vm1515 = vcmp.lt.s32.totalorder %v1514, 2
        %v1516 = vsel %vm1515, %v1512, %v1507
        %1517 = vrot.lane.b32.xlu0 %v1516, 126
        %v1518 = vpop.permute.xlu0 %1517
        %s1519 = scalar_lea.vmem [#allocation11], 568
        %1521 = vst [vmem:[%s1519] sm:$0xff] %v1518
        %s1522 = scalar_lea.vmem %s239, 760
        %v1523 = vld [vmem:[%s1522] sm:$0xff]
        %vm1524 = vcmask 1041408
        %v1525 = vsel %vm1524, %v1523, %v1453
        %v1526 = vrot.slane %v1525, 2
        %s1527 = scalar_lea.vmem %s239, 768
        %v1528 = vld [vmem:[%s1527] sm:$0xff]
        %vm1529 = vcmask 1041408
        %v1530 = vsel %vm1529, %v1528, %v1458
        %v1531 = vrot.slane %v1530, 2
        %v1532 = vlaneseq
        %v1533 = vand.u32 %v1532, 127
        %vm1534 = vcmp.lt.s32.totalorder %v1533, 2
        %v1535 = vsel %vm1534, %v1531, %v1526
        %1536 = vrot.lane.b32.xlu0 %v1535, 126
        %v1537 = vpop.permute.xlu0 %1536
        %s1538 = scalar_lea.vmem [#allocation11], 576
        %1540 = vst [vmem:[%s1538] sm:$0xff] %v1537
        %vm1541 = vcmask 1041408
        %v1542 = vsel %vm1541, %v1528, %v1458
        %v1543 = vrot.slane %v1542, 2
        %s1544 = scalar_lea.vmem %s239, 776
        %v1545 = vld [vmem:[%s1544] sm:$0xff]
        %vm1546 = vcmask 1041408
        %v1547 = vsel %vm1546, %v1545, %v1475
        %v1548 = vrot.slane %v1547, 2
        %v1549 = vlaneseq
        %v1550 = vand.u32 %v1549, 127
        %vm1551 = vcmp.lt.s32.totalorder %v1550, 2
        %v1552 = vsel %vm1551, %v1548, %v1543
        %1553 = vrot.lane.b32.xlu0 %v1552, 126
        %v1554 = vpop.permute.xlu0 %1553
        %s1555 = scalar_lea.vmem [#allocation11], 584
        %1557 = vst [vmem:[%s1555] sm:$0xff] %v1554
        %vm1558 = vcmask 1041408
        %v1559 = vsel %vm1558, %v1545, %v1475
        %v1560 = vrot.slane %v1559, 2
        %s1561 = scalar_lea.vmem %s239, 784
        %v1562 = vld [vmem:[%s1561] sm:$0xff]
        %vm1563 = vcmask 1041408
        %v1564 = vsel %vm1563, %v1562, %v1492
        %v1565 = vrot.slane %v1564, 2
        %v1566 = vlaneseq
        %v1567 = vand.u32 %v1566, 127
        %vm1568 = vcmp.lt.s32.totalorder %v1567, 2
        %v1569 = vsel %vm1568, %v1565, %v1560
        %1570 = vrot.lane.b32.xlu0 %v1569, 126
        %v1571 = vpop.permute.xlu0 %1570
        %s1572 = scalar_lea.vmem [#allocation11], 592
        %1574 = vst [vmem:[%s1572] sm:$0xff] %v1571
        %vm1575 = vcmask 1041408
        %v1576 = vsel %vm1575, %v1562, %v1492
        %v1577 = vrot.slane %v1576, 2
        %s1578 = scalar_lea.vmem %s239, 792
        %v1579 = vld [vmem:[%s1578] sm:$0xff]
        %vm1580 = vcmask 1041408
        %v1581 = vsel %vm1580, %v1579, %v1509
        %v1582 = vrot.slane %v1581, 2
        %v1583 = vlaneseq
        %v1584 = vand.u32 %v1583, 127
        %vm1585 = vcmp.lt.s32.totalorder %v1584, 2
        %v1586 = vsel %vm1585, %v1582, %v1577
        %1587 = vrot.lane.b32.xlu0 %v1586, 126
        %v1588 = vpop.permute.xlu0 %1587
        %s1589 = scalar_lea.vmem [#allocation11], 600
        %1591 = vst [vmem:[%s1589] sm:$0xff] %v1588
        %s1592 = scalar_lea.vmem %s239, 800
        %v1593 = vld [vmem:[%s1592] sm:$0xff]
        %vm1594 = vcmask 1041408
        %v1595 = vsel %vm1594, %v1593, %v1523
        %v1596 = vrot.slane %v1595, 2
        %s1597 = scalar_lea.vmem %s239, 808
        %v1598 = vld [vmem:[%s1597] sm:$0xff]
        %vm1599 = vcmask 1041408
        %v1600 = vsel %vm1599, %v1598, %v1528
        %v1601 = vrot.slane %v1600, 2
        %v1602 = vlaneseq
        %v1603 = vand.u32 %v1602, 127
        %vm1604 = vcmp.lt.s32.totalorder %v1603, 2
        %v1605 = vsel %vm1604, %v1601, %v1596
        %1606 = vrot.lane.b32.xlu0 %v1605, 126
        %v1607 = vpop.permute.xlu0 %1606
        %s1608 = scalar_lea.vmem [#allocation11], 608
        %1610 = vst [vmem:[%s1608] sm:$0xff] %v1607
        %vm1611 = vcmask 1041408
        %v1612 = vsel %vm1611, %v1598, %v1528
        %v1613 = vrot.slane %v1612, 2
        %s1614 = scalar_lea.vmem %s239, 816
        %v1615 = vld [vmem:[%s1614] sm:$0xff]
        %vm1616 = vcmask 1041408
        %v1617 = vsel %vm1616, %v1615, %v1545
        %v1618 = vrot.slane %v1617, 2
        %v1619 = vlaneseq
        %v1620 = vand.u32 %v1619, 127
        %vm1621 = vcmp.lt.s32.totalorder %v1620, 2
        %v1622 = vsel %vm1621, %v1618, %v1613
        %1623 = vrot.lane.b32.xlu0 %v1622, 126
        %v1624 = vpop.permute.xlu0 %1623
        %s1625 = scalar_lea.vmem [#allocation11], 616
        %1627 = vst [vmem:[%s1625] sm:$0xff] %v1624
        %vm1628 = vcmask 1041408
        %v1629 = vsel %vm1628, %v1615, %v1545
        %v1630 = vrot.slane %v1629, 2
        %s1631 = scalar_lea.vmem %s239, 824
        %v1632 = vld [vmem:[%s1631] sm:$0xff]
        %vm1633 = vcmask 1041408
        %v1634 = vsel %vm1633, %v1632, %v1562
        %v1635 = vrot.slane %v1634, 2
        %v1636 = vlaneseq
        %v1637 = vand.u32 %v1636, 127
        %vm1638 = vcmp.lt.s32.totalorder %v1637, 2
        %v1639 = vsel %vm1638, %v1635, %v1630
        %1640 = vrot.lane.b32.xlu0 %v1639, 126
        %v1641 = vpop.permute.xlu0 %1640
        %s1642 = scalar_lea.vmem [#allocation11], 624
        %1644 = vst [vmem:[%s1642] sm:$0xff] %v1641
        %vm1645 = vcmask 1041408
        %v1646 = vsel %vm1645, %v1632, %v1562
        %v1647 = vrot.slane %v1646, 2
        %s1648 = scalar_lea.vmem %s239, 832
        %v1649 = vld [vmem:[%s1648] sm:$0xff]
        %vm1650 = vcmask 1041408
        %v1651 = vsel %vm1650, %v1649, %v1579
        %v1652 = vrot.slane %v1651, 2
        %v1653 = vlaneseq
        %v1654 = vand.u32 %v1653, 127
        %vm1655 = vcmp.lt.s32.totalorder %v1654, 2
        %v1656 = vsel %vm1655, %v1652, %v1647
        %1657 = vrot.lane.b32.xlu0 %v1656, 126
        %v1658 = vpop.permute.xlu0 %1657
        %s1659 = scalar_lea.vmem [#allocation11], 632
        %1661 = vst [vmem:[%s1659] sm:$0xff] %v1658
        %s1662 = scalar_lea.vmem %s239, 840
        %v1663 = vld [vmem:[%s1662] sm:$0xff]
        %vm1664 = vcmask 1041408
        %v1665 = vsel %vm1664, %v1663, %v1593
        %v1666 = vrot.slane %v1665, 2
        %s1667 = scalar_lea.vmem %s239, 848
        %v1668 = vld [vmem:[%s1667] sm:$0xff]
        %vm1669 = vcmask 1041408
        %v1670 = vsel %vm1669, %v1668, %v1598
        %v1671 = vrot.slane %v1670, 2
        %v1672 = vlaneseq
        %v1673 = vand.u32 %v1672, 127
        %vm1674 = vcmp.lt.s32.totalorder %v1673, 2
        %v1675 = vsel %vm1674, %v1671, %v1666
        %1676 = vrot.lane.b32.xlu0 %v1675, 126
        %v1677 = vpop.permute.xlu0 %1676
        %s1678 = scalar_lea.vmem [#allocation11], 640
        %1680 = vst [vmem:[%s1678] sm:$0xff] %v1677
        %vm1681 = vcmask 1041408
        %v1682 = vsel %vm1681, %v1668, %v1598
        %v1683 = vrot.slane %v1682, 2
        %s1684 = scalar_lea.vmem %s239, 856
        %v1685 = vld [vmem:[%s1684] sm:$0xff]
        %vm1686 = vcmask 1041408
        %v1687 = vsel %vm1686, %v1685, %v1615
        %v1688 = vrot.slane %v1687, 2
        %v1689 = vlaneseq
        %v1690 = vand.u32 %v1689, 127
        %vm1691 = vcmp.lt.s32.totalorder %v1690, 2
        %v1692 = vsel %vm1691, %v1688, %v1683
        %1693 = vrot.lane.b32.xlu0 %v1692, 126
        %v1694 = vpop.permute.xlu0 %1693
        %s1695 = scalar_lea.vmem [#allocation11], 648
        %1697 = vst [vmem:[%s1695] sm:$0xff] %v1694
        %vm1698 = vcmask 1041408
        %v1699 = vsel %vm1698, %v1685, %v1615
        %v1700 = vrot.slane %v1699, 2
        %s1701 = scalar_lea.vmem %s239, 864
        %v1702 = vld [vmem:[%s1701] sm:$0xff]
        %vm1703 = vcmask 1041408
        %v1704 = vsel %vm1703, %v1702, %v1632
        %v1705 = vrot.slane %v1704, 2
        %v1706 = vlaneseq
        %v1707 = vand.u32 %v1706, 127
        %vm1708 = vcmp.lt.s32.totalorder %v1707, 2
        %v1709 = vsel %vm1708, %v1705, %v1700
        %1710 = vrot.lane.b32.xlu0 %v1709, 126
        %v1711 = vpop.permute.xlu0 %1710
        %s1712 = scalar_lea.vmem [#allocation11], 656
        %1714 = vst [vmem:[%s1712] sm:$0xff] %v1711
        %vm1715 = vcmask 1041408
        %v1716 = vsel %vm1715, %v1702, %v1632
        %v1717 = vrot.slane %v1716, 2
        %s1718 = scalar_lea.vmem %s239, 872
        %v1719 = vld [vmem:[%s1718] sm:$0xff]
        %vm1720 = vcmask 1041408
        %v1721 = vsel %vm1720, %v1719, %v1649
        %v1722 = vrot.slane %v1721, 2
        %v1723 = vlaneseq
        %v1724 = vand.u32 %v1723, 127
        %vm1725 = vcmp.lt.s32.totalorder %v1724, 2
        %v1726 = vsel %vm1725, %v1722, %v1717
        %1727 = vrot.lane.b32.xlu0 %v1726, 126
        %v1728 = vpop.permute.xlu0 %1727
        %s1729 = scalar_lea.vmem [#allocation11], 664
        %1731 = vst [vmem:[%s1729] sm:$0xff] %v1728
        %s1732 = scalar_lea.vmem %s239, 880
        %v1733 = vld [vmem:[%s1732] sm:$0xff]
        %vm1734 = vcmask 1041408
        %v1735 = vsel %vm1734, %v1733, %v1663
        %v1736 = vrot.slane %v1735, 2
        %s1737 = scalar_lea.vmem %s239, 888
        %v1738 = vld [vmem:[%s1737] sm:$0xff]
        %vm1739 = vcmask 1041408
        %v1740 = vsel %vm1739, %v1738, %v1668
        %v1741 = vrot.slane %v1740, 2
        %v1742 = vlaneseq
        %v1743 = vand.u32 %v1742, 127
        %vm1744 = vcmp.lt.s32.totalorder %v1743, 2
        %v1745 = vsel %vm1744, %v1741, %v1736
        %1746 = vrot.lane.b32.xlu0 %v1745, 126
        %v1747 = vpop.permute.xlu0 %1746
        %s1748 = scalar_lea.vmem [#allocation11], 672
        %1750 = vst [vmem:[%s1748] sm:$0xff] %v1747
        %vm1751 = vcmask 1041408
        %v1752 = vsel %vm1751, %v1738, %v1668
        %v1753 = vrot.slane %v1752, 2
        %s1754 = scalar_lea.vmem %s239, 896
        %v1755 = vld [vmem:[%s1754] sm:$0xff]
        %vm1756 = vcmask 1041408
        %v1757 = vsel %vm1756, %v1755, %v1685
        %v1758 = vrot.slane %v1757, 2
        %v1759 = vlaneseq
        %v1760 = vand.u32 %v1759, 127
        %vm1761 = vcmp.lt.s32.totalorder %v1760, 2
        %v1762 = vsel %vm1761, %v1758, %v1753
        %1763 = vrot.lane.b32.xlu0 %v1762, 126
        %v1764 = vpop.permute.xlu0 %1763
        %s1765 = scalar_lea.vmem [#allocation11], 680
        %1767 = vst [vmem:[%s1765] sm:$0xff] %v1764
        %vm1768 = vcmask 1041408
        %v1769 = vsel %vm1768, %v1755, %v1685
        %v1770 = vrot.slane %v1769, 2
        %s1771 = scalar_lea.vmem %s239, 904
        %v1772 = vld [vmem:[%s1771] sm:$0xff]
        %vm1773 = vcmask 1041408
        %v1774 = vsel %vm1773, %v1772, %v1702
        %v1775 = vrot.slane %v1774, 2
        %v1776 = vlaneseq
        %v1777 = vand.u32 %v1776, 127
        %vm1778 = vcmp.lt.s32.totalorder %v1777, 2
        %v1779 = vsel %vm1778, %v1775, %v1770
        %1780 = vrot.lane.b32.xlu0 %v1779, 126
        %v1781 = vpop.permute.xlu0 %1780
        %s1782 = scalar_lea.vmem [#allocation11], 688
        %1784 = vst [vmem:[%s1782] sm:$0xff] %v1781
        %vm1785 = vcmask 1041408
        %v1786 = vsel %vm1785, %v1772, %v1702
        %v1787 = vrot.slane %v1786, 2
        %s1788 = scalar_lea.vmem %s239, 912
        %v1789 = vld [vmem:[%s1788] sm:$0xff]
        %vm1790 = vcmask 1041408
        %v1791 = vsel %vm1790, %v1789, %v1719
        %v1792 = vrot.slane %v1791, 2
        %v1793 = vlaneseq
        %v1794 = vand.u32 %v1793, 127
        %vm1795 = vcmp.lt.s32.totalorder %v1794, 2
        %v1796 = vsel %vm1795, %v1792, %v1787
        %1797 = vrot.lane.b32.xlu0 %v1796, 126
        %v1798 = vpop.permute.xlu0 %1797
        %s1799 = scalar_lea.vmem [#allocation11], 696
        %1801 = vst [vmem:[%s1799] sm:$0xff] %v1798
        %s1802 = scalar_lea.vmem %s239, 920
        %v1803 = vld [vmem:[%s1802] sm:$0xff]
        %vm1804 = vcmask 1041408
        %v1805 = vsel %vm1804, %v1803, %v1733
        %v1806 = vrot.slane %v1805, 2
        %s1807 = scalar_lea.vmem %s239, 928
        %v1808 = vld [vmem:[%s1807] sm:$0xff]
        %vm1809 = vcmask 1041408
        %v1810 = vsel %vm1809, %v1808, %v1738
        %v1811 = vrot.slane %v1810, 2
        %v1812 = vlaneseq
        %v1813 = vand.u32 %v1812, 127
        %vm1814 = vcmp.lt.s32.totalorder %v1813, 2
        %v1815 = vsel %vm1814, %v1811, %v1806
        %1816 = vrot.lane.b32.xlu0 %v1815, 126
        %v1817 = vpop.permute.xlu0 %1816
        %s1818 = scalar_lea.vmem [#allocation11], 704
        %1820 = vst [vmem:[%s1818] sm:$0xff] %v1817
        %vm1821 = vcmask 1041408
        %v1822 = vsel %vm1821, %v1808, %v1738
        %v1823 = vrot.slane %v1822, 2
        %s1824 = scalar_lea.vmem %s239, 936
        %v1825 = vld [vmem:[%s1824] sm:$0xff]
        %vm1826 = vcmask 1041408
        %v1827 = vsel %vm1826, %v1825, %v1755
        %v1828 = vrot.slane %v1827, 2
        %v1829 = vlaneseq
        %v1830 = vand.u32 %v1829, 127
        %vm1831 = vcmp.lt.s32.totalorder %v1830, 2
        %v1832 = vsel %vm1831, %v1828, %v1823
        %1833 = vrot.lane.b32.xlu0 %v1832, 126
        %v1834 = vpop.permute.xlu0 %1833
        %s1835 = scalar_lea.vmem [#allocation11], 712
        %1837 = vst [vmem:[%s1835] sm:$0xff] %v1834
        %vm1838 = vcmask 1041408
        %v1839 = vsel %vm1838, %v1825, %v1755
        %v1840 = vrot.slane %v1839, 2
        %s1841 = scalar_lea.vmem %s239, 944
        %v1842 = vld [vmem:[%s1841] sm:$0xff]
        %vm1843 = vcmask 1041408
        %v1844 = vsel %vm1843, %v1842, %v1772
        %v1845 = vrot.slane %v1844, 2
        %v1846 = vlaneseq
        %v1847 = vand.u32 %v1846, 127
        %vm1848 = vcmp.lt.s32.totalorder %v1847, 2
        %v1849 = vsel %vm1848, %v1845, %v1840
        %1850 = vrot.lane.b32.xlu0 %v1849, 126
        %v1851 = vpop.permute.xlu0 %1850
        %s1852 = scalar_lea.vmem [#allocation11], 720
        %1854 = vst [vmem:[%s1852] sm:$0xff] %v1851
        %vm1855 = vcmask 1041408
        %v1856 = vsel %vm1855, %v1842, %v1772
        %v1857 = vrot.slane %v1856, 2
        %s1858 = scalar_lea.vmem %s239, 952
        %v1859 = vld [vmem:[%s1858] sm:$0xff]
        %vm1860 = vcmask 1041408
        %v1861 = vsel %vm1860, %v1859, %v1789
        %v1862 = vrot.slane %v1861, 2
        %v1863 = vlaneseq
        %v1864 = vand.u32 %v1863, 127
        %vm1865 = vcmp.lt.s32.totalorder %v1864, 2
        %v1866 = vsel %vm1865, %v1862, %v1857
        %1867 = vrot.lane.b32.xlu0 %v1866, 126
        %v1868 = vpop.permute.xlu0 %1867
        %s1869 = scalar_lea.vmem [#allocation11], 728
        %1871 = vst [vmem:[%s1869] sm:$0xff] %v1868
        %s1872 = scalar_lea.vmem %s239, 960
        %v1873 = vld [vmem:[%s1872] sm:$0xff]
        %vm1874 = vcmask 1041408
        %v1875 = vsel %vm1874, %v1873, %v1803
        %v1876 = vrot.slane %v1875, 2
        %s1877 = scalar_lea.vmem %s239, 968
        %v1878 = vld [vmem:[%s1877] sm:$0xff]
        %vm1879 = vcmask 1041408
        %v1880 = vsel %vm1879, %v1878, %v1808
        %v1881 = vrot.slane %v1880, 2
        %v1882 = vlaneseq
        %v1883 = vand.u32 %v1882, 127
        %vm1884 = vcmp.lt.s32.totalorder %v1883, 2
        %v1885 = vsel %vm1884, %v1881, %v1876
        %1886 = vrot.lane.b32.xlu0 %v1885, 126
        %v1887 = vpop.permute.xlu0 %1886
        %s1888 = scalar_lea.vmem [#allocation11], 736
        %1890 = vst [vmem:[%s1888] sm:$0xff] %v1887
        %vm1891 = vcmask 1041408
        %v1892 = vsel %vm1891, %v1878, %v1808
        %v1893 = vrot.slane %v1892, 2
        %s1894 = scalar_lea.vmem %s239, 976
        %v1895 = vld [vmem:[%s1894] sm:$0xff]
        %vm1896 = vcmask 1041408
        %v1897 = vsel %vm1896, %v1895, %v1825
        %v1898 = vrot.slane %v1897, 2
        %v1899 = vlaneseq
        %v1900 = vand.u32 %v1899, 127
        %vm1901 = vcmp.lt.s32.totalorder %v1900, 2
        %v1902 = vsel %vm1901, %v1898, %v1893
        %1903 = vrot.lane.b32.xlu0 %v1902, 126
        %v1904 = vpop.permute.xlu0 %1903
        %s1905 = scalar_lea.vmem [#allocation11], 744
        %1907 = vst [vmem:[%s1905] sm:$0xff] %v1904
        %vm1908 = vcmask 1041408
        %v1909 = vsel %vm1908, %v1895, %v1825
        %v1910 = vrot.slane %v1909, 2
        %s1911 = scalar_lea.vmem %s239, 984
        %v1912 = vld [vmem:[%s1911] sm:$0xff]
        %vm1913 = vcmask 1041408
        %v1914 = vsel %vm1913, %v1912, %v1842
        %v1915 = vrot.slane %v1914, 2
        %v1916 = vlaneseq
        %v1917 = vand.u32 %v1916, 127
        %vm1918 = vcmp.lt.s32.totalorder %v1917, 2
        %v1919 = vsel %vm1918, %v1915, %v1910
        %1920 = vrot.lane.b32.xlu0 %v1919, 126
        %v1921 = vpop.permute.xlu0 %1920
        %s1922 = scalar_lea.vmem [#allocation11], 752
        %1924 = vst [vmem:[%s1922] sm:$0xff] %v1921
        %vm1925 = vcmask 1041408
        %v1926 = vsel %vm1925, %v1912, %v1842
        %v1927 = vrot.slane %v1926, 2
        %s1928 = scalar_lea.vmem %s239, 992
        %v1929 = vld [vmem:[%s1928] sm:$0xff]
        %vm1930 = vcmask 1041408
        %v1931 = vsel %vm1930, %v1929, %v1859
        %v1932 = vrot.slane %v1931, 2
        %v1933 = vlaneseq
        %v1934 = vand.u32 %v1933, 127
        %vm1935 = vcmp.lt.s32.totalorder %v1934, 2
        %v1936 = vsel %vm1935, %v1932, %v1927
        %1937 = vrot.lane.b32.xlu0 %v1936, 126
        %v1938 = vpop.permute.xlu0 %1937
        %s1939 = scalar_lea.vmem [#allocation11], 760
        %1941 = vst [vmem:[%s1939] sm:$0xff] %v1938
        %s1942 = scalar_lea.vmem %s239, 1000
        %v1943 = vld [vmem:[%s1942] sm:$0xff]
        %vm1944 = vcmask 1041408
        %v1945 = vsel %vm1944, %v1943, %v1873
        %v1946 = vrot.slane %v1945, 2
        %s1947 = scalar_lea.vmem %s239, 1008
        %v1948 = vld [vmem:[%s1947] sm:$0xff]
        %vm1949 = vcmask 1041408
        %v1950 = vsel %vm1949, %v1948, %v1878
        %v1951 = vrot.slane %v1950, 2
        %v1952 = vlaneseq
        %v1953 = vand.u32 %v1952, 127
        %vm1954 = vcmp.lt.s32.totalorder %v1953, 2
        %v1955 = vsel %vm1954, %v1951, %v1946
        %1956 = vrot.lane.b32.xlu0 %v1955, 126
        %v1957 = vpop.permute.xlu0 %1956
        %s1958 = scalar_lea.vmem [#allocation11], 768
        %1960 = vst [vmem:[%s1958] sm:$0xff] %v1957
        %vm1961 = vcmask 1041408
        %v1962 = vsel %vm1961, %v1948, %v1878
        %v1963 = vrot.slane %v1962, 2
        %s1964 = scalar_lea.vmem %s239, 1016
        %v1965 = vld [vmem:[%s1964] sm:$0xff]
        %vm1966 = vcmask 1041408
        %v1967 = vsel %vm1966, %v1965, %v1895
        %v1968 = vrot.slane %v1967, 2
        %v1969 = vlaneseq
        %v1970 = vand.u32 %v1969, 127
        %vm1971 = vcmp.lt.s32.totalorder %v1970, 2
        %v1972 = vsel %vm1971, %v1968, %v1963
        %1973 = vrot.lane.b32.xlu0 %v1972, 126
        %v1974 = vpop.permute.xlu0 %1973
        %s1975 = scalar_lea.vmem [#allocation11], 776
        %1977 = vst [vmem:[%s1975] sm:$0xff] %v1974
        %vm1978 = vcmask 1041408
        %v1979 = vsel %vm1978, %v1965, %v1895
        %v1980 = vrot.slane %v1979, 2
        %s1981 = scalar_lea.vmem %s239, 1024
        %v1982 = vld [vmem:[%s1981] sm:$0xff]
        %vm1983 = vcmask 1041408
        %v1984 = vsel %vm1983, %v1982, %v1912
        %v1985 = vrot.slane %v1984, 2
        %v1986 = vlaneseq
        %v1987 = vand.u32 %v1986, 127
        %vm1988 = vcmp.lt.s32.totalorder %v1987, 2
        %v1989 = vsel %vm1988, %v1985, %v1980
        %1990 = vrot.lane.b32.xlu0 %v1989, 126
        %v1991 = vpop.permute.xlu0 %1990
        %s1992 = scalar_lea.vmem [#allocation11], 784
        %1994 = vst [vmem:[%s1992] sm:$0xff] %v1991
        %vm1995 = vcmask 1041408
        %v1996 = vsel %vm1995, %v1982, %v1912
        %v1997 = vrot.slane %v1996, 2
        %s1998 = scalar_lea.vmem %s239, 1032
        %v1999 = vld [vmem:[%s1998] sm:$0xff]
        %vm2000 = vcmask 1041408
        %v2001 = vsel %vm2000, %v1999, %v1929
        %v2002 = vrot.slane %v2001, 2
        %v2003 = vlaneseq
        %v2004 = vand.u32 %v2003, 127
        %vm2005 = vcmp.lt.s32.totalorder %v2004, 2
        %v2006 = vsel %vm2005, %v2002, %v1997
        %2007 = vrot.lane.b32.xlu0 %v2006, 126
        %v2008 = vpop.permute.xlu0 %2007
        %s2009 = scalar_lea.vmem [#allocation11], 792
        %2011 = vst [vmem:[%s2009] sm:$0xff] %v2008
        %s2012 = scalar_lea.vmem %s239, 1040
        %v2013 = vld [vmem:[%s2012] sm:$0xff]
        %vm2014 = vcmask 1041408
        %v2015 = vsel %vm2014, %v2013, %v1943
        %v2016 = vrot.slane %v2015, 2
        %s2017 = scalar_lea.vmem %s239, 1048
        %v2018 = vld [vmem:[%s2017] sm:$0xff]
        %vm2019 = vcmask 1041408
        %v2020 = vsel %vm2019, %v2018, %v1948
        %v2021 = vrot.slane %v2020, 2
        %v2022 = vlaneseq
        %v2023 = vand.u32 %v2022, 127
        %vm2024 = vcmp.lt.s32.totalorder %v2023, 2
        %v2025 = vsel %vm2024, %v2021, %v2016
        %2026 = vrot.lane.b32.xlu0 %v2025, 126
        %v2027 = vpop.permute.xlu0 %2026
        %s2028 = scalar_lea.vmem [#allocation11], 800
        %2030 = vst [vmem:[%s2028] sm:$0xff] %v2027
        %vm2031 = vcmask 1041408
        %v2032 = vsel %vm2031, %v2018, %v1948
        %v2033 = vrot.slane %v2032, 2
        %s2034 = scalar_lea.vmem %s239, 1056
        %v2035 = vld [vmem:[%s2034] sm:$0xff]
        %vm2036 = vcmask 1041408
        %v2037 = vsel %vm2036, %v2035, %v1965
        %v2038 = vrot.slane %v2037, 2
        %v2039 = vlaneseq
        %v2040 = vand.u32 %v2039, 127
        %vm2041 = vcmp.lt.s32.totalorder %v2040, 2
        %v2042 = vsel %vm2041, %v2038, %v2033
        %2043 = vrot.lane.b32.xlu0 %v2042, 126
        %v2044 = vpop.permute.xlu0 %2043
        %s2045 = scalar_lea.vmem [#allocation11], 808
        %2047 = vst [vmem:[%s2045] sm:$0xff] %v2044
        %vm2048 = vcmask 1041408
        %v2049 = vsel %vm2048, %v2035, %v1965
        %v2050 = vrot.slane %v2049, 2
        %s2051 = scalar_lea.vmem %s239, 1064
        %v2052 = vld [vmem:[%s2051] sm:$0xff]
        %vm2053 = vcmask 1041408
        %v2054 = vsel %vm2053, %v2052, %v1982
        %v2055 = vrot.slane %v2054, 2
        %v2056 = vlaneseq
        %v2057 = vand.u32 %v2056, 127
        %vm2058 = vcmp.lt.s32.totalorder %v2057, 2
        %v2059 = vsel %vm2058, %v2055, %v2050
        %2060 = vrot.lane.b32.xlu0 %v2059, 126
        %v2061 = vpop.permute.xlu0 %2060
        %s2062 = scalar_lea.vmem [#allocation11], 816
        %2064 = vst [vmem:[%s2062] sm:$0xff] %v2061
        %vm2065 = vcmask 1041408
        %v2066 = vsel %vm2065, %v2052, %v1982
        %v2067 = vrot.slane %v2066, 2
        %s2068 = scalar_lea.vmem %s239, 1072
        %v2069 = vld [vmem:[%s2068] sm:$0xff]
        %vm2070 = vcmask 1041408
        %v2071 = vsel %vm2070, %v2069, %v1999
        %v2072 = vrot.slane %v2071, 2
        %v2073 = vlaneseq
        %v2074 = vand.u32 %v2073, 127
        %vm2075 = vcmp.lt.s32.totalorder %v2074, 2
        %v2076 = vsel %vm2075, %v2072, %v2067
        %2077 = vrot.lane.b32.xlu0 %v2076, 126
        %v2078 = vpop.permute.xlu0 %2077
        %s2079 = scalar_lea.vmem [#allocation11], 824
        %2081 = vst [vmem:[%s2079] sm:$0xff] %v2078
        %s2082 = scalar_lea.vmem %s239, 1080
        %v2083 = vld [vmem:[%s2082] sm:$0xff]
        %vm2084 = vcmask 1041408
        %v2085 = vsel %vm2084, %v2083, %v2013
        %v2086 = vrot.slane %v2085, 2
        %s2087 = scalar_lea.vmem %s239, 1088
        %v2088 = vld [vmem:[%s2087] sm:$0xff]
        %vm2089 = vcmask 1041408
        %v2090 = vsel %vm2089, %v2088, %v2018
        %v2091 = vrot.slane %v2090, 2
        %v2092 = vlaneseq
        %v2093 = vand.u32 %v2092, 127
        %vm2094 = vcmp.lt.s32.totalorder %v2093, 2
        %v2095 = vsel %vm2094, %v2091, %v2086
        %2096 = vrot.lane.b32.xlu0 %v2095, 126
        %v2097 = vpop.permute.xlu0 %2096
        %s2098 = scalar_lea.vmem [#allocation11], 832
        %2100 = vst [vmem:[%s2098] sm:$0xff] %v2097
        %vm2101 = vcmask 1041408
        %v2102 = vsel %vm2101, %v2088, %v2018
        %v2103 = vrot.slane %v2102, 2
        %s2104 = scalar_lea.vmem %s239, 1096
        %v2105 = vld [vmem:[%s2104] sm:$0xff]
        %vm2106 = vcmask 1041408
        %v2107 = vsel %vm2106, %v2105, %v2035
        %v2108 = vrot.slane %v2107, 2
        %v2109 = vlaneseq
        %v2110 = vand.u32 %v2109, 127
        %vm2111 = vcmp.lt.s32.totalorder %v2110, 2
        %v2112 = vsel %vm2111, %v2108, %v2103
        %2113 = vrot.lane.b32.xlu0 %v2112, 126
        %v2114 = vpop.permute.xlu0 %2113
        %s2115 = scalar_lea.vmem [#allocation11], 840
        %2117 = vst [vmem:[%s2115] sm:$0xff] %v2114
        %vm2118 = vcmask 1041408
        %v2119 = vsel %vm2118, %v2105, %v2035
        %v2120 = vrot.slane %v2119, 2
        %s2121 = scalar_lea.vmem %s239, 1104
        %v2122 = vld [vmem:[%s2121] sm:$0xff]
        %vm2123 = vcmask 1041408
        %v2124 = vsel %vm2123, %v2122, %v2052
        %v2125 = vrot.slane %v2124, 2
        %v2126 = vlaneseq
        %v2127 = vand.u32 %v2126, 127
        %vm2128 = vcmp.lt.s32.totalorder %v2127, 2
        %v2129 = vsel %vm2128, %v2125, %v2120
        %2130 = vrot.lane.b32.xlu0 %v2129, 126
        %v2131 = vpop.permute.xlu0 %2130
        %s2132 = scalar_lea.vmem [#allocation11], 848
        %2134 = vst [vmem:[%s2132] sm:$0xff] %v2131
        %vm2135 = vcmask 1041408
        %v2136 = vsel %vm2135, %v2122, %v2052
        %v2137 = vrot.slane %v2136, 2
        %s2138 = scalar_lea.vmem %s239, 1112
        %v2139 = vld [vmem:[%s2138] sm:$0xff]
        %vm2140 = vcmask 1041408
        %v2141 = vsel %vm2140, %v2139, %v2069
        %v2142 = vrot.slane %v2141, 2
        %v2143 = vlaneseq
        %v2144 = vand.u32 %v2143, 127
        %vm2145 = vcmp.lt.s32.totalorder %v2144, 2
        %v2146 = vsel %vm2145, %v2142, %v2137
        %2147 = vrot.lane.b32.xlu0 %v2146, 126
        %v2148 = vpop.permute.xlu0 %2147
        %s2149 = scalar_lea.vmem [#allocation11], 856
        %2151 = vst [vmem:[%s2149] sm:$0xff] %v2148
        %s2152 = scalar_lea.vmem %s239, 1120
        %v2153 = vld [vmem:[%s2152] sm:$0xff]
        %vm2154 = vcmask 1041408
        %v2155 = vsel %vm2154, %v2153, %v2083
        %v2156 = vrot.slane %v2155, 2
        %s2157 = scalar_lea.vmem %s239, 1128
        %v2158 = vld [vmem:[%s2157] sm:$0xff]
        %vm2159 = vcmask 1041408
        %v2160 = vsel %vm2159, %v2158, %v2088
        %v2161 = vrot.slane %v2160, 2
        %v2162 = vlaneseq
        %v2163 = vand.u32 %v2162, 127
        %vm2164 = vcmp.lt.s32.totalorder %v2163, 2
        %v2165 = vsel %vm2164, %v2161, %v2156
        %2166 = vrot.lane.b32.xlu0 %v2165, 126
        %v2167 = vpop.permute.xlu0 %2166
        %s2168 = scalar_lea.vmem [#allocation11], 864
        %2170 = vst [vmem:[%s2168] sm:$0xff] %v2167
        %vm2171 = vcmask 1041408
        %v2172 = vsel %vm2171, %v2158, %v2088
        %v2173 = vrot.slane %v2172, 2
        %s2174 = scalar_lea.vmem %s239, 1136
        %v2175 = vld [vmem:[%s2174] sm:$0xff]
        %vm2176 = vcmask 1041408
        %v2177 = vsel %vm2176, %v2175, %v2105
        %v2178 = vrot.slane %v2177, 2
        %v2179 = vlaneseq
        %v2180 = vand.u32 %v2179, 127
        %vm2181 = vcmp.lt.s32.totalorder %v2180, 2
        %v2182 = vsel %vm2181, %v2178, %v2173
        %2183 = vrot.lane.b32.xlu0 %v2182, 126
        %v2184 = vpop.permute.xlu0 %2183
        %s2185 = scalar_lea.vmem [#allocation11], 872
        %2187 = vst [vmem:[%s2185] sm:$0xff] %v2184
        %vm2188 = vcmask 1041408
        %v2189 = vsel %vm2188, %v2175, %v2105
        %v2190 = vrot.slane %v2189, 2
        %s2191 = scalar_lea.vmem %s239, 1144
        %v2192 = vld [vmem:[%s2191] sm:$0xff]
        %vm2193 = vcmask 1041408
        %v2194 = vsel %vm2193, %v2192, %v2122
        %v2195 = vrot.slane %v2194, 2
        %v2196 = vlaneseq
        %v2197 = vand.u32 %v2196, 127
        %vm2198 = vcmp.lt.s32.totalorder %v2197, 2
        %v2199 = vsel %vm2198, %v2195, %v2190
        %2200 = vrot.lane.b32.xlu0 %v2199, 126
        %v2201 = vpop.permute.xlu0 %2200
        %s2202 = scalar_lea.vmem [#allocation11], 880
        %2204 = vst [vmem:[%s2202] sm:$0xff] %v2201
        %vm2205 = vcmask 1041408
        %v2206 = vsel %vm2205, %v2192, %v2122
        %v2207 = vrot.slane %v2206, 2
        %s2208 = scalar_lea.vmem %s239, 1152
        %v2209 = vld [vmem:[%s2208] sm:$0xff]
        %vm2210 = vcmask 1041408
        %v2211 = vsel %vm2210, %v2209, %v2139
        %v2212 = vrot.slane %v2211, 2
        %v2213 = vlaneseq
        %v2214 = vand.u32 %v2213, 127
        %vm2215 = vcmp.lt.s32.totalorder %v2214, 2
        %v2216 = vsel %vm2215, %v2212, %v2207
        %2217 = vrot.lane.b32.xlu0 %v2216, 126
        %v2218 = vpop.permute.xlu0 %2217
        %s2219 = scalar_lea.vmem [#allocation11], 888
        %2221 = vst [vmem:[%s2219] sm:$0xff] %v2218
        %s2222 = scalar_lea.vmem %s239, 1160
        %v2223 = vld [vmem:[%s2222] sm:$0xff]
        %vm2224 = vcmask 1041408
        %v2225 = vsel %vm2224, %v2223, %v2153
        %v2226 = vrot.slane %v2225, 2
        %s2227 = scalar_lea.vmem %s239, 1168
        %v2228 = vld [vmem:[%s2227] sm:$0xff]
        %vm2229 = vcmask 1041408
        %v2230 = vsel %vm2229, %v2228, %v2158
        %v2231 = vrot.slane %v2230, 2
        %v2232 = vlaneseq
        %v2233 = vand.u32 %v2232, 127
        %vm2234 = vcmp.lt.s32.totalorder %v2233, 2
        %v2235 = vsel %vm2234, %v2231, %v2226
        %2236 = vrot.lane.b32.xlu0 %v2235, 126
        %v2237 = vpop.permute.xlu0 %2236
        %s2238 = scalar_lea.vmem [#allocation11], 896
        %2240 = vst [vmem:[%s2238] sm:$0xff] %v2237
        %vm2241 = vcmask 1041408
        %v2242 = vsel %vm2241, %v2228, %v2158
        %v2243 = vrot.slane %v2242, 2
        %s2244 = scalar_lea.vmem %s239, 1176
        %v2245 = vld [vmem:[%s2244] sm:$0xff]
        %vm2246 = vcmask 1041408
        %v2247 = vsel %vm2246, %v2245, %v2175
        %v2248 = vrot.slane %v2247, 2
        %v2249 = vlaneseq
        %v2250 = vand.u32 %v2249, 127
        %vm2251 = vcmp.lt.s32.totalorder %v2250, 2
        %v2252 = vsel %vm2251, %v2248, %v2243
        %2253 = vrot.lane.b32.xlu0 %v2252, 126
        %v2254 = vpop.permute.xlu0 %2253
        %s2255 = scalar_lea.vmem [#allocation11], 904
        %2257 = vst [vmem:[%s2255] sm:$0xff] %v2254
        %vm2258 = vcmask 1041408
        %v2259 = vsel %vm2258, %v2245, %v2175
        %v2260 = vrot.slane %v2259, 2
        %s2261 = scalar_lea.vmem %s239, 1184
        %v2262 = vld [vmem:[%s2261] sm:$0xff]
        %vm2263 = vcmask 1041408
        %v2264 = vsel %vm2263, %v2262, %v2192
        %v2265 = vrot.slane %v2264, 2
        %v2266 = vlaneseq
        %v2267 = vand.u32 %v2266, 127
        %vm2268 = vcmp.lt.s32.totalorder %v2267, 2
        %v2269 = vsel %vm2268, %v2265, %v2260
        %2270 = vrot.lane.b32.xlu0 %v2269, 126
        %v2271 = vpop.permute.xlu0 %2270
        %s2272 = scalar_lea.vmem [#allocation11], 912
        %2274 = vst [vmem:[%s2272] sm:$0xff] %v2271
        %vm2275 = vcmask 1041408
        %v2276 = vsel %vm2275, %v2262, %v2192
        %v2277 = vrot.slane %v2276, 2
        %s2278 = scalar_lea.vmem %s239, 1192
        %v2279 = vld [vmem:[%s2278] sm:$0xff]
        %vm2280 = vcmask 1041408
        %v2281 = vsel %vm2280, %v2279, %v2209
        %v2282 = vrot.slane %v2281, 2
        %v2283 = vlaneseq
        %v2284 = vand.u32 %v2283, 127
        %vm2285 = vcmp.lt.s32.totalorder %v2284, 2
        %v2286 = vsel %vm2285, %v2282, %v2277
        %2287 = vrot.lane.b32.xlu0 %v2286, 126
        %v2288 = vpop.permute.xlu0 %2287
        %s2289 = scalar_lea.vmem [#allocation11], 920
        %2291 = vst [vmem:[%s2289] sm:$0xff] %v2288
        %s2292 = scalar_lea.vmem %s239, 1200
        %v2293 = vld [vmem:[%s2292] sm:$0xff]
        %vm2294 = vcmask 1041408
        %v2295 = vsel %vm2294, %v2293, %v2223
        %v2296 = vrot.slane %v2295, 2
        %s2297 = scalar_lea.vmem %s239, 1208
        %v2298 = vld [vmem:[%s2297] sm:$0xff]
        %vm2299 = vcmask 1041408
        %v2300 = vsel %vm2299, %v2298, %v2228
        %v2301 = vrot.slane %v2300, 2
        %v2302 = vlaneseq
        %v2303 = vand.u32 %v2302, 127
        %vm2304 = vcmp.lt.s32.totalorder %v2303, 2
        %v2305 = vsel %vm2304, %v2301, %v2296
        %2306 = vrot.lane.b32.xlu0 %v2305, 126
        %v2307 = vpop.permute.xlu0 %2306
        %s2308 = scalar_lea.vmem [#allocation11], 928
        %2310 = vst [vmem:[%s2308] sm:$0xff] %v2307
        %vm2311 = vcmask 1041408
        %v2312 = vsel %vm2311, %v2298, %v2228
        %v2313 = vrot.slane %v2312, 2
        %s2314 = scalar_lea.vmem %s239, 1216
        %v2315 = vld [vmem:[%s2314] sm:$0xff]
        %vm2316 = vcmask 1041408
        %v2317 = vsel %vm2316, %v2315, %v2245
        %v2318 = vrot.slane %v2317, 2
        %v2319 = vlaneseq
        %v2320 = vand.u32 %v2319, 127
        %vm2321 = vcmp.lt.s32.totalorder %v2320, 2
        %v2322 = vsel %vm2321, %v2318, %v2313
        %2323 = vrot.lane.b32.xlu0 %v2322, 126
        %v2324 = vpop.permute.xlu0 %2323
        %s2325 = scalar_lea.vmem [#allocation11], 936
        %2327 = vst [vmem:[%s2325] sm:$0xff] %v2324
        %vm2328 = vcmask 1041408
        %v2329 = vsel %vm2328, %v2315, %v2245
        %v2330 = vrot.slane %v2329, 2
        %s2331 = scalar_lea.vmem %s239, 1224
        %v2332 = vld [vmem:[%s2331] sm:$0xff]
        %vm2333 = vcmask 1041408
        %v2334 = vsel %vm2333, %v2332, %v2262
        %v2335 = vrot.slane %v2334, 2
        %v2336 = vlaneseq
        %v2337 = vand.u32 %v2336, 127
        %vm2338 = vcmp.lt.s32.totalorder %v2337, 2
        %v2339 = vsel %vm2338, %v2335, %v2330
        %2340 = vrot.lane.b32.xlu0 %v2339, 126
        %v2341 = vpop.permute.xlu0 %2340
        %s2342 = scalar_lea.vmem [#allocation11], 944
        %2344 = vst [vmem:[%s2342] sm:$0xff] %v2341
        %vm2345 = vcmask 1041408
        %v2346 = vsel %vm2345, %v2332, %v2262
        %v2347 = vrot.slane %v2346, 2
        %s2348 = scalar_lea.vmem %s239, 1232
        %v2349 = vld [vmem:[%s2348] sm:$0xff]
        %vm2350 = vcmask 1041408
        %v2351 = vsel %vm2350, %v2349, %v2279
        %v2352 = vrot.slane %v2351, 2
        %v2353 = vlaneseq
        %v2354 = vand.u32 %v2353, 127
        %vm2355 = vcmp.lt.s32.totalorder %v2354, 2
        %v2356 = vsel %vm2355, %v2352, %v2347
        %2357 = vrot.lane.b32.xlu0 %v2356, 126
        %v2358 = vpop.permute.xlu0 %2357
        %s2359 = scalar_lea.vmem [#allocation11], 952
        %2361 = vst [vmem:[%s2359] sm:$0xff] %v2358
        %s2362 = scalar_lea.vmem %s239, 1240
        %v2363 = vld [vmem:[%s2362] sm:$0xff]
        %vm2364 = vcmask 1041408
        %v2365 = vsel %vm2364, %v2363, %v2293
        %v2366 = vrot.slane %v2365, 2
        %s2367 = scalar_lea.vmem %s239, 1248
        %v2368 = vld [vmem:[%s2367] sm:$0xff]
        %vm2369 = vcmask 1041408
        %v2370 = vsel %vm2369, %v2368, %v2298
        %v2371 = vrot.slane %v2370, 2
        %v2372 = vlaneseq
        %v2373 = vand.u32 %v2372, 127
        %vm2374 = vcmp.lt.s32.totalorder %v2373, 2
        %v2375 = vsel %vm2374, %v2371, %v2366
        %2376 = vrot.lane.b32.xlu0 %v2375, 126
        %v2377 = vpop.permute.xlu0 %2376
        %s2378 = scalar_lea.vmem [#allocation11], 960
        %2380 = vst [vmem:[%s2378] sm:$0xff] %v2377
        %vm2381 = vcmask 1041408
        %v2382 = vsel %vm2381, %v2368, %v2298
        %v2383 = vrot.slane %v2382, 2
        %s2384 = scalar_lea.vmem %s239, 1256
        %v2385 = vld [vmem:[%s2384] sm:$0xff]
        %vm2386 = vcmask 1041408
        %v2387 = vsel %vm2386, %v2385, %v2315
        %v2388 = vrot.slane %v2387, 2
        %v2389 = vlaneseq
        %v2390 = vand.u32 %v2389, 127
        %vm2391 = vcmp.lt.s32.totalorder %v2390, 2
        %v2392 = vsel %vm2391, %v2388, %v2383
        %2393 = vrot.lane.b32.xlu0 %v2392, 126
        %v2394 = vpop.permute.xlu0 %2393
        %s2395 = scalar_lea.vmem [#allocation11], 968
        %2397 = vst [vmem:[%s2395] sm:$0xff] %v2394
        %vm2398 = vcmask 1041408
        %v2399 = vsel %vm2398, %v2385, %v2315
        %v2400 = vrot.slane %v2399, 2
        %s2401 = scalar_lea.vmem %s239, 1264
        %v2402 = vld [vmem:[%s2401] sm:$0xff]
        %vm2403 = vcmask 1041408
        %v2404 = vsel %vm2403, %v2402, %v2332
        %v2405 = vrot.slane %v2404, 2
        %v2406 = vlaneseq
        %v2407 = vand.u32 %v2406, 127
        %vm2408 = vcmp.lt.s32.totalorder %v2407, 2
        %v2409 = vsel %vm2408, %v2405, %v2400
        %2410 = vrot.lane.b32.xlu0 %v2409, 126
        %v2411 = vpop.permute.xlu0 %2410
        %s2412 = scalar_lea.vmem [#allocation11], 976
        %2414 = vst [vmem:[%s2412] sm:$0xff] %v2411
        %vm2415 = vcmask 1041408
        %v2416 = vsel %vm2415, %v2402, %v2332
        %v2417 = vrot.slane %v2416, 2
        %s2418 = scalar_lea.vmem %s239, 1272
        %v2419 = vld [vmem:[%s2418] sm:$0xff]
        %vm2420 = vcmask 1041408
        %v2421 = vsel %vm2420, %v2419, %v2349
        %v2422 = vrot.slane %v2421, 2
        %v2423 = vlaneseq
        %v2424 = vand.u32 %v2423, 127
        %vm2425 = vcmp.lt.s32.totalorder %v2424, 2
        %v2426 = vsel %vm2425, %v2422, %v2417
        %2427 = vrot.lane.b32.xlu0 %v2426, 126
        %v2428 = vpop.permute.xlu0 %2427
        %s2429 = scalar_lea.vmem [#allocation11], 984
        %2431 = vst [vmem:[%s2429] sm:$0xff] %v2428
        %s2432 = scalar_lea.vmem %s239, 1280
        %s2433 = sadd.s32 %s240, 32
        %s2434 = ssub.s32 64, %s2433
        %p2435 = scmp.lt.s32.totalorder %s2434, 0
        %s2436 = scalar_select %p2435, 0, 255
        %v2437 = vld [vmem:[%s2432] sm:%s2436]
        %vm2438 = vcmask 1041408
        %v2439 = vsel %vm2438, %v2437, %v2363
        %v2440 = vrot.slane %v2439, 2
        %s2441 = scalar_lea.vmem %s239, 1288
        %s2442 = sadd.s32 %s240, 32
        %s2443 = ssub.s32 64, %s2442
        %p2444 = scmp.lt.s32.totalorder %s2443, 0
        %s2445 = scalar_select %p2444, 0, 255
        %v2446 = vld [vmem:[%s2441] sm:%s2445]
        %vm2447 = vcmask 1041408
        %v2448 = vsel %vm2447, %v2446, %v2368
        %v2449 = vrot.slane %v2448, 2
        %v2450 = vlaneseq
        %v2451 = vand.u32 %v2450, 127
        %vm2452 = vcmp.lt.s32.totalorder %v2451, 2
        %v2453 = vsel %vm2452, %v2449, %v2440
        %2454 = vrot.lane.b32.xlu0 %v2453, 126
        %v2455 = vpop.permute.xlu0 %2454
        %s2456 = scalar_lea.vmem [#allocation11], 992
        %2458 = vst [vmem:[%s2456] sm:$0xff] %v2455
        %vm2459 = vcmask 1041408
        %v2460 = vsel %vm2459, %v2446, %v2368
        %v2461 = vrot.slane %v2460, 2
        %s2462 = scalar_lea.vmem %s239, 1296
        %s2463 = sadd.s32 %s240, 32
        %s2464 = ssub.s32 64, %s2463
        %p2465 = scmp.lt.s32.totalorder %s2464, 0
        %s2466 = scalar_select %p2465, 0, 255
        %v2467 = vld [vmem:[%s2462] sm:%s2466]
        %vm2468 = vcmask 1041408
        %v2469 = vsel %vm2468, %v2467, %v2385
        %v2470 = vrot.slane %v2469, 2
        %v2471 = vlaneseq
        %v2472 = vand.u32 %v2471, 127
        %vm2473 = vcmp.lt.s32.totalorder %v2472, 2
        %v2474 = vsel %vm2473, %v2470, %v2461
        %2475 = vrot.lane.b32.xlu0 %v2474, 126
        %v2476 = vpop.permute.xlu0 %2475
        %s2477 = scalar_lea.vmem [#allocation11], 1000
        %2479 = vst [vmem:[%s2477] sm:$0xff] %v2476
        %vm2480 = vcmask 1041408
        %v2481 = vsel %vm2480, %v2467, %v2385
        %v2482 = vrot.slane %v2481, 2
        %s2483 = scalar_lea.vmem %s239, 1304
        %s2484 = sadd.s32 %s240, 32
        %s2485 = ssub.s32 64, %s2484
        %p2486 = scmp.lt.s32.totalorder %s2485, 0
        %s2487 = scalar_select %p2486, 0, 255
        %v2488 = vld [vmem:[%s2483] sm:%s2487]
        %vm2489 = vcmask 1041408
        %v2490 = vsel %vm2489, %v2488, %v2402
        %v2491 = vrot.slane %v2490, 2
        %v2492 = vlaneseq
        %v2493 = vand.u32 %v2492, 127
        %vm2494 = vcmp.lt.s32.totalorder %v2493, 2
        %v2495 = vsel %vm2494, %v2491, %v2482
        %2496 = vrot.lane.b32.xlu0 %v2495, 126
        %v2497 = vpop.permute.xlu0 %2496
        %s2498 = scalar_lea.vmem [#allocation11], 1008
        %2500 = vst [vmem:[%s2498] sm:$0xff] %v2497
        %vm2501 = vcmask 1041408
        %v2502 = vsel %vm2501, %v2488, %v2402
        %v2503 = vrot.slane %v2502, 2
        %s2504 = scalar_lea.vmem %s239, 1312
        %s2505 = sadd.s32 %s240, 32
        %s2506 = ssub.s32 64, %s2505
        %p2507 = scmp.lt.s32.totalorder %s2506, 0
        %s2508 = scalar_select %p2507, 0, 255
        %v2509 = vld [vmem:[%s2504] sm:%s2508]
        %vm2510 = vcmask 1041408
        %v2511 = vsel %vm2510, %v2509, %v2419
        %v2512 = vrot.slane %v2511, 2
        %v2513 = vlaneseq
        %v2514 = vand.u32 %v2513, 127
        %vm2515 = vcmp.lt.s32.totalorder %v2514, 2
        %v2516 = vsel %vm2515, %v2512, %v2503
        %2517 = vrot.lane.b32.xlu0 %v2516, 126
        %v2518 = vpop.permute.xlu0 %2517
        %s2519 = scalar_lea.vmem [#allocation11], 1016
        %2521 = vst [vmem:[%s2519] sm:$0xff] %v2518
        %s2522 = sld [smem:[#allocation2]]
        %s2523 = sld [smem:[#allocation3]]
        %v2524 = vld [vmem:[#allocation11] sm:$0xff]
        %v2525 = vld [vmem:[#allocation11 + $0x8] sm:$0xff]
        %v2526 = vld [vmem:[#allocation11 + $0x10] sm:$0xff]
        %v2527 = vld [vmem:[#allocation11 + $0x18] sm:$0xff]
        %v2528 = vld [vmem:[#allocation11 + $0x20] sm:$0xff]
        %v2529 = vld [vmem:[#allocation11 + $0x28] sm:$0xff]
        %v2530 = vld [vmem:[#allocation11 + $0x30] sm:$0xff]
        %v2531 = vld [vmem:[#allocation11 + $0x38] sm:$0xff]
        %v2532 = vld [vmem:[#allocation11 + $0x40] sm:$0xff]
        %v2533 = vld [vmem:[#allocation11 + $0x48] sm:$0xff]
        %v2534 = vld [vmem:[#allocation11 + $0x50] sm:$0xff]
        %v2535 = vld [vmem:[#allocation11 + $0x58] sm:$0xff]
        %v2536 = vld [vmem:[#allocation11 + $0x60] sm:$0xff]
        %v2537 = vld [vmem:[#allocation11 + $0x68] sm:$0xff]
        %v2538 = vld [vmem:[#allocation11 + $0x70] sm:$0xff]
        %v2539 = vld [vmem:[#allocation11 + $0x78] sm:$0xff]
        %v2540 = vld [vmem:[#allocation11 + $0x80] sm:$0xff]
        %v2541 = vld [vmem:[#allocation11 + $0x88] sm:$0xff]
        %v2542 = vld [vmem:[#allocation11 + $0x90] sm:$0xff]
        %v2543 = vld [vmem:[#allocation11 + $0x98] sm:$0xff]
        %v2544 = vld [vmem:[#allocation11 + $0xa0] sm:$0xff]
        %v2545 = vld [vmem:[#allocation11 + $0xa8] sm:$0xff]
        %v2546 = vld [vmem:[#allocation11 + $0xb0] sm:$0xff]
        %v2547 = vld [vmem:[#allocation11 + $0xb8] sm:$0xff]
        %v2548 = vld [vmem:[#allocation11 + $0xc0] sm:$0xff]
        %v2549 = vld [vmem:[#allocation11 + $0xc8] sm:$0xff]
        %v2550 = vld [vmem:[#allocation11 + $0xd0] sm:$0xff]
        %v2551 = vld [vmem:[#allocation11 + $0xd8] sm:$0xff]
        %v2552 = vld [vmem:[#allocation11 + $0xe0] sm:$0xff]
        %v2553 = vld [vmem:[#allocation11 + $0xe8] sm:$0xff]
        %v2554 = vld [vmem:[#allocation11 + $0xf0] sm:$0xff]
        %v2555 = vld [vmem:[#allocation11 + $0xf8] sm:$0xff]
        %v2556 = vld [vmem:[#allocation11 + $0x100] sm:$0xff]
        %v2557 = vld [vmem:[#allocation11 + $0x108] sm:$0xff]
        %v2558 = vld [vmem:[#allocation11 + $0x110] sm:$0xff]
        %v2559 = vld [vmem:[#allocation11 + $0x118] sm:$0xff]
        %v2560 = vld [vmem:[#allocation11 + $0x120] sm:$0xff]
        %v2561 = vld [vmem:[#allocation11 + $0x128] sm:$0xff]
        %v2562 = vld [vmem:[#allocation11 + $0x130] sm:$0xff]
        %v2563 = vld [vmem:[#allocation11 + $0x138] sm:$0xff]
        %v2564 = vld [vmem:[#allocation11 + $0x140] sm:$0xff]
        %v2565 = vld [vmem:[#allocation11 + $0x148] sm:$0xff]
        %v2566 = vld [vmem:[#allocation11 + $0x150] sm:$0xff]
        %v2567 = vld [vmem:[#allocation11 + $0x158] sm:$0xff]
        %v2568 = vld [vmem:[#allocation11 + $0x160] sm:$0xff]
        %v2569 = vld [vmem:[#allocation11 + $0x168] sm:$0xff]
        %v2570 = vld [vmem:[#allocation11 + $0x170] sm:$0xff]
        %v2571 = vld [vmem:[#allocation11 + $0x178] sm:$0xff]
        %v2572 = vld [vmem:[#allocation11 + $0x180] sm:$0xff]
        %v2573 = vld [vmem:[#allocation11 + $0x188] sm:$0xff]
        %v2574 = vld [vmem:[#allocation11 + $0x190] sm:$0xff]
        %v2575 = vld [vmem:[#allocation11 + $0x198] sm:$0xff]
        %v2576 = vld [vmem:[#allocation11 + $0x1a0] sm:$0xff]
        %v2577 = vld [vmem:[#allocation11 + $0x1a8] sm:$0xff]
        %v2578 = vld [vmem:[#allocation11 + $0x1b0] sm:$0xff]
        %v2579 = vld [vmem:[#allocation11 + $0x1b8] sm:$0xff]
        %v2580 = vld [vmem:[#allocation11 + $0x1c0] sm:$0xff]
        %v2581 = vld [vmem:[#allocation11 + $0x1c8] sm:$0xff]
        %v2582 = vld [vmem:[#allocation11 + $0x1d0] sm:$0xff]
        %v2583 = vld [vmem:[#allocation11 + $0x1d8] sm:$0xff]
        %v2584 = vld [vmem:[#allocation11 + $0x1e0] sm:$0xff]
        %v2585 = vld [vmem:[#allocation11 + $0x1e8] sm:$0xff]
        %v2586 = vld [vmem:[#allocation11 + $0x1f0] sm:$0xff]
        %v2587 = vld [vmem:[#allocation11 + $0x1f8] sm:$0xff]
        %v2588 = vld [vmem:[#allocation11 + $0x200] sm:$0xff]
        %v2589 = vld [vmem:[#allocation11 + $0x208] sm:$0xff]
        %v2590 = vld [vmem:[#allocation11 + $0x210] sm:$0xff]
        %v2591 = vld [vmem:[#allocation11 + $0x218] sm:$0xff]
        %v2592 = vld [vmem:[#allocation11 + $0x220] sm:$0xff]
        %v2593 = vld [vmem:[#allocation11 + $0x228] sm:$0xff]
        %v2594 = vld [vmem:[#allocation11 + $0x230] sm:$0xff]
        %v2595 = vld [vmem:[#allocation11 + $0x238] sm:$0xff]
        %v2596 = vld [vmem:[#allocation11 + $0x240] sm:$0xff]
        %v2597 = vld [vmem:[#allocation11 + $0x248] sm:$0xff]
        %v2598 = vld [vmem:[#allocation11 + $0x250] sm:$0xff]
        %v2599 = vld [vmem:[#allocation11 + $0x258] sm:$0xff]
        %v2600 = vld [vmem:[#allocation11 + $0x260] sm:$0xff]
        %v2601 = vld [vmem:[#allocation11 + $0x268] sm:$0xff]
        %v2602 = vld [vmem:[#allocation11 + $0x270] sm:$0xff]
        %v2603 = vld [vmem:[#allocation11 + $0x278] sm:$0xff]
        %v2604 = vld [vmem:[#allocation11 + $0x280] sm:$0xff]
        %v2605 = vld [vmem:[#allocation11 + $0x288] sm:$0xff]
        %v2606 = vld [vmem:[#allocation11 + $0x290] sm:$0xff]
        %v2607 = vld [vmem:[#allocation11 + $0x298] sm:$0xff]
        %v2608 = vld [vmem:[#allocation11 + $0x2a0] sm:$0xff]
        %v2609 = vld [vmem:[#allocation11 + $0x2a8] sm:$0xff]
        %v2610 = vld [vmem:[#allocation11 + $0x2b0] sm:$0xff]
        %v2611 = vld [vmem:[#allocation11 + $0x2b8] sm:$0xff]
        %v2612 = vld [vmem:[#allocation11 + $0x2c0] sm:$0xff]
        %v2613 = vld [vmem:[#allocation11 + $0x2c8] sm:$0xff]
        %v2614 = vld [vmem:[#allocation11 + $0x2d0] sm:$0xff]
        %v2615 = vld [vmem:[#allocation11 + $0x2d8] sm:$0xff]
        %v2616 = vld [vmem:[#allocation11 + $0x2e0] sm:$0xff]
        %v2617 = vld [vmem:[#allocation11 + $0x2e8] sm:$0xff]
        %v2618 = vld [vmem:[#allocation11 + $0x2f0] sm:$0xff]
        %v2619 = vld [vmem:[#allocation11 + $0x2f8] sm:$0xff]
        %v2620 = vld [vmem:[#allocation11 + $0x300] sm:$0xff]
        %v2621 = vld [vmem:[#allocation11 + $0x308] sm:$0xff]
        %v2622 = vld [vmem:[#allocation11 + $0x310] sm:$0xff]
        %v2623 = vld [vmem:[#allocation11 + $0x318] sm:$0xff]
        %v2624 = vld [vmem:[#allocation11 + $0x320] sm:$0xff]
        %v2625 = vld [vmem:[#allocation11 + $0x328] sm:$0xff]
        %v2626 = vld [vmem:[#allocation11 + $0x330] sm:$0xff]
        %v2627 = vld [vmem:[#allocation11 + $0x338] sm:$0xff]
        %v2628 = vld [vmem:[#allocation11 + $0x340] sm:$0xff]
        %v2629 = vld [vmem:[#allocation11 + $0x348] sm:$0xff]
        %v2630 = vld [vmem:[#allocation11 + $0x350] sm:$0xff]
        %v2631 = vld [vmem:[#allocation11 + $0x358] sm:$0xff]
        %v2632 = vld [vmem:[#allocation11 + $0x360] sm:$0xff]
        %v2633 = vld [vmem:[#allocation11 + $0x368] sm:$0xff]
        %v2634 = vld [vmem:[#allocation11 + $0x370] sm:$0xff]
        %v2635 = vld [vmem:[#allocation11 + $0x378] sm:$0xff]
        %v2636 = vld [vmem:[#allocation11 + $0x380] sm:$0xff]
        %v2637 = vld [vmem:[#allocation11 + $0x388] sm:$0xff]
        %v2638 = vld [vmem:[#allocation11 + $0x390] sm:$0xff]
        %v2639 = vld [vmem:[#allocation11 + $0x398] sm:$0xff]
        %v2640 = vld [vmem:[#allocation11 + $0x3a0] sm:$0xff]
        %v2641 = vld [vmem:[#allocation11 + $0x3a8] sm:$0xff]
        %v2642 = vld [vmem:[#allocation11 + $0x3b0] sm:$0xff]
        %v2643 = vld [vmem:[#allocation11 + $0x3b8] sm:$0xff]
        %v2644 = vld [vmem:[#allocation11 + $0x3c0] sm:$0xff]
        %v2645 = vld [vmem:[#allocation11 + $0x3c8] sm:$0xff]
        %v2646 = vld [vmem:[#allocation11 + $0x3d0] sm:$0xff]
        %v2647 = vld [vmem:[#allocation11 + $0x3d8] sm:$0xff]
        %v2648 = vld [vmem:[#allocation11 + $0x3e0] sm:$0xff]
        %v2649 = vld [vmem:[#allocation11 + $0x3e8] sm:$0xff]
        %v2650 = vld [vmem:[#allocation11 + $0x3f0] sm:$0xff]
        %v2651 = vld [vmem:[#allocation11 + $0x3f8] sm:$0xff]
        %v2652 = vld [vmem:[%s251] sm:$0xff]
        %v2653 = vld [vmem:[%s251 + $0x8] sm:$0xff]
        %v2654 = vld [vmem:[%s251 + $0x10] sm:$0xff]
        %v2655 = vld [vmem:[%s251 + $0x18] sm:$0xff]
        %v2656 = vld [vmem:[%s251 + $0x20] sm:$0xff]
        %v2657 = vld [vmem:[%s251 + $0x28] sm:$0xff]
        %v2658 = vld [vmem:[%s251 + $0x30] sm:$0xff]
        %v2659 = vld [vmem:[%s251 + $0x38] sm:$0xff]
        %v2660 = vld [vmem:[%s251 + $0x40] sm:$0xff]
        %v2661 = vld [vmem:[%s251 + $0x48] sm:$0xff]
        %v2662 = vld [vmem:[%s251 + $0x50] sm:$0xff]
        %v2663 = vld [vmem:[%s251 + $0x58] sm:$0xff]
        %v2664 = vld [vmem:[%s251 + $0x60] sm:$0xff]
        %v2665 = vld [vmem:[%s251 + $0x68] sm:$0xff]
        %v2666 = vld [vmem:[%s251 + $0x70] sm:$0xff]
        %v2667 = vld [vmem:[%s251 + $0x78] sm:$0xff]
        %v2668 = vld [vmem:[%s251 + $0x80] sm:$0xff]
        %v2669 = vld [vmem:[%s251 + $0x88] sm:$0xff]
        %v2670 = vld [vmem:[%s251 + $0x90] sm:$0xff]
        %v2671 = vld [vmem:[%s251 + $0x98] sm:$0xff]
        %v2672 = vld [vmem:[%s251 + $0xa0] sm:$0xff]
        %v2673 = vld [vmem:[%s251 + $0xa8] sm:$0xff]
        %v2674 = vld [vmem:[%s251 + $0xb0] sm:$0xff]
        %v2675 = vld [vmem:[%s251 + $0xb8] sm:$0xff]
        %v2676 = vld [vmem:[%s251 + $0xc0] sm:$0xff]
        %v2677 = vld [vmem:[%s251 + $0xc8] sm:$0xff]
        %v2678 = vld [vmem:[%s251 + $0xd0] sm:$0xff]
        %v2679 = vld [vmem:[%s251 + $0xd8] sm:$0xff]
        %v2680 = vld [vmem:[%s251 + $0xe0] sm:$0xff]
        %v2681 = vld [vmem:[%s251 + $0xe8] sm:$0xff]
        %v2682 = vld [vmem:[%s251 + $0xf0] sm:$0xff]
        %v2683 = vld [vmem:[%s251 + $0xf8] sm:$0xff]
        %v2684 = vld [vmem:[%s251 + $0x100] sm:$0xff]
        %v2685 = vld [vmem:[%s251 + $0x108] sm:$0xff]
        %v2686 = vld [vmem:[%s251 + $0x110] sm:$0xff]
        %v2687 = vld [vmem:[%s251 + $0x118] sm:$0xff]
        %v2688 = vld [vmem:[%s251 + $0x120] sm:$0xff]
        %v2689 = vld [vmem:[%s251 + $0x128] sm:$0xff]
        %v2690 = vld [vmem:[%s251 + $0x130] sm:$0xff]
        %v2691 = vld [vmem:[%s251 + $0x138] sm:$0xff]
        %v2692 = vld [vmem:[%s251 + $0x140] sm:$0xff]
        %v2693 = vld [vmem:[%s251 + $0x148] sm:$0xff]
        %v2694 = vld [vmem:[%s251 + $0x150] sm:$0xff]
        %v2695 = vld [vmem:[%s251 + $0x158] sm:$0xff]
        %v2696 = vld [vmem:[%s251 + $0x160] sm:$0xff]
        %v2697 = vld [vmem:[%s251 + $0x168] sm:$0xff]
        %v2698 = vld [vmem:[%s251 + $0x170] sm:$0xff]
        %v2699 = vld [vmem:[%s251 + $0x178] sm:$0xff]
        %v2700 = vld [vmem:[%s251 + $0x180] sm:$0xff]
        %v2701 = vld [vmem:[%s251 + $0x188] sm:$0xff]
        %v2702 = vld [vmem:[%s251 + $0x190] sm:$0xff]
        %v2703 = vld [vmem:[%s251 + $0x198] sm:$0xff]
        %v2704 = vld [vmem:[%s251 + $0x1a0] sm:$0xff]
        %v2705 = vld [vmem:[%s251 + $0x1a8] sm:$0xff]
        %v2706 = vld [vmem:[%s251 + $0x1b0] sm:$0xff]
        %v2707 = vld [vmem:[%s251 + $0x1b8] sm:$0xff]
        %v2708 = vld [vmem:[%s251 + $0x1c0] sm:$0xff]
        %v2709 = vld [vmem:[%s251 + $0x1c8] sm:$0xff]
        %v2710 = vld [vmem:[%s251 + $0x1d0] sm:$0xff]
        %v2711 = vld [vmem:[%s251 + $0x1d8] sm:$0xff]
        %v2712 = vld [vmem:[%s251 + $0x1e0] sm:$0xff]
        %v2713 = vld [vmem:[%s251 + $0x1e8] sm:$0xff]
        %v2714 = vld [vmem:[%s251 + $0x1f0] sm:$0xff]
        %v2715 = vld [vmem:[%s251 + $0x1f8] sm:$0xff]
        %v2716 = vld [vmem:[%s251 + $0x200] sm:$0xff]
        %v2717 = vld [vmem:[%s251 + $0x208] sm:$0xff]
        %v2718 = vld [vmem:[%s251 + $0x210] sm:$0xff]
        %v2719 = vld [vmem:[%s251 + $0x218] sm:$0xff]
        %v2720 = vld [vmem:[%s251 + $0x220] sm:$0xff]
        %v2721 = vld [vmem:[%s251 + $0x228] sm:$0xff]
        %v2722 = vld [vmem:[%s251 + $0x230] sm:$0xff]
        %v2723 = vld [vmem:[%s251 + $0x238] sm:$0xff]
        %v2724 = vld [vmem:[%s251 + $0x240] sm:$0xff]
        %v2725 = vld [vmem:[%s251 + $0x248] sm:$0xff]
        %v2726 = vld [vmem:[%s251 + $0x250] sm:$0xff]
        %v2727 = vld [vmem:[%s251 + $0x258] sm:$0xff]
        %v2728 = vld [vmem:[%s251 + $0x260] sm:$0xff]
        %v2729 = vld [vmem:[%s251 + $0x268] sm:$0xff]
        %v2730 = vld [vmem:[%s251 + $0x270] sm:$0xff]
        %v2731 = vld [vmem:[%s251 + $0x278] sm:$0xff]
        %v2732 = vld [vmem:[%s251 + $0x280] sm:$0xff]
        %v2733 = vld [vmem:[%s251 + $0x288] sm:$0xff]
        %v2734 = vld [vmem:[%s251 + $0x290] sm:$0xff]
        %v2735 = vld [vmem:[%s251 + $0x298] sm:$0xff]
        %v2736 = vld [vmem:[%s251 + $0x2a0] sm:$0xff]
        %v2737 = vld [vmem:[%s251 + $0x2a8] sm:$0xff]
        %v2738 = vld [vmem:[%s251 + $0x2b0] sm:$0xff]
        %v2739 = vld [vmem:[%s251 + $0x2b8] sm:$0xff]
        %v2740 = vld [vmem:[%s251 + $0x2c0] sm:$0xff]
        %v2741 = vld [vmem:[%s251 + $0x2c8] sm:$0xff]
        %v2742 = vld [vmem:[%s251 + $0x2d0] sm:$0xff]
        %v2743 = vld [vmem:[%s251 + $0x2d8] sm:$0xff]
        %v2744 = vld [vmem:[%s251 + $0x2e0] sm:$0xff]
        %v2745 = vld [vmem:[%s251 + $0x2e8] sm:$0xff]
        %v2746 = vld [vmem:[%s251 + $0x2f0] sm:$0xff]
        %v2747 = vld [vmem:[%s251 + $0x2f8] sm:$0xff]
        %v2748 = vld [vmem:[%s251 + $0x300] sm:$0xff]
        %v2749 = vld [vmem:[%s251 + $0x308] sm:$0xff]
        %v2750 = vld [vmem:[%s251 + $0x310] sm:$0xff]
        %v2751 = vld [vmem:[%s251 + $0x318] sm:$0xff]
        %v2752 = vld [vmem:[%s251 + $0x320] sm:$0xff]
        %v2753 = vld [vmem:[%s251 + $0x328] sm:$0xff]
        %v2754 = vld [vmem:[%s251 + $0x330] sm:$0xff]
        %v2755 = vld [vmem:[%s251 + $0x338] sm:$0xff]
        %v2756 = vld [vmem:[%s251 + $0x340] sm:$0xff]
        %v2757 = vld [vmem:[%s251 + $0x348] sm:$0xff]
        %v2758 = vld [vmem:[%s251 + $0x350] sm:$0xff]
        %v2759 = vld [vmem:[%s251 + $0x358] sm:$0xff]
        %v2760 = vld [vmem:[%s251 + $0x360] sm:$0xff]
        %v2761 = vld [vmem:[%s251 + $0x368] sm:$0xff]
        %v2762 = vld [vmem:[%s251 + $0x370] sm:$0xff]
        %v2763 = vld [vmem:[%s251 + $0x378] sm:$0xff]
        %v2764 = vld [vmem:[%s251 + $0x380] sm:$0xff]
        %v2765 = vld [vmem:[%s251 + $0x388] sm:$0xff]
        %v2766 = vld [vmem:[%s251 + $0x390] sm:$0xff]
        %v2767 = vld [vmem:[%s251 + $0x398] sm:$0xff]
        %v2768 = vld [vmem:[%s251 + $0x3a0] sm:$0xff]
        %v2769 = vld [vmem:[%s251 + $0x3a8] sm:$0xff]
        %v2770 = vld [vmem:[%s251 + $0x3b0] sm:$0xff]
        %v2771 = vld [vmem:[%s251 + $0x3b8] sm:$0xff]
        %v2772 = vld [vmem:[%s251 + $0x3c0] sm:$0xff]
        %v2773 = vld [vmem:[%s251 + $0x3c8] sm:$0xff]
        %v2774 = vld [vmem:[%s251 + $0x3d0] sm:$0xff]
        %v2775 = vld [vmem:[%s251 + $0x3d8] sm:$0xff]
        %v2776 = vld [vmem:[%s251 + $0x3e0] sm:$0xff]
        %v2777 = vld [vmem:[%s251 + $0x3e8] sm:$0xff]
        %v2778 = vld [vmem:[%s251 + $0x3f0] sm:$0xff]
        %v2779 = vld [vmem:[%s251 + $0x3f8] sm:$0xff]
        %v2780 = vstv %s2522
        %v2781 = vmul.f32 %v2524, %v2780
        %v2782 = vmul.f32 %v2525, %v2780
        %v2783 = vmul.f32 %v2526, %v2780
        %v2784 = vmul.f32 %v2527, %v2780
        %v2785 = vmul.f32 %v2528, %v2780
        %v2786 = vmul.f32 %v2529, %v2780
        %v2787 = vmul.f32 %v2530, %v2780
        %v2788 = vmul.f32 %v2531, %v2780
        %v2789 = vmul.f32 %v2532, %v2780
        %v2790 = vmul.f32 %v2533, %v2780
        %v2791 = vmul.f32 %v2534, %v2780
        %v2792 = vmul.f32 %v2535, %v2780
        %v2793 = vmul.f32 %v2536, %v2780
        %v2794 = vmul.f32 %v2537, %v2780
        %v2795 = vmul.f32 %v2538, %v2780
        %v2796 = vmul.f32 %v2539, %v2780
        %v2797 = vmul.f32 %v2540, %v2780
        %v2798 = vmul.f32 %v2541, %v2780
        %v2799 = vmul.f32 %v2542, %v2780
        %v2800 = vmul.f32 %v2543, %v2780
        %v2801 = vmul.f32 %v2544, %v2780
        %v2802 = vmul.f32 %v2545, %v2780
        %v2803 = vmul.f32 %v2546, %v2780
        %v2804 = vmul.f32 %v2547, %v2780
        %v2805 = vmul.f32 %v2548, %v2780
        %v2806 = vmul.f32 %v2549, %v2780
        %v2807 = vmul.f32 %v2550, %v2780
        %v2808 = vmul.f32 %v2551, %v2780
        %v2809 = vmul.f32 %v2552, %v2780
        %v2810 = vmul.f32 %v2553, %v2780
        %v2811 = vmul.f32 %v2554, %v2780
        %v2812 = vmul.f32 %v2555, %v2780
        %v2813 = vmul.f32 %v2556, %v2780
        %v2814 = vmul.f32 %v2557, %v2780
        %v2815 = vmul.f32 %v2558, %v2780
        %v2816 = vmul.f32 %v2559, %v2780
        %v2817 = vmul.f32 %v2560, %v2780
        %v2818 = vmul.f32 %v2561, %v2780
        %v2819 = vmul.f32 %v2562, %v2780
        %v2820 = vmul.f32 %v2563, %v2780
        %v2821 = vmul.f32 %v2564, %v2780
        %v2822 = vmul.f32 %v2565, %v2780
        %v2823 = vmul.f32 %v2566, %v2780
        %v2824 = vmul.f32 %v2567, %v2780
        %v2825 = vmul.f32 %v2568, %v2780
        %v2826 = vmul.f32 %v2569, %v2780
        %v2827 = vmul.f32 %v2570, %v2780
        %v2828 = vmul.f32 %v2571, %v2780
        %v2829 = vmul.f32 %v2572, %v2780
        %v2830 = vmul.f32 %v2573, %v2780
        %v2831 = vmul.f32 %v2574, %v2780
        %v2832 = vmul.f32 %v2575, %v2780
        %v2833 = vmul.f32 %v2576, %v2780
        %v2834 = vmul.f32 %v2577, %v2780
        %v2835 = vmul.f32 %v2578, %v2780
        %v2836 = vmul.f32 %v2579, %v2780
        %v2837 = vmul.f32 %v2580, %v2780
        %v2838 = vmul.f32 %v2581, %v2780
        %v2839 = vmul.f32 %v2582, %v2780
        %v2840 = vmul.f32 %v2583, %v2780
        %v2841 = vmul.f32 %v2584, %v2780
        %v2842 = vmul.f32 %v2585, %v2780
        %v2843 = vmul.f32 %v2586, %v2780
        %v2844 = vmul.f32 %v2587, %v2780
        %v2845 = vmul.f32 %v2588, %v2780
        %v2846 = vmul.f32 %v2589, %v2780
        %v2847 = vmul.f32 %v2590, %v2780
        %v2848 = vmul.f32 %v2591, %v2780
        %v2849 = vmul.f32 %v2592, %v2780
        %v2850 = vmul.f32 %v2593, %v2780
        %v2851 = vmul.f32 %v2594, %v2780
        %v2852 = vmul.f32 %v2595, %v2780
        %v2853 = vmul.f32 %v2596, %v2780
        %v2854 = vmul.f32 %v2597, %v2780
        %v2855 = vmul.f32 %v2598, %v2780
        %v2856 = vmul.f32 %v2599, %v2780
        %v2857 = vmul.f32 %v2600, %v2780
        %v2858 = vmul.f32 %v2601, %v2780
        %v2859 = vmul.f32 %v2602, %v2780
        %v2860 = vmul.f32 %v2603, %v2780
        %v2861 = vmul.f32 %v2604, %v2780
        %v2862 = vmul.f32 %v2605, %v2780
        %v2863 = vmul.f32 %v2606, %v2780
        %v2864 = vmul.f32 %v2607, %v2780
        %v2865 = vmul.f32 %v2608, %v2780
        %v2866 = vmul.f32 %v2609, %v2780
        %v2867 = vmul.f32 %v2610, %v2780
        %v2868 = vmul.f32 %v2611, %v2780
        %v2869 = vmul.f32 %v2612, %v2780
        %v2870 = vmul.f32 %v2613, %v2780
        %v2871 = vmul.f32 %v2614, %v2780
        %v2872 = vmul.f32 %v2615, %v2780
        %v2873 = vmul.f32 %v2616, %v2780
        %v2874 = vmul.f32 %v2617, %v2780
        %v2875 = vmul.f32 %v2618, %v2780
        %v2876 = vmul.f32 %v2619, %v2780
        %v2877 = vmul.f32 %v2620, %v2780
        %v2878 = vmul.f32 %v2621, %v2780
        %v2879 = vmul.f32 %v2622, %v2780
        %v2880 = vmul.f32 %v2623, %v2780
        %v2881 = vmul.f32 %v2624, %v2780
        %v2882 = vmul.f32 %v2625, %v2780
        %v2883 = vmul.f32 %v2626, %v2780
        %v2884 = vmul.f32 %v2627, %v2780
        %v2885 = vmul.f32 %v2628, %v2780
        %v2886 = vmul.f32 %v2629, %v2780
        %v2887 = vmul.f32 %v2630, %v2780
        %v2888 = vmul.f32 %v2631, %v2780
        %v2889 = vmul.f32 %v2632, %v2780
        %v2890 = vmul.f32 %v2633, %v2780
        %v2891 = vmul.f32 %v2634, %v2780
        %v2892 = vmul.f32 %v2635, %v2780
        %v2893 = vmul.f32 %v2636, %v2780
        %v2894 = vmul.f32 %v2637, %v2780
        %v2895 = vmul.f32 %v2638, %v2780
        %v2896 = vmul.f32 %v2639, %v2780
        %v2897 = vmul.f32 %v2640, %v2780
        %v2898 = vmul.f32 %v2641, %v2780
        %v2899 = vmul.f32 %v2642, %v2780
        %v2900 = vmul.f32 %v2643, %v2780
        %v2901 = vmul.f32 %v2644, %v2780
        %v2902 = vmul.f32 %v2645, %v2780
        %v2903 = vmul.f32 %v2646, %v2780
        %v2904 = vmul.f32 %v2647, %v2780
        %v2905 = vmul.f32 %v2648, %v2780
        %v2906 = vmul.f32 %v2649, %v2780
        %v2907 = vmul.f32 %v2650, %v2780
        %v2908 = vmul.f32 %v2651, %v2780
        %v2909 = vstv %s2523
        %v2910 = vadd.f32 %v2781, %v2909
        %v2911 = vadd.f32 %v2782, %v2909
        %v2912 = vadd.f32 %v2783, %v2909
        %v2913 = vadd.f32 %v2784, %v2909
        %v2914 = vadd.f32 %v2785, %v2909
        %v2915 = vadd.f32 %v2786, %v2909
        %v2916 = vadd.f32 %v2787, %v2909
        %v2917 = vadd.f32 %v2788, %v2909
        %v2918 = vadd.f32 %v2789, %v2909
        %v2919 = vadd.f32 %v2790, %v2909
        %v2920 = vadd.f32 %v2791, %v2909
        %v2921 = vadd.f32 %v2792, %v2909
        %v2922 = vadd.f32 %v2793, %v2909
        %v2923 = vadd.f32 %v2794, %v2909
        %v2924 = vadd.f32 %v2795, %v2909
        %v2925 = vadd.f32 %v2796, %v2909
        %v2926 = vadd.f32 %v2797, %v2909
        %v2927 = vadd.f32 %v2798, %v2909
        %v2928 = vadd.f32 %v2799, %v2909
        %v2929 = vadd.f32 %v2800, %v2909
        %v2930 = vadd.f32 %v2801, %v2909
        %v2931 = vadd.f32 %v2802, %v2909
        %v2932 = vadd.f32 %v2803, %v2909
        %v2933 = vadd.f32 %v2804, %v2909
        %v2934 = vadd.f32 %v2805, %v2909
        %v2935 = vadd.f32 %v2806, %v2909
        %v2936 = vadd.f32 %v2807, %v2909
        %v2937 = vadd.f32 %v2808, %v2909
        %v2938 = vadd.f32 %v2809, %v2909
        %v2939 = vadd.f32 %v2810, %v2909
        %v2940 = vadd.f32 %v2811, %v2909
        %v2941 = vadd.f32 %v2812, %v2909
        %v2942 = vadd.f32 %v2813, %v2909
        %v2943 = vadd.f32 %v2814, %v2909
        %v2944 = vadd.f32 %v2815, %v2909
        %v2945 = vadd.f32 %v2816, %v2909
        %v2946 = vadd.f32 %v2817, %v2909
        %v2947 = vadd.f32 %v2818, %v2909
        %v2948 = vadd.f32 %v2819, %v2909
        %v2949 = vadd.f32 %v2820, %v2909
        %v2950 = vadd.f32 %v2821, %v2909
        %v2951 = vadd.f32 %v2822, %v2909
        %v2952 = vadd.f32 %v2823, %v2909
        %v2953 = vadd.f32 %v2824, %v2909
        %v2954 = vadd.f32 %v2825, %v2909
        %v2955 = vadd.f32 %v2826, %v2909
        %v2956 = vadd.f32 %v2827, %v2909
        %v2957 = vadd.f32 %v2828, %v2909
        %v2958 = vadd.f32 %v2829, %v2909
        %v2959 = vadd.f32 %v2830, %v2909
        %v2960 = vadd.f32 %v2831, %v2909
        %v2961 = vadd.f32 %v2832, %v2909
        %v2962 = vadd.f32 %v2833, %v2909
        %v2963 = vadd.f32 %v2834, %v2909
        %v2964 = vadd.f32 %v2835, %v2909
        %v2965 = vadd.f32 %v2836, %v2909
        %v2966 = vadd.f32 %v2837, %v2909
        %v2967 = vadd.f32 %v2838, %v2909
        %v2968 = vadd.f32 %v2839, %v2909
        %v2969 = vadd.f32 %v2840, %v2909
        %v2970 = vadd.f32 %v2841, %v2909
        %v2971 = vadd.f32 %v2842, %v2909
        %v2972 = vadd.f32 %v2843, %v2909
        %v2973 = vadd.f32 %v2844, %v2909
        %v2974 = vadd.f32 %v2845, %v2909
        %v2975 = vadd.f32 %v2846, %v2909
        %v2976 = vadd.f32 %v2847, %v2909
        %v2977 = vadd.f32 %v2848, %v2909
        %v2978 = vadd.f32 %v2849, %v2909
        %v2979 = vadd.f32 %v2850, %v2909
        %v2980 = vadd.f32 %v2851, %v2909
        %v2981 = vadd.f32 %v2852, %v2909
        %v2982 = vadd.f32 %v2853, %v2909
        %v2983 = vadd.f32 %v2854, %v2909
        %v2984 = vadd.f32 %v2855, %v2909
        %v2985 = vadd.f32 %v2856, %v2909
        %v2986 = vadd.f32 %v2857, %v2909
        %v2987 = vadd.f32 %v2858, %v2909
        %v2988 = vadd.f32 %v2859, %v2909
        %v2989 = vadd.f32 %v2860, %v2909
        %v2990 = vadd.f32 %v2861, %v2909
        %v2991 = vadd.f32 %v2862, %v2909
        %v2992 = vadd.f32 %v2863, %v2909
        %v2993 = vadd.f32 %v2864, %v2909
        %v2994 = vadd.f32 %v2865, %v2909
        %v2995 = vadd.f32 %v2866, %v2909
        %v2996 = vadd.f32 %v2867, %v2909
        %v2997 = vadd.f32 %v2868, %v2909
        %v2998 = vadd.f32 %v2869, %v2909
        %v2999 = vadd.f32 %v2870, %v2909
        %v3000 = vadd.f32 %v2871, %v2909
        %v3001 = vadd.f32 %v2872, %v2909
        %v3002 = vadd.f32 %v2873, %v2909
        %v3003 = vadd.f32 %v2874, %v2909
        %v3004 = vadd.f32 %v2875, %v2909
        %v3005 = vadd.f32 %v2876, %v2909
        %v3006 = vadd.f32 %v2877, %v2909
        %v3007 = vadd.f32 %v2878, %v2909
        %v3008 = vadd.f32 %v2879, %v2909
        %v3009 = vadd.f32 %v2880, %v2909
        %v3010 = vadd.f32 %v2881, %v2909
        %v3011 = vadd.f32 %v2882, %v2909
        %v3012 = vadd.f32 %v2883, %v2909
        %v3013 = vadd.f32 %v2884, %v2909
        %v3014 = vadd.f32 %v2885, %v2909
        %v3015 = vadd.f32 %v2886, %v2909
        %v3016 = vadd.f32 %v2887, %v2909
        %v3017 = vadd.f32 %v2888, %v2909
        %v3018 = vadd.f32 %v2889, %v2909
        %v3019 = vadd.f32 %v2890, %v2909
        %v3020 = vadd.f32 %v2891, %v2909
        %v3021 = vadd.f32 %v2892, %v2909
        %v3022 = vadd.f32 %v2893, %v2909
        %v3023 = vadd.f32 %v2894, %v2909
        %v3024 = vadd.f32 %v2895, %v2909
        %v3025 = vadd.f32 %v2896, %v2909
        %v3026 = vadd.f32 %v2897, %v2909
        %v3027 = vadd.f32 %v2898, %v2909
        %v3028 = vadd.f32 %v2899, %v2909
        %v3029 = vadd.f32 %v2900, %v2909
        %v3030 = vadd.f32 %v2901, %v2909
        %v3031 = vadd.f32 %v2902, %v2909
        %v3032 = vadd.f32 %v2903, %v2909
        %v3033 = vadd.f32 %v2904, %v2909
        %v3034 = vadd.f32 %v2905, %v2909
        %v3035 = vadd.f32 %v2906, %v2909
        %v3036 = vadd.f32 %v2907, %v2909
        %v3037 = vadd.f32 %v2908, %v2909
        %v3038 = vmax.f32 %v2910, 0.005
        %v3039 = vmax.f32 %v2911, 0.005
        %v3040 = vmax.f32 %v2912, 0.005
        %v3041 = vmax.f32 %v2913, 0.005
        %v3042 = vmax.f32 %v2914, 0.005
        %v3043 = vmax.f32 %v2915, 0.005
        %v3044 = vmax.f32 %v2916, 0.005
        %v3045 = vmax.f32 %v2917, 0.005
        %v3046 = vmax.f32 %v2918, 0.005
        %v3047 = vmax.f32 %v2919, 0.005
        %v3048 = vmax.f32 %v2920, 0.005
        %v3049 = vmax.f32 %v2921, 0.005
        %v3050 = vmax.f32 %v2922, 0.005
        %v3051 = vmax.f32 %v2923, 0.005
        %v3052 = vmax.f32 %v2924, 0.005
        %v3053 = vmax.f32 %v2925, 0.005
        %v3054 = vmax.f32 %v2926, 0.005
        %v3055 = vmax.f32 %v2927, 0.005
        %v3056 = vmax.f32 %v2928, 0.005
        %v3057 = vmax.f32 %v2929, 0.005
        %v3058 = vmax.f32 %v2930, 0.005
        %v3059 = vmax.f32 %v2931, 0.005
        %v3060 = vmax.f32 %v2932, 0.005
        %v3061 = vmax.f32 %v2933, 0.005
        %v3062 = vmax.f32 %v2934, 0.005
        %v3063 = vmax.f32 %v2935, 0.005
        %v3064 = vmax.f32 %v2936, 0.005
        %v3065 = vmax.f32 %v2937, 0.005
        %v3066 = vmax.f32 %v2938, 0.005
        %v3067 = vmax.f32 %v2939, 0.005
        %v3068 = vmax.f32 %v2940, 0.005
        %v3069 = vmax.f32 %v2941, 0.005
        %v3070 = vmax.f32 %v2942, 0.005
        %v3071 = vmax.f32 %v2943, 0.005
        %v3072 = vmax.f32 %v2944, 0.005
        %v3073 = vmax.f32 %v2945, 0.005
        %v3074 = vmax.f32 %v2946, 0.005
        %v3075 = vmax.f32 %v2947, 0.005
        %v3076 = vmax.f32 %v2948, 0.005
        %v3077 = vmax.f32 %v2949, 0.005
        %v3078 = vmax.f32 %v2950, 0.005
        %v3079 = vmax.f32 %v2951, 0.005
        %v3080 = vmax.f32 %v2952, 0.005
        %v3081 = vmax.f32 %v2953, 0.005
        %v3082 = vmax.f32 %v2954, 0.005
        %v3083 = vmax.f32 %v2955, 0.005
        %v3084 = vmax.f32 %v2956, 0.005
        %v3085 = vmax.f32 %v2957, 0.005
        %v3086 = vmax.f32 %v2958, 0.005
        %v3087 = vmax.f32 %v2959, 0.005
        %v3088 = vmax.f32 %v2960, 0.005
        %v3089 = vmax.f32 %v2961, 0.005
        %v3090 = vmax.f32 %v2962, 0.005
        %v3091 = vmax.f32 %v2963, 0.005
        %v3092 = vmax.f32 %v2964, 0.005
        %v3093 = vmax.f32 %v2965, 0.005
        %v3094 = vmax.f32 %v2966, 0.005
        %v3095 = vmax.f32 %v2967, 0.005
        %v3096 = vmax.f32 %v2968, 0.005
        %v3097 = vmax.f32 %v2969, 0.005
        %v3098 = vmax.f32 %v2970, 0.005
        %v3099 = vmax.f32 %v2971, 0.005
        %v3100 = vmax.f32 %v2972, 0.005
        %v3101 = vmax.f32 %v2973, 0.005
        %v3102 = vmax.f32 %v2974, 0.005
        %v3103 = vmax.f32 %v2975, 0.005
        %v3104 = vmax.f32 %v2976, 0.005
        %v3105 = vmax.f32 %v2977, 0.005
        %v3106 = vmax.f32 %v2978, 0.005
        %v3107 = vmax.f32 %v2979, 0.005
        %v3108 = vmax.f32 %v2980, 0.005
        %v3109 = vmax.f32 %v2981, 0.005
        %v3110 = vmax.f32 %v2982, 0.005
        %v3111 = vmax.f32 %v2983, 0.005
        %v3112 = vmax.f32 %v2984, 0.005
        %v3113 = vmax.f32 %v2985, 0.005
        %v3114 = vmax.f32 %v2986, 0.005
        %v3115 = vmax.f32 %v2987, 0.005
        %v3116 = vmax.f32 %v2988, 0.005
        %v3117 = vmax.f32 %v2989, 0.005
        %v3118 = vmax.f32 %v2990, 0.005
        %v3119 = vmax.f32 %v2991, 0.005
        %v3120 = vmax.f32 %v2992, 0.005
        %v3121 = vmax.f32 %v2993, 0.005
        %v3122 = vmax.f32 %v2994, 0.005
        %v3123 = vmax.f32 %v2995, 0.005
        %v3124 = vmax.f32 %v2996, 0.005
        %v3125 = vmax.f32 %v2997, 0.005
        %v3126 = vmax.f32 %v2998, 0.005
        %v3127 = vmax.f32 %v2999, 0.005
        %v3128 = vmax.f32 %v3000, 0.005
        %v3129 = vmax.f32 %v3001, 0.005
        %v3130 = vmax.f32 %v3002, 0.005
        %v3131 = vmax.f32 %v3003, 0.005
        %v3132 = vmax.f32 %v3004, 0.005
        %v3133 = vmax.f32 %v3005, 0.005
        %v3134 = vmax.f32 %v3006, 0.005
        %v3135 = vmax.f32 %v3007, 0.005
        %v3136 = vmax.f32 %v3008, 0.005
        %v3137 = vmax.f32 %v3009, 0.005
        %v3138 = vmax.f32 %v3010, 0.005
        %v3139 = vmax.f32 %v3011, 0.005
        %v3140 = vmax.f32 %v3012, 0.005
        %v3141 = vmax.f32 %v3013, 0.005
        %v3142 = vmax.f32 %v3014, 0.005
        %v3143 = vmax.f32 %v3015, 0.005
        %v3144 = vmax.f32 %v3016, 0.005
        %v3145 = vmax.f32 %v3017, 0.005
        %v3146 = vmax.f32 %v3018, 0.005
        %v3147 = vmax.f32 %v3019, 0.005
        %v3148 = vmax.f32 %v3020, 0.005
        %v3149 = vmax.f32 %v3021, 0.005
        %v3150 = vmax.f32 %v3022, 0.005
        %v3151 = vmax.f32 %v3023, 0.005
        %v3152 = vmax.f32 %v3024, 0.005
        %v3153 = vmax.f32 %v3025, 0.005
        %v3154 = vmax.f32 %v3026, 0.005
        %v3155 = vmax.f32 %v3027, 0.005
        %v3156 = vmax.f32 %v3028, 0.005
        %v3157 = vmax.f32 %v3029, 0.005
        %v3158 = vmax.f32 %v3030, 0.005
        %v3159 = vmax.f32 %v3031, 0.005
        %v3160 = vmax.f32 %v3032, 0.005
        %v3161 = vmax.f32 %v3033, 0.005
        %v3162 = vmax.f32 %v3034, 0.005
        %v3163 = vmax.f32 %v3035, 0.005
        %v3164 = vmax.f32 %v3036, 0.005
        %v3165 = vmax.f32 %v3037, 0.005
        %v3166 = vmin.f32 %v3038, 0.6
        %v3167 = vmin.f32 %v3039, 0.6
        %v3168 = vmin.f32 %v3040, 0.6
        %v3169 = vmin.f32 %v3041, 0.6
        %v3170 = vmin.f32 %v3042, 0.6
        %v3171 = vmin.f32 %v3043, 0.6
        %v3172 = vmin.f32 %v3044, 0.6
        %v3173 = vmin.f32 %v3045, 0.6
        %v3174 = vmin.f32 %v3046, 0.6
        %v3175 = vmin.f32 %v3047, 0.6
        %v3176 = vmin.f32 %v3048, 0.6
        %v3177 = vmin.f32 %v3049, 0.6
        %v3178 = vmin.f32 %v3050, 0.6
        %v3179 = vmin.f32 %v3051, 0.6
        %v3180 = vmin.f32 %v3052, 0.6
        %v3181 = vmin.f32 %v3053, 0.6
        %v3182 = vmin.f32 %v3054, 0.6
        %v3183 = vmin.f32 %v3055, 0.6
        %v3184 = vmin.f32 %v3056, 0.6
        %v3185 = vmin.f32 %v3057, 0.6
        %v3186 = vmin.f32 %v3058, 0.6
        %v3187 = vmin.f32 %v3059, 0.6
        %v3188 = vmin.f32 %v3060, 0.6
        %v3189 = vmin.f32 %v3061, 0.6
        %v3190 = vmin.f32 %v3062, 0.6
        %v3191 = vmin.f32 %v3063, 0.6
        %v3192 = vmin.f32 %v3064, 0.6
        %v3193 = vmin.f32 %v3065, 0.6
        %v3194 = vmin.f32 %v3066, 0.6
        %v3195 = vmin.f32 %v3067, 0.6
        %v3196 = vmin.f32 %v3068, 0.6
        %v3197 = vmin.f32 %v3069, 0.6
        %v3198 = vmin.f32 %v3070, 0.6
        %v3199 = vmin.f32 %v3071, 0.6
        %v3200 = vmin.f32 %v3072, 0.6
        %v3201 = vmin.f32 %v3073, 0.6
        %v3202 = vmin.f32 %v3074, 0.6
        %v3203 = vmin.f32 %v3075, 0.6
        %v3204 = vmin.f32 %v3076, 0.6
        %v3205 = vmin.f32 %v3077, 0.6
        %v3206 = vmin.f32 %v3078, 0.6
        %v3207 = vmin.f32 %v3079, 0.6
        %v3208 = vmin.f32 %v3080, 0.6
        %v3209 = vmin.f32 %v3081, 0.6
        %v3210 = vmin.f32 %v3082, 0.6
        %v3211 = vmin.f32 %v3083, 0.6
        %v3212 = vmin.f32 %v3084, 0.6
        %v3213 = vmin.f32 %v3085, 0.6
        %v3214 = vmin.f32 %v3086, 0.6
        %v3215 = vmin.f32 %v3087, 0.6
        %v3216 = vmin.f32 %v3088, 0.6
        %v3217 = vmin.f32 %v3089, 0.6
        %v3218 = vmin.f32 %v3090, 0.6
        %v3219 = vmin.f32 %v3091, 0.6
        %v3220 = vmin.f32 %v3092, 0.6
        %v3221 = vmin.f32 %v3093, 0.6
        %v3222 = vmin.f32 %v3094, 0.6
        %v3223 = vmin.f32 %v3095, 0.6
        %v3224 = vmin.f32 %v3096, 0.6
        %v3225 = vmin.f32 %v3097, 0.6
        %v3226 = vmin.f32 %v3098, 0.6
        %v3227 = vmin.f32 %v3099, 0.6
        %v3228 = vmin.f32 %v3100, 0.6
        %v3229 = vmin.f32 %v3101, 0.6
        %v3230 = vmin.f32 %v3102, 0.6
        %v3231 = vmin.f32 %v3103, 0.6
        %v3232 = vmin.f32 %v3104, 0.6
        %v3233 = vmin.f32 %v3105, 0.6
        %v3234 = vmin.f32 %v3106, 0.6
        %v3235 = vmin.f32 %v3107, 0.6
        %v3236 = vmin.f32 %v3108, 0.6
        %v3237 = vmin.f32 %v3109, 0.6
        %v3238 = vmin.f32 %v3110, 0.6
        %v3239 = vmin.f32 %v3111, 0.6
        %v3240 = vmin.f32 %v3112, 0.6
        %v3241 = vmin.f32 %v3113, 0.6
        %v3242 = vmin.f32 %v3114, 0.6
        %v3243 = vmin.f32 %v3115, 0.6
        %v3244 = vmin.f32 %v3116, 0.6
        %v3245 = vmin.f32 %v3117, 0.6
        %v3246 = vmin.f32 %v3118, 0.6
        %v3247 = vmin.f32 %v3119, 0.6
        %v3248 = vmin.f32 %v3120, 0.6
        %v3249 = vmin.f32 %v3121, 0.6
        %v3250 = vmin.f32 %v3122, 0.6
        %v3251 = vmin.f32 %v3123, 0.6
        %v3252 = vmin.f32 %v3124, 0.6
        %v3253 = vmin.f32 %v3125, 0.6
        %v3254 = vmin.f32 %v3126, 0.6
        %v3255 = vmin.f32 %v3127, 0.6
        %v3256 = vmin.f32 %v3128, 0.6
        %v3257 = vmin.f32 %v3129, 0.6
        %v3258 = vmin.f32 %v3130, 0.6
        %v3259 = vmin.f32 %v3131, 0.6
        %v3260 = vmin.f32 %v3132, 0.6
        %v3261 = vmin.f32 %v3133, 0.6
        %v3262 = vmin.f32 %v3134, 0.6
        %v3263 = vmin.f32 %v3135, 0.6
        %v3264 = vmin.f32 %v3136, 0.6
        %v3265 = vmin.f32 %v3137, 0.6
        %v3266 = vmin.f32 %v3138, 0.6
        %v3267 = vmin.f32 %v3139, 0.6
        %v3268 = vmin.f32 %v3140, 0.6
        %v3269 = vmin.f32 %v3141, 0.6
        %v3270 = vmin.f32 %v3142, 0.6
        %v3271 = vmin.f32 %v3143, 0.6
        %v3272 = vmin.f32 %v3144, 0.6
        %v3273 = vmin.f32 %v3145, 0.6
        %v3274 = vmin.f32 %v3146, 0.6
        %v3275 = vmin.f32 %v3147, 0.6
        %v3276 = vmin.f32 %v3148, 0.6
        %v3277 = vmin.f32 %v3149, 0.6
        %v3278 = vmin.f32 %v3150, 0.6
        %v3279 = vmin.f32 %v3151, 0.6
        %v3280 = vmin.f32 %v3152, 0.6
        %v3281 = vmin.f32 %v3153, 0.6
        %v3282 = vmin.f32 %v3154, 0.6
        %v3283 = vmin.f32 %v3155, 0.6
        %v3284 = vmin.f32 %v3156, 0.6
        %v3285 = vmin.f32 %v3157, 0.6
        %v3286 = vmin.f32 %v3158, 0.6
        %v3287 = vmin.f32 %v3159, 0.6
        %v3288 = vmin.f32 %v3160, 0.6
        %v3289 = vmin.f32 %v3161, 0.6
        %v3290 = vmin.f32 %v3162, 0.6
        %v3291 = vmin.f32 %v3163, 0.6
        %v3292 = vmin.f32 %v3164, 0.6
        %v3293 = vmin.f32 %v3165, 0.6
        %v3294 = vmul.f32 %v3166, %v2780
        %v3295 = vmul.f32 %v3167, %v2780
        %v3296 = vmul.f32 %v3168, %v2780
        %v3297 = vmul.f32 %v3169, %v2780
        %v3298 = vmul.f32 %v3170, %v2780
        %v3299 = vmul.f32 %v3171, %v2780
        %v3300 = vmul.f32 %v3172, %v2780
        %v3301 = vmul.f32 %v3173, %v2780
        %v3302 = vmul.f32 %v3174, %v2780
        %v3303 = vmul.f32 %v3175, %v2780
        %v3304 = vmul.f32 %v3176, %v2780
        %v3305 = vmul.f32 %v3177, %v2780
        %v3306 = vmul.f32 %v3178, %v2780
        %v3307 = vmul.f32 %v3179, %v2780
        %v3308 = vmul.f32 %v3180, %v2780
        %v3309 = vmul.f32 %v3181, %v2780
        %v3310 = vmul.f32 %v3182, %v2780
        %v3311 = vmul.f32 %v3183, %v2780
        %v3312 = vmul.f32 %v3184, %v2780
        %v3313 = vmul.f32 %v3185, %v2780
        %v3314 = vmul.f32 %v3186, %v2780
        %v3315 = vmul.f32 %v3187, %v2780
        %v3316 = vmul.f32 %v3188, %v2780
        %v3317 = vmul.f32 %v3189, %v2780
        %v3318 = vmul.f32 %v3190, %v2780
        %v3319 = vmul.f32 %v3191, %v2780
        %v3320 = vmul.f32 %v3192, %v2780
        %v3321 = vmul.f32 %v3193, %v2780
        %v3322 = vmul.f32 %v3194, %v2780
        %v3323 = vmul.f32 %v3195, %v2780
        %v3324 = vmul.f32 %v3196, %v2780
        %v3325 = vmul.f32 %v3197, %v2780
        %v3326 = vmul.f32 %v3198, %v2780
        %v3327 = vmul.f32 %v3199, %v2780
        %v3328 = vmul.f32 %v3200, %v2780
        %v3329 = vmul.f32 %v3201, %v2780
        %v3330 = vmul.f32 %v3202, %v2780
        %v3331 = vmul.f32 %v3203, %v2780
        %v3332 = vmul.f32 %v3204, %v2780
        %v3333 = vmul.f32 %v3205, %v2780
        %v3334 = vmul.f32 %v3206, %v2780
        %v3335 = vmul.f32 %v3207, %v2780
        %v3336 = vmul.f32 %v3208, %v2780
        %v3337 = vmul.f32 %v3209, %v2780
        %v3338 = vmul.f32 %v3210, %v2780
        %v3339 = vmul.f32 %v3211, %v2780
        %v3340 = vmul.f32 %v3212, %v2780
        %v3341 = vmul.f32 %v3213, %v2780
        %v3342 = vmul.f32 %v3214, %v2780
        %v3343 = vmul.f32 %v3215, %v2780
        %v3344 = vmul.f32 %v3216, %v2780
        %v3345 = vmul.f32 %v3217, %v2780
        %v3346 = vmul.f32 %v3218, %v2780
        %v3347 = vmul.f32 %v3219, %v2780
        %v3348 = vmul.f32 %v3220, %v2780
        %v3349 = vmul.f32 %v3221, %v2780
        %v3350 = vmul.f32 %v3222, %v2780
        %v3351 = vmul.f32 %v3223, %v2780
        %v3352 = vmul.f32 %v3224, %v2780
        %v3353 = vmul.f32 %v3225, %v2780
        %v3354 = vmul.f32 %v3226, %v2780
        %v3355 = vmul.f32 %v3227, %v2780
        %v3356 = vmul.f32 %v3228, %v2780
        %v3357 = vmul.f32 %v3229, %v2780
        %v3358 = vmul.f32 %v3230, %v2780
        %v3359 = vmul.f32 %v3231, %v2780
        %v3360 = vmul.f32 %v3232, %v2780
        %v3361 = vmul.f32 %v3233, %v2780
        %v3362 = vmul.f32 %v3234, %v2780
        %v3363 = vmul.f32 %v3235, %v2780
        %v3364 = vmul.f32 %v3236, %v2780
        %v3365 = vmul.f32 %v3237, %v2780
        %v3366 = vmul.f32 %v3238, %v2780
        %v3367 = vmul.f32 %v3239, %v2780
        %v3368 = vmul.f32 %v3240, %v2780
        %v3369 = vmul.f32 %v3241, %v2780
        %v3370 = vmul.f32 %v3242, %v2780
        %v3371 = vmul.f32 %v3243, %v2780
        %v3372 = vmul.f32 %v3244, %v2780
        %v3373 = vmul.f32 %v3245, %v2780
        %v3374 = vmul.f32 %v3246, %v2780
        %v3375 = vmul.f32 %v3247, %v2780
        %v3376 = vmul.f32 %v3248, %v2780
        %v3377 = vmul.f32 %v3249, %v2780
        %v3378 = vmul.f32 %v3250, %v2780
        %v3379 = vmul.f32 %v3251, %v2780
        %v3380 = vmul.f32 %v3252, %v2780
        %v3381 = vmul.f32 %v3253, %v2780
        %v3382 = vmul.f32 %v3254, %v2780
        %v3383 = vmul.f32 %v3255, %v2780
        %v3384 = vmul.f32 %v3256, %v2780
        %v3385 = vmul.f32 %v3257, %v2780
        %v3386 = vmul.f32 %v3258, %v2780
        %v3387 = vmul.f32 %v3259, %v2780
        %v3388 = vmul.f32 %v3260, %v2780
        %v3389 = vmul.f32 %v3261, %v2780
        %v3390 = vmul.f32 %v3262, %v2780
        %v3391 = vmul.f32 %v3263, %v2780
        %v3392 = vmul.f32 %v3264, %v2780
        %v3393 = vmul.f32 %v3265, %v2780
        %v3394 = vmul.f32 %v3266, %v2780
        %v3395 = vmul.f32 %v3267, %v2780
        %v3396 = vmul.f32 %v3268, %v2780
        %v3397 = vmul.f32 %v3269, %v2780
        %v3398 = vmul.f32 %v3270, %v2780
        %v3399 = vmul.f32 %v3271, %v2780
        %v3400 = vmul.f32 %v3272, %v2780
        %v3401 = vmul.f32 %v3273, %v2780
        %v3402 = vmul.f32 %v3274, %v2780
        %v3403 = vmul.f32 %v3275, %v2780
        %v3404 = vmul.f32 %v3276, %v2780
        %v3405 = vmul.f32 %v3277, %v2780
        %v3406 = vmul.f32 %v3278, %v2780
        %v3407 = vmul.f32 %v3279, %v2780
        %v3408 = vmul.f32 %v3280, %v2780
        %v3409 = vmul.f32 %v3281, %v2780
        %v3410 = vmul.f32 %v3282, %v2780
        %v3411 = vmul.f32 %v3283, %v2780
        %v3412 = vmul.f32 %v3284, %v2780
        %v3413 = vmul.f32 %v3285, %v2780
        %v3414 = vmul.f32 %v3286, %v2780
        %v3415 = vmul.f32 %v3287, %v2780
        %v3416 = vmul.f32 %v3288, %v2780
        %v3417 = vmul.f32 %v3289, %v2780
        %v3418 = vmul.f32 %v3290, %v2780
        %v3419 = vmul.f32 %v3291, %v2780
        %v3420 = vmul.f32 %v3292, %v2780
        %v3421 = vmul.f32 %v3293, %v2780
        %v3422 = vadd.f32 %v3294, %v2909
        %v3423 = vadd.f32 %v3295, %v2909
        %v3424 = vadd.f32 %v3296, %v2909
        %v3425 = vadd.f32 %v3297, %v2909
        %v3426 = vadd.f32 %v3298, %v2909
        %v3427 = vadd.f32 %v3299, %v2909
        %v3428 = vadd.f32 %v3300, %v2909
        %v3429 = vadd.f32 %v3301, %v2909
        %v3430 = vadd.f32 %v3302, %v2909
        %v3431 = vadd.f32 %v3303, %v2909
        %v3432 = vadd.f32 %v3304, %v2909
        %v3433 = vadd.f32 %v3305, %v2909
        %v3434 = vadd.f32 %v3306, %v2909
        %v3435 = vadd.f32 %v3307, %v2909
        %v3436 = vadd.f32 %v3308, %v2909
        %v3437 = vadd.f32 %v3309, %v2909
        %v3438 = vadd.f32 %v3310, %v2909
        %v3439 = vadd.f32 %v3311, %v2909
        %v3440 = vadd.f32 %v3312, %v2909
        %v3441 = vadd.f32 %v3313, %v2909
        %v3442 = vadd.f32 %v3314, %v2909
        %v3443 = vadd.f32 %v3315, %v2909
        %v3444 = vadd.f32 %v3316, %v2909
        %v3445 = vadd.f32 %v3317, %v2909
        %v3446 = vadd.f32 %v3318, %v2909
        %v3447 = vadd.f32 %v3319, %v2909
        %v3448 = vadd.f32 %v3320, %v2909
        %v3449 = vadd.f32 %v3321, %v2909
        %v3450 = vadd.f32 %v3322, %v2909
        %v3451 = vadd.f32 %v3323, %v2909
        %v3452 = vadd.f32 %v3324, %v2909
        %v3453 = vadd.f32 %v3325, %v2909
        %v3454 = vadd.f32 %v3326, %v2909
        %v3455 = vadd.f32 %v3327, %v2909
        %v3456 = vadd.f32 %v3328, %v2909
        %v3457 = vadd.f32 %v3329, %v2909
        %v3458 = vadd.f32 %v3330, %v2909
        %v3459 = vadd.f32 %v3331, %v2909
        %v3460 = vadd.f32 %v3332, %v2909
        %v3461 = vadd.f32 %v3333, %v2909
        %v3462 = vadd.f32 %v3334, %v2909
        %v3463 = vadd.f32 %v3335, %v2909
        %v3464 = vadd.f32 %v3336, %v2909
        %v3465 = vadd.f32 %v3337, %v2909
        %v3466 = vadd.f32 %v3338, %v2909
        %v3467 = vadd.f32 %v3339, %v2909
        %v3468 = vadd.f32 %v3340, %v2909
        %v3469 = vadd.f32 %v3341, %v2909
        %v3470 = vadd.f32 %v3342, %v2909
        %v3471 = vadd.f32 %v3343, %v2909
        %v3472 = vadd.f32 %v3344, %v2909
        %v3473 = vadd.f32 %v3345, %v2909
        %v3474 = vadd.f32 %v3346, %v2909
        %v3475 = vadd.f32 %v3347, %v2909
        %v3476 = vadd.f32 %v3348, %v2909
        %v3477 = vadd.f32 %v3349, %v2909
        %v3478 = vadd.f32 %v3350, %v2909
        %v3479 = vadd.f32 %v3351, %v2909
        %v3480 = vadd.f32 %v3352, %v2909
        %v3481 = vadd.f32 %v3353, %v2909
        %v3482 = vadd.f32 %v3354, %v2909
        %v3483 = vadd.f32 %v3355, %v2909
        %v3484 = vadd.f32 %v3356, %v2909
        %v3485 = vadd.f32 %v3357, %v2909
        %v3486 = vadd.f32 %v3358, %v2909
        %v3487 = vadd.f32 %v3359, %v2909
        %v3488 = vadd.f32 %v3360, %v2909
        %v3489 = vadd.f32 %v3361, %v2909
        %v3490 = vadd.f32 %v3362, %v2909
        %v3491 = vadd.f32 %v3363, %v2909
        %v3492 = vadd.f32 %v3364, %v2909
        %v3493 = vadd.f32 %v3365, %v2909
        %v3494 = vadd.f32 %v3366, %v2909
        %v3495 = vadd.f32 %v3367, %v2909
        %v3496 = vadd.f32 %v3368, %v2909
        %v3497 = vadd.f32 %v3369, %v2909
        %v3498 = vadd.f32 %v3370, %v2909
        %v3499 = vadd.f32 %v3371, %v2909
        %v3500 = vadd.f32 %v3372, %v2909
        %v3501 = vadd.f32 %v3373, %v2909
        %v3502 = vadd.f32 %v3374, %v2909
        %v3503 = vadd.f32 %v3375, %v2909
        %v3504 = vadd.f32 %v3376, %v2909
        %v3505 = vadd.f32 %v3377, %v2909
        %v3506 = vadd.f32 %v3378, %v2909
        %v3507 = vadd.f32 %v3379, %v2909
        %v3508 = vadd.f32 %v3380, %v2909
        %v3509 = vadd.f32 %v3381, %v2909
        %v3510 = vadd.f32 %v3382, %v2909
        %v3511 = vadd.f32 %v3383, %v2909
        %v3512 = vadd.f32 %v3384, %v2909
        %v3513 = vadd.f32 %v3385, %v2909
        %v3514 = vadd.f32 %v3386, %v2909
        %v3515 = vadd.f32 %v3387, %v2909
        %v3516 = vadd.f32 %v3388, %v2909
        %v3517 = vadd.f32 %v3389, %v2909
        %v3518 = vadd.f32 %v3390, %v2909
        %v3519 = vadd.f32 %v3391, %v2909
        %v3520 = vadd.f32 %v3392, %v2909
        %v3521 = vadd.f32 %v3393, %v2909
        %v3522 = vadd.f32 %v3394, %v2909
        %v3523 = vadd.f32 %v3395, %v2909
        %v3524 = vadd.f32 %v3396, %v2909
        %v3525 = vadd.f32 %v3397, %v2909
        %v3526 = vadd.f32 %v3398, %v2909
        %v3527 = vadd.f32 %v3399, %v2909
        %v3528 = vadd.f32 %v3400, %v2909
        %v3529 = vadd.f32 %v3401, %v2909
        %v3530 = vadd.f32 %v3402, %v2909
        %v3531 = vadd.f32 %v3403, %v2909
        %v3532 = vadd.f32 %v3404, %v2909
        %v3533 = vadd.f32 %v3405, %v2909
        %v3534 = vadd.f32 %v3406, %v2909
        %v3535 = vadd.f32 %v3407, %v2909
        %v3536 = vadd.f32 %v3408, %v2909
        %v3537 = vadd.f32 %v3409, %v2909
        %v3538 = vadd.f32 %v3410, %v2909
        %v3539 = vadd.f32 %v3411, %v2909
        %v3540 = vadd.f32 %v3412, %v2909
        %v3541 = vadd.f32 %v3413, %v2909
        %v3542 = vadd.f32 %v3414, %v2909
        %v3543 = vadd.f32 %v3415, %v2909
        %v3544 = vadd.f32 %v3416, %v2909
        %v3545 = vadd.f32 %v3417, %v2909
        %v3546 = vadd.f32 %v3418, %v2909
        %v3547 = vadd.f32 %v3419, %v2909
        %v3548 = vadd.f32 %v3420, %v2909
        %v3549 = vadd.f32 %v3421, %v2909
        %v3550 = vmax.f32 %v3422, 0.005
        %v3551 = vmax.f32 %v3423, 0.005
        %v3552 = vmax.f32 %v3424, 0.005
        %v3553 = vmax.f32 %v3425, 0.005
        %v3554 = vmax.f32 %v3426, 0.005
        %v3555 = vmax.f32 %v3427, 0.005
        %v3556 = vmax.f32 %v3428, 0.005
        %v3557 = vmax.f32 %v3429, 0.005
        %v3558 = vmax.f32 %v3430, 0.005
        %v3559 = vmax.f32 %v3431, 0.005
        %v3560 = vmax.f32 %v3432, 0.005
        %v3561 = vmax.f32 %v3433, 0.005
        %v3562 = vmax.f32 %v3434, 0.005
        %v3563 = vmax.f32 %v3435, 0.005
        %v3564 = vmax.f32 %v3436, 0.005
        %v3565 = vmax.f32 %v3437, 0.005
        %v3566 = vmax.f32 %v3438, 0.005
        %v3567 = vmax.f32 %v3439, 0.005
        %v3568 = vmax.f32 %v3440, 0.005
        %v3569 = vmax.f32 %v3441, 0.005
        %v3570 = vmax.f32 %v3442, 0.005
        %v3571 = vmax.f32 %v3443, 0.005
        %v3572 = vmax.f32 %v3444, 0.005
        %v3573 = vmax.f32 %v3445, 0.005
        %v3574 = vmax.f32 %v3446, 0.005
        %v3575 = vmax.f32 %v3447, 0.005
        %v3576 = vmax.f32 %v3448, 0.005
        %v3577 = vmax.f32 %v3449, 0.005
        %v3578 = vmax.f32 %v3450, 0.005
        %v3579 = vmax.f32 %v3451, 0.005
        %v3580 = vmax.f32 %v3452, 0.005
        %v3581 = vmax.f32 %v3453, 0.005
        %v3582 = vmax.f32 %v3454, 0.005
        %v3583 = vmax.f32 %v3455, 0.005
        %v3584 = vmax.f32 %v3456, 0.005
        %v3585 = vmax.f32 %v3457, 0.005
        %v3586 = vmax.f32 %v3458, 0.005
        %v3587 = vmax.f32 %v3459, 0.005
        %v3588 = vmax.f32 %v3460, 0.005
        %v3589 = vmax.f32 %v3461, 0.005
        %v3590 = vmax.f32 %v3462, 0.005
        %v3591 = vmax.f32 %v3463, 0.005
        %v3592 = vmax.f32 %v3464, 0.005
        %v3593 = vmax.f32 %v3465, 0.005
        %v3594 = vmax.f32 %v3466, 0.005
        %v3595 = vmax.f32 %v3467, 0.005
        %v3596 = vmax.f32 %v3468, 0.005
        %v3597 = vmax.f32 %v3469, 0.005
        %v3598 = vmax.f32 %v3470, 0.005
        %v3599 = vmax.f32 %v3471, 0.005
        %v3600 = vmax.f32 %v3472, 0.005
        %v3601 = vmax.f32 %v3473, 0.005
        %v3602 = vmax.f32 %v3474, 0.005
        %v3603 = vmax.f32 %v3475, 0.005
        %v3604 = vmax.f32 %v3476, 0.005
        %v3605 = vmax.f32 %v3477, 0.005
        %v3606 = vmax.f32 %v3478, 0.005
        %v3607 = vmax.f32 %v3479, 0.005
        %v3608 = vmax.f32 %v3480, 0.005
        %v3609 = vmax.f32 %v3481, 0.005
        %v3610 = vmax.f32 %v3482, 0.005
        %v3611 = vmax.f32 %v3483, 0.005
        %v3612 = vmax.f32 %v3484, 0.005
        %v3613 = vmax.f32 %v3485, 0.005
        %v3614 = vmax.f32 %v3486, 0.005
        %v3615 = vmax.f32 %v3487, 0.005
        %v3616 = vmax.f32 %v3488, 0.005
        %v3617 = vmax.f32 %v3489, 0.005
        %v3618 = vmax.f32 %v3490, 0.005
        %v3619 = vmax.f32 %v3491, 0.005
        %v3620 = vmax.f32 %v3492, 0.005
        %v3621 = vmax.f32 %v3493, 0.005
        %v3622 = vmax.f32 %v3494, 0.005
        %v3623 = vmax.f32 %v3495, 0.005
        %v3624 = vmax.f32 %v3496, 0.005
        %v3625 = vmax.f32 %v3497, 0.005
        %v3626 = vmax.f32 %v3498, 0.005
        %v3627 = vmax.f32 %v3499, 0.005
        %v3628 = vmax.f32 %v3500, 0.005
        %v3629 = vmax.f32 %v3501, 0.005
        %v3630 = vmax.f32 %v3502, 0.005
        %v3631 = vmax.f32 %v3503, 0.005
        %v3632 = vmax.f32 %v3504, 0.005
        %v3633 = vmax.f32 %v3505, 0.005
        %v3634 = vmax.f32 %v3506, 0.005
        %v3635 = vmax.f32 %v3507, 0.005
        %v3636 = vmax.f32 %v3508, 0.005
        %v3637 = vmax.f32 %v3509, 0.005
        %v3638 = vmax.f32 %v3510, 0.005
        %v3639 = vmax.f32 %v3511, 0.005
        %v3640 = vmax.f32 %v3512, 0.005
        %v3641 = vmax.f32 %v3513, 0.005
        %v3642 = vmax.f32 %v3514, 0.005
        %v3643 = vmax.f32 %v3515, 0.005
        %v3644 = vmax.f32 %v3516, 0.005
        %v3645 = vmax.f32 %v3517, 0.005
        %v3646 = vmax.f32 %v3518, 0.005
        %v3647 = vmax.f32 %v3519, 0.005
        %v3648 = vmax.f32 %v3520, 0.005
        %v3649 = vmax.f32 %v3521, 0.005
        %v3650 = vmax.f32 %v3522, 0.005
        %v3651 = vmax.f32 %v3523, 0.005
        %v3652 = vmax.f32 %v3524, 0.005
        %v3653 = vmax.f32 %v3525, 0.005
        %v3654 = vmax.f32 %v3526, 0.005
        %v3655 = vmax.f32 %v3527, 0.005
        %v3656 = vmax.f32 %v3528, 0.005
        %v3657 = vmax.f32 %v3529, 0.005
        %v3658 = vmax.f32 %v3530, 0.005
        %v3659 = vmax.f32 %v3531, 0.005
        %v3660 = vmax.f32 %v3532, 0.005
        %v3661 = vmax.f32 %v3533, 0.005
        %v3662 = vmax.f32 %v3534, 0.005
        %v3663 = vmax.f32 %v3535, 0.005
        %v3664 = vmax.f32 %v3536, 0.005
        %v3665 = vmax.f32 %v3537, 0.005
        %v3666 = vmax.f32 %v3538, 0.005
        %v3667 = vmax.f32 %v3539, 0.005
        %v3668 = vmax.f32 %v3540, 0.005
        %v3669 = vmax.f32 %v3541, 0.005
        %v3670 = vmax.f32 %v3542, 0.005
        %v3671 = vmax.f32 %v3543, 0.005
        %v3672 = vmax.f32 %v3544, 0.005
        %v3673 = vmax.f32 %v3545, 0.005
        %v3674 = vmax.f32 %v3546, 0.005
        %v3675 = vmax.f32 %v3547, 0.005
        %v3676 = vmax.f32 %v3548, 0.005
        %v3677 = vmax.f32 %v3549, 0.005
        %v3678 = vmin.f32 %v3550, 0.6
        %v3679 = vmin.f32 %v3551, 0.6
        %v3680 = vmin.f32 %v3552, 0.6
        %v3681 = vmin.f32 %v3553, 0.6
        %v3682 = vmin.f32 %v3554, 0.6
        %v3683 = vmin.f32 %v3555, 0.6
        %v3684 = vmin.f32 %v3556, 0.6
        %v3685 = vmin.f32 %v3557, 0.6
        %v3686 = vmin.f32 %v3558, 0.6
        %v3687 = vmin.f32 %v3559, 0.6
        %v3688 = vmin.f32 %v3560, 0.6
        %v3689 = vmin.f32 %v3561, 0.6
        %v3690 = vmin.f32 %v3562, 0.6
        %v3691 = vmin.f32 %v3563, 0.6
        %v3692 = vmin.f32 %v3564, 0.6
        %v3693 = vmin.f32 %v3565, 0.6
        %v3694 = vmin.f32 %v3566, 0.6
        %v3695 = vmin.f32 %v3567, 0.6
        %v3696 = vmin.f32 %v3568, 0.6
        %v3697 = vmin.f32 %v3569, 0.6
        %v3698 = vmin.f32 %v3570, 0.6
        %v3699 = vmin.f32 %v3571, 0.6
        %v3700 = vmin.f32 %v3572, 0.6
        %v3701 = vmin.f32 %v3573, 0.6
        %v3702 = vmin.f32 %v3574, 0.6
        %v3703 = vmin.f32 %v3575, 0.6
        %v3704 = vmin.f32 %v3576, 0.6
        %v3705 = vmin.f32 %v3577, 0.6
        %v3706 = vmin.f32 %v3578, 0.6
        %v3707 = vmin.f32 %v3579, 0.6
        %v3708 = vmin.f32 %v3580, 0.6
        %v3709 = vmin.f32 %v3581, 0.6
        %v3710 = vmin.f32 %v3582, 0.6
        %v3711 = vmin.f32 %v3583, 0.6
        %v3712 = vmin.f32 %v3584, 0.6
        %v3713 = vmin.f32 %v3585, 0.6
        %v3714 = vmin.f32 %v3586, 0.6
        %v3715 = vmin.f32 %v3587, 0.6
        %v3716 = vmin.f32 %v3588, 0.6
        %v3717 = vmin.f32 %v3589, 0.6
        %v3718 = vmin.f32 %v3590, 0.6
        %v3719 = vmin.f32 %v3591, 0.6
        %v3720 = vmin.f32 %v3592, 0.6
        %v3721 = vmin.f32 %v3593, 0.6
        %v3722 = vmin.f32 %v3594, 0.6
        %v3723 = vmin.f32 %v3595, 0.6
        %v3724 = vmin.f32 %v3596, 0.6
        %v3725 = vmin.f32 %v3597, 0.6
        %v3726 = vmin.f32 %v3598, 0.6
        %v3727 = vmin.f32 %v3599, 0.6
        %v3728 = vmin.f32 %v3600, 0.6
        %v3729 = vmin.f32 %v3601, 0.6
        %v3730 = vmin.f32 %v3602, 0.6
        %v3731 = vmin.f32 %v3603, 0.6
        %v3732 = vmin.f32 %v3604, 0.6
        %v3733 = vmin.f32 %v3605, 0.6
        %v3734 = vmin.f32 %v3606, 0.6
        %v3735 = vmin.f32 %v3607, 0.6
        %v3736 = vmin.f32 %v3608, 0.6
        %v3737 = vmin.f32 %v3609, 0.6
        %v3738 = vmin.f32 %v3610, 0.6
        %v3739 = vmin.f32 %v3611, 0.6
        %v3740 = vmin.f32 %v3612, 0.6
        %v3741 = vmin.f32 %v3613, 0.6
        %v3742 = vmin.f32 %v3614, 0.6
        %v3743 = vmin.f32 %v3615, 0.6
        %v3744 = vmin.f32 %v3616, 0.6
        %v3745 = vmin.f32 %v3617, 0.6
        %v3746 = vmin.f32 %v3618, 0.6
        %v3747 = vmin.f32 %v3619, 0.6
        %v3748 = vmin.f32 %v3620, 0.6
        %v3749 = vmin.f32 %v3621, 0.6
        %v3750 = vmin.f32 %v3622, 0.6
        %v3751 = vmin.f32 %v3623, 0.6
        %v3752 = vmin.f32 %v3624, 0.6
        %v3753 = vmin.f32 %v3625, 0.6
        %v3754 = vmin.f32 %v3626, 0.6
        %v3755 = vmin.f32 %v3627, 0.6
        %v3756 = vmin.f32 %v3628, 0.6
        %v3757 = vmin.f32 %v3629, 0.6
        %v3758 = vmin.f32 %v3630, 0.6
        %v3759 = vmin.f32 %v3631, 0.6
        %v3760 = vmin.f32 %v3632, 0.6
        %v3761 = vmin.f32 %v3633, 0.6
        %v3762 = vmin.f32 %v3634, 0.6
        %v3763 = vmin.f32 %v3635, 0.6
        %v3764 = vmin.f32 %v3636, 0.6
        %v3765 = vmin.f32 %v3637, 0.6
        %v3766 = vmin.f32 %v3638, 0.6
        %v3767 = vmin.f32 %v3639, 0.6
        %v3768 = vmin.f32 %v3640, 0.6
        %v3769 = vmin.f32 %v3641, 0.6
        %v3770 = vmin.f32 %v3642, 0.6
        %v3771 = vmin.f32 %v3643, 0.6
        %v3772 = vmin.f32 %v3644, 0.6
        %v3773 = vmin.f32 %v3645, 0.6
        %v3774 = vmin.f32 %v3646, 0.6
        %v3775 = vmin.f32 %v3647, 0.6
        %v3776 = vmin.f32 %v3648, 0.6
        %v3777 = vmin.f32 %v3649, 0.6
        %v3778 = vmin.f32 %v3650, 0.6
        %v3779 = vmin.f32 %v3651, 0.6
        %v3780 = vmin.f32 %v3652, 0.6
        %v3781 = vmin.f32 %v3653, 0.6
        %v3782 = vmin.f32 %v3654, 0.6
        %v3783 = vmin.f32 %v3655, 0.6
        %v3784 = vmin.f32 %v3656, 0.6
        %v3785 = vmin.f32 %v3657, 0.6
        %v3786 = vmin.f32 %v3658, 0.6
        %v3787 = vmin.f32 %v3659, 0.6
        %v3788 = vmin.f32 %v3660, 0.6
        %v3789 = vmin.f32 %v3661, 0.6
        %v3790 = vmin.f32 %v3662, 0.6
        %v3791 = vmin.f32 %v3663, 0.6
        %v3792 = vmin.f32 %v3664, 0.6
        %v3793 = vmin.f32 %v3665, 0.6
        %v3794 = vmin.f32 %v3666, 0.6
        %v3795 = vmin.f32 %v3667, 0.6
        %v3796 = vmin.f32 %v3668, 0.6
        %v3797 = vmin.f32 %v3669, 0.6
        %v3798 = vmin.f32 %v3670, 0.6
        %v3799 = vmin.f32 %v3671, 0.6
        %v3800 = vmin.f32 %v3672, 0.6
        %v3801 = vmin.f32 %v3673, 0.6
        %v3802 = vmin.f32 %v3674, 0.6
        %v3803 = vmin.f32 %v3675, 0.6
        %v3804 = vmin.f32 %v3676, 0.6
        %v3805 = vmin.f32 %v3677, 0.6
        %v3806 = vadd.f32 %v3678, %v2652
        %v3807 = vadd.f32 %v3679, %v2653
        %v3808 = vadd.f32 %v3680, %v2654
        %v3809 = vadd.f32 %v3681, %v2655
        %v3810 = vadd.f32 %v3682, %v2656
        %v3811 = vadd.f32 %v3683, %v2657
        %v3812 = vadd.f32 %v3684, %v2658
        %v3813 = vadd.f32 %v3685, %v2659
        %v3814 = vadd.f32 %v3686, %v2660
        %v3815 = vadd.f32 %v3687, %v2661
        %v3816 = vadd.f32 %v3688, %v2662
        %v3817 = vadd.f32 %v3689, %v2663
        %v3818 = vadd.f32 %v3690, %v2664
        %v3819 = vadd.f32 %v3691, %v2665
        %v3820 = vadd.f32 %v3692, %v2666
        %v3821 = vadd.f32 %v3693, %v2667
        %v3822 = vadd.f32 %v3694, %v2668
        %v3823 = vadd.f32 %v3695, %v2669
        %v3824 = vadd.f32 %v3696, %v2670
        %v3825 = vadd.f32 %v3697, %v2671
        %v3826 = vadd.f32 %v3698, %v2672
        %v3827 = vadd.f32 %v3699, %v2673
        %v3828 = vadd.f32 %v3700, %v2674
        %v3829 = vadd.f32 %v3701, %v2675
        %v3830 = vadd.f32 %v3702, %v2676
        %v3831 = vadd.f32 %v3703, %v2677
        %v3832 = vadd.f32 %v3704, %v2678
        %v3833 = vadd.f32 %v3705, %v2679
        %v3834 = vadd.f32 %v3706, %v2680
        %v3835 = vadd.f32 %v3707, %v2681
        %v3836 = vadd.f32 %v3708, %v2682
        %v3837 = vadd.f32 %v3709, %v2683
        %v3838 = vadd.f32 %v3710, %v2684
        %v3839 = vadd.f32 %v3711, %v2685
        %v3840 = vadd.f32 %v3712, %v2686
        %v3841 = vadd.f32 %v3713, %v2687
        %v3842 = vadd.f32 %v3714, %v2688
        %v3843 = vadd.f32 %v3715, %v2689
        %v3844 = vadd.f32 %v3716, %v2690
        %v3845 = vadd.f32 %v3717, %v2691
        %v3846 = vadd.f32 %v3718, %v2692
        %v3847 = vadd.f32 %v3719, %v2693
        %v3848 = vadd.f32 %v3720, %v2694
        %v3849 = vadd.f32 %v3721, %v2695
        %v3850 = vadd.f32 %v3722, %v2696
        %v3851 = vadd.f32 %v3723, %v2697
        %v3852 = vadd.f32 %v3724, %v2698
        %v3853 = vadd.f32 %v3725, %v2699
        %v3854 = vadd.f32 %v3726, %v2700
        %v3855 = vadd.f32 %v3727, %v2701
        %v3856 = vadd.f32 %v3728, %v2702
        %v3857 = vadd.f32 %v3729, %v2703
        %v3858 = vadd.f32 %v3730, %v2704
        %v3859 = vadd.f32 %v3731, %v2705
        %v3860 = vadd.f32 %v3732, %v2706
        %v3861 = vadd.f32 %v3733, %v2707
        %v3862 = vadd.f32 %v3734, %v2708
        %v3863 = vadd.f32 %v3735, %v2709
        %v3864 = vadd.f32 %v3736, %v2710
        %v3865 = vadd.f32 %v3737, %v2711
        %v3866 = vadd.f32 %v3738, %v2712
        %v3867 = vadd.f32 %v3739, %v2713
        %v3868 = vadd.f32 %v3740, %v2714
        %v3869 = vadd.f32 %v3741, %v2715
        %v3870 = vadd.f32 %v3742, %v2716
        %v3871 = vadd.f32 %v3743, %v2717
        %v3872 = vadd.f32 %v3744, %v2718
        %v3873 = vadd.f32 %v3745, %v2719
        %v3874 = vadd.f32 %v3746, %v2720
        %v3875 = vadd.f32 %v3747, %v2721
        %v3876 = vadd.f32 %v3748, %v2722
        %v3877 = vadd.f32 %v3749, %v2723
        %v3878 = vadd.f32 %v3750, %v2724
        %v3879 = vadd.f32 %v3751, %v2725
        %v3880 = vadd.f32 %v3752, %v2726
        %v3881 = vadd.f32 %v3753, %v2727
        %v3882 = vadd.f32 %v3754, %v2728
        %v3883 = vadd.f32 %v3755, %v2729
        %v3884 = vadd.f32 %v3756, %v2730
        %v3885 = vadd.f32 %v3757, %v2731
        %v3886 = vadd.f32 %v3758, %v2732
        %v3887 = vadd.f32 %v3759, %v2733
        %v3888 = vadd.f32 %v3760, %v2734
        %v3889 = vadd.f32 %v3761, %v2735
        %v3890 = vadd.f32 %v3762, %v2736
        %v3891 = vadd.f32 %v3763, %v2737
        %v3892 = vadd.f32 %v3764, %v2738
        %v3893 = vadd.f32 %v3765, %v2739
        %v3894 = vadd.f32 %v3766, %v2740
        %v3895 = vadd.f32 %v3767, %v2741
        %v3896 = vadd.f32 %v3768, %v2742
        %v3897 = vadd.f32 %v3769, %v2743
        %v3898 = vadd.f32 %v3770, %v2744
        %v3899 = vadd.f32 %v3771, %v2745
        %v3900 = vadd.f32 %v3772, %v2746
        %v3901 = vadd.f32 %v3773, %v2747
        %v3902 = vadd.f32 %v3774, %v2748
        %v3903 = vadd.f32 %v3775, %v2749
        %v3904 = vadd.f32 %v3776, %v2750
        %v3905 = vadd.f32 %v3777, %v2751
        %v3906 = vadd.f32 %v3778, %v2752
        %v3907 = vadd.f32 %v3779, %v2753
        %v3908 = vadd.f32 %v3780, %v2754
        %v3909 = vadd.f32 %v3781, %v2755
        %v3910 = vadd.f32 %v3782, %v2756
        %v3911 = vadd.f32 %v3783, %v2757
        %v3912 = vadd.f32 %v3784, %v2758
        %v3913 = vadd.f32 %v3785, %v2759
        %v3914 = vadd.f32 %v3786, %v2760
        %v3915 = vadd.f32 %v3787, %v2761
        %v3916 = vadd.f32 %v3788, %v2762
        %v3917 = vadd.f32 %v3789, %v2763
        %v3918 = vadd.f32 %v3790, %v2764
        %v3919 = vadd.f32 %v3791, %v2765
        %v3920 = vadd.f32 %v3792, %v2766
        %v3921 = vadd.f32 %v3793, %v2767
        %v3922 = vadd.f32 %v3794, %v2768
        %v3923 = vadd.f32 %v3795, %v2769
        %v3924 = vadd.f32 %v3796, %v2770
        %v3925 = vadd.f32 %v3797, %v2771
        %v3926 = vadd.f32 %v3798, %v2772
        %v3927 = vadd.f32 %v3799, %v2773
        %v3928 = vadd.f32 %v3800, %v2774
        %v3929 = vadd.f32 %v3801, %v2775
        %v3930 = vadd.f32 %v3802, %v2776
        %v3931 = vadd.f32 %v3803, %v2777
        %v3932 = vadd.f32 %v3804, %v2778
        %v3933 = vadd.f32 %v3805, %v2779
        %v3934 = vmul.f32 %v3806, %v2652
        %v3935 = vmul.f32 %v3807, %v2653
        %v3936 = vmul.f32 %v3808, %v2654
        %v3937 = vmul.f32 %v3809, %v2655
        %v3938 = vmul.f32 %v3810, %v2656
        %v3939 = vmul.f32 %v3811, %v2657
        %v3940 = vmul.f32 %v3812, %v2658
        %v3941 = vmul.f32 %v3813, %v2659
        %v3942 = vmul.f32 %v3814, %v2660
        %v3943 = vmul.f32 %v3815, %v2661
        %v3944 = vmul.f32 %v3816, %v2662
        %v3945 = vmul.f32 %v3817, %v2663
        %v3946 = vmul.f32 %v3818, %v2664
        %v3947 = vmul.f32 %v3819, %v2665
        %v3948 = vmul.f32 %v3820, %v2666
        %v3949 = vmul.f32 %v3821, %v2667
        %v3950 = vmul.f32 %v3822, %v2668
        %v3951 = vmul.f32 %v3823, %v2669
        %v3952 = vmul.f32 %v3824, %v2670
        %v3953 = vmul.f32 %v3825, %v2671
        %v3954 = vmul.f32 %v3826, %v2672
        %v3955 = vmul.f32 %v3827, %v2673
        %v3956 = vmul.f32 %v3828, %v2674
        %v3957 = vmul.f32 %v3829, %v2675
        %v3958 = vmul.f32 %v3830, %v2676
        %v3959 = vmul.f32 %v3831, %v2677
        %v3960 = vmul.f32 %v3832, %v2678
        %v3961 = vmul.f32 %v3833, %v2679
        %v3962 = vmul.f32 %v3834, %v2680
        %v3963 = vmul.f32 %v3835, %v2681
        %v3964 = vmul.f32 %v3836, %v2682
        %v3965 = vmul.f32 %v3837, %v2683
        %v3966 = vmul.f32 %v3838, %v2684
        %v3967 = vmul.f32 %v3839, %v2685
        %v3968 = vmul.f32 %v3840, %v2686
        %v3969 = vmul.f32 %v3841, %v2687
        %v3970 = vmul.f32 %v3842, %v2688
        %v3971 = vmul.f32 %v3843, %v2689
        %v3972 = vmul.f32 %v3844, %v2690
        %v3973 = vmul.f32 %v3845, %v2691
        %v3974 = vmul.f32 %v3846, %v2692
        %v3975 = vmul.f32 %v3847, %v2693
        %v3976 = vmul.f32 %v3848, %v2694
        %v3977 = vmul.f32 %v3849, %v2695
        %v3978 = vmul.f32 %v3850, %v2696
        %v3979 = vmul.f32 %v3851, %v2697
        %v3980 = vmul.f32 %v3852, %v2698
        %v3981 = vmul.f32 %v3853, %v2699
        %v3982 = vmul.f32 %v3854, %v2700
        %v3983 = vmul.f32 %v3855, %v2701
        %v3984 = vmul.f32 %v3856, %v2702
        %v3985 = vmul.f32 %v3857, %v2703
        %v3986 = vmul.f32 %v3858, %v2704
        %v3987 = vmul.f32 %v3859, %v2705
        %v3988 = vmul.f32 %v3860, %v2706
        %v3989 = vmul.f32 %v3861, %v2707
        %v3990 = vmul.f32 %v3862, %v2708
        %v3991 = vmul.f32 %v3863, %v2709
        %v3992 = vmul.f32 %v3864, %v2710
        %v3993 = vmul.f32 %v3865, %v2711
        %v3994 = vmul.f32 %v3866, %v2712
        %v3995 = vmul.f32 %v3867, %v2713
        %v3996 = vmul.f32 %v3868, %v2714
        %v3997 = vmul.f32 %v3869, %v2715
        %v3998 = vmul.f32 %v3870, %v2716
        %v3999 = vmul.f32 %v3871, %v2717
        %v4000 = vmul.f32 %v3872, %v2718
        %v4001 = vmul.f32 %v3873, %v2719
        %v4002 = vmul.f32 %v3874, %v2720
        %v4003 = vmul.f32 %v3875, %v2721
        %v4004 = vmul.f32 %v3876, %v2722
        %v4005 = vmul.f32 %v3877, %v2723
        %v4006 = vmul.f32 %v3878, %v2724
        %v4007 = vmul.f32 %v3879, %v2725
        %v4008 = vmul.f32 %v3880, %v2726
        %v4009 = vmul.f32 %v3881, %v2727
        %v4010 = vmul.f32 %v3882, %v2728
        %v4011 = vmul.f32 %v3883, %v2729
        %v4012 = vmul.f32 %v3884, %v2730
        %v4013 = vmul.f32 %v3885, %v2731
        %v4014 = vmul.f32 %v3886, %v2732
        %v4015 = vmul.f32 %v3887, %v2733
        %v4016 = vmul.f32 %v3888, %v2734
        %v4017 = vmul.f32 %v3889, %v2735
        %v4018 = vmul.f32 %v3890, %v2736
        %v4019 = vmul.f32 %v3891, %v2737
        %v4020 = vmul.f32 %v3892, %v2738
        %v4021 = vmul.f32 %v3893, %v2739
        %v4022 = vmul.f32 %v3894, %v2740
        %v4023 = vmul.f32 %v3895, %v2741
        %v4024 = vmul.f32 %v3896, %v2742
        %v4025 = vmul.f32 %v3897, %v2743
        %v4026 = vmul.f32 %v3898, %v2744
        %v4027 = vmul.f32 %v3899, %v2745
        %v4028 = vmul.f32 %v3900, %v2746
        %v4029 = vmul.f32 %v3901, %v2747
        %v4030 = vmul.f32 %v3902, %v2748
        %v4031 = vmul.f32 %v3903, %v2749
        %v4032 = vmul.f32 %v3904, %v2750
        %v4033 = vmul.f32 %v3905, %v2751
        %v4034 = vmul.f32 %v3906, %v2752
        %v4035 = vmul.f32 %v3907, %v2753
        %v4036 = vmul.f32 %v3908, %v2754
        %v4037 = vmul.f32 %v3909, %v2755
        %v4038 = vmul.f32 %v3910, %v2756
        %v4039 = vmul.f32 %v3911, %v2757
        %v4040 = vmul.f32 %v3912, %v2758
        %v4041 = vmul.f32 %v3913, %v2759
        %v4042 = vmul.f32 %v3914, %v2760
        %v4043 = vmul.f32 %v3915, %v2761
        %v4044 = vmul.f32 %v3916, %v2762
        %v4045 = vmul.f32 %v3917, %v2763
        %v4046 = vmul.f32 %v3918, %v2764
        %v4047 = vmul.f32 %v3919, %v2765
        %v4048 = vmul.f32 %v3920, %v2766
        %v4049 = vmul.f32 %v3921, %v2767
        %v4050 = vmul.f32 %v3922, %v2768
        %v4051 = vmul.f32 %v3923, %v2769
        %v4052 = vmul.f32 %v3924, %v2770
        %v4053 = vmul.f32 %v3925, %v2771
        %v4054 = vmul.f32 %v3926, %v2772
        %v4055 = vmul.f32 %v3927, %v2773
        %v4056 = vmul.f32 %v3928, %v2774
        %v4057 = vmul.f32 %v3929, %v2775
        %v4058 = vmul.f32 %v3930, %v2776
        %v4059 = vmul.f32 %v3931, %v2777
        %v4060 = vmul.f32 %v3932, %v2778
        %v4061 = vmul.f32 %v3933, %v2779
        %4062 = vst [vmem:[%s228] sm:$0xff] %v3934
        %4063 = vst [vmem:[%s228 + $0x8] sm:$0xff] %v3935
        %4064 = vst [vmem:[%s228 + $0x10] sm:$0xff] %v3936
        %4065 = vst [vmem:[%s228 + $0x18] sm:$0xff] %v3937
        %4066 = vst [vmem:[%s228 + $0x20] sm:$0xff] %v3938
        %4067 = vst [vmem:[%s228 + $0x28] sm:$0xff] %v3939
        %4068 = vst [vmem:[%s228 + $0x30] sm:$0xff] %v3940
        %4069 = vst [vmem:[%s228 + $0x38] sm:$0xff] %v3941
        %4070 = vst [vmem:[%s228 + $0x40] sm:$0xff] %v3942
        %4071 = vst [vmem:[%s228 + $0x48] sm:$0xff] %v3943
        %4072 = vst [vmem:[%s228 + $0x50] sm:$0xff] %v3944
        %4073 = vst [vmem:[%s228 + $0x58] sm:$0xff] %v3945
        %4074 = vst [vmem:[%s228 + $0x60] sm:$0xff] %v3946
        %4075 = vst [vmem:[%s228 + $0x68] sm:$0xff] %v3947
        %4076 = vst [vmem:[%s228 + $0x70] sm:$0xff] %v3948
        %4077 = vst [vmem:[%s228 + $0x78] sm:$0xff] %v3949
        %4078 = vst [vmem:[%s228 + $0x80] sm:$0xff] %v3950
        %4079 = vst [vmem:[%s228 + $0x88] sm:$0xff] %v3951
        %4080 = vst [vmem:[%s228 + $0x90] sm:$0xff] %v3952
        %4081 = vst [vmem:[%s228 + $0x98] sm:$0xff] %v3953
        %4082 = vst [vmem:[%s228 + $0xa0] sm:$0xff] %v3954
        %4083 = vst [vmem:[%s228 + $0xa8] sm:$0xff] %v3955
        %4084 = vst [vmem:[%s228 + $0xb0] sm:$0xff] %v3956
        %4085 = vst [vmem:[%s228 + $0xb8] sm:$0xff] %v3957
        %4086 = vst [vmem:[%s228 + $0xc0] sm:$0xff] %v3958
        %4087 = vst [vmem:[%s228 + $0xc8] sm:$0xff] %v3959
        %4088 = vst [vmem:[%s228 + $0xd0] sm:$0xff] %v3960
        %4089 = vst [vmem:[%s228 + $0xd8] sm:$0xff] %v3961
        %4090 = vst [vmem:[%s228 + $0xe0] sm:$0xff] %v3962
        %4091 = vst [vmem:[%s228 + $0xe8] sm:$0xff] %v3963
        %4092 = vst [vmem:[%s228 + $0xf0] sm:$0xff] %v3964
        %4093 = vst [vmem:[%s228 + $0xf8] sm:$0xff] %v3965
        %4094 = vst [vmem:[%s228 + $0x100] sm:$0xff] %v3966
        %4095 = vst [vmem:[%s228 + $0x108] sm:$0xff] %v3967
        %4096 = vst [vmem:[%s228 + $0x110] sm:$0xff] %v3968
        %4097 = vst [vmem:[%s228 + $0x118] sm:$0xff] %v3969
        %4098 = vst [vmem:[%s228 + $0x120] sm:$0xff] %v3970
        %4099 = vst [vmem:[%s228 + $0x128] sm:$0xff] %v3971
        %4100 = vst [vmem:[%s228 + $0x130] sm:$0xff] %v3972
        %4101 = vst [vmem:[%s228 + $0x138] sm:$0xff] %v3973
        %4102 = vst [vmem:[%s228 + $0x140] sm:$0xff] %v3974
        %4103 = vst [vmem:[%s228 + $0x148] sm:$0xff] %v3975
        %4104 = vst [vmem:[%s228 + $0x150] sm:$0xff] %v3976
        %4105 = vst [vmem:[%s228 + $0x158] sm:$0xff] %v3977
        %4106 = vst [vmem:[%s228 + $0x160] sm:$0xff] %v3978
        %4107 = vst [vmem:[%s228 + $0x168] sm:$0xff] %v3979
        %4108 = vst [vmem:[%s228 + $0x170] sm:$0xff] %v3980
        %4109 = vst [vmem:[%s228 + $0x178] sm:$0xff] %v3981
        %4110 = vst [vmem:[%s228 + $0x180] sm:$0xff] %v3982
        %4111 = vst [vmem:[%s228 + $0x188] sm:$0xff] %v3983
        %4112 = vst [vmem:[%s228 + $0x190] sm:$0xff] %v3984
        %4113 = vst [vmem:[%s228 + $0x198] sm:$0xff] %v3985
        %4114 = vst [vmem:[%s228 + $0x1a0] sm:$0xff] %v3986
        %4115 = vst [vmem:[%s228 + $0x1a8] sm:$0xff] %v3987
        %4116 = vst [vmem:[%s228 + $0x1b0] sm:$0xff] %v3988
        %4117 = vst [vmem:[%s228 + $0x1b8] sm:$0xff] %v3989
        %4118 = vst [vmem:[%s228 + $0x1c0] sm:$0xff] %v3990
        %4119 = vst [vmem:[%s228 + $0x1c8] sm:$0xff] %v3991
        %4120 = vst [vmem:[%s228 + $0x1d0] sm:$0xff] %v3992
        %4121 = vst [vmem:[%s228 + $0x1d8] sm:$0xff] %v3993
        %4122 = vst [vmem:[%s228 + $0x1e0] sm:$0xff] %v3994
        %4123 = vst [vmem:[%s228 + $0x1e8] sm:$0xff] %v3995
        %4124 = vst [vmem:[%s228 + $0x1f0] sm:$0xff] %v3996
        %4125 = vst [vmem:[%s228 + $0x1f8] sm:$0xff] %v3997
        %4126 = vst [vmem:[%s228 + $0x200] sm:$0xff] %v3998
        %4127 = vst [vmem:[%s228 + $0x208] sm:$0xff] %v3999
        %4128 = vst [vmem:[%s228 + $0x210] sm:$0xff] %v4000
        %4129 = vst [vmem:[%s228 + $0x218] sm:$0xff] %v4001
        %4130 = vst [vmem:[%s228 + $0x220] sm:$0xff] %v4002
        %4131 = vst [vmem:[%s228 + $0x228] sm:$0xff] %v4003
        %4132 = vst [vmem:[%s228 + $0x230] sm:$0xff] %v4004
        %4133 = vst [vmem:[%s228 + $0x238] sm:$0xff] %v4005
        %4134 = vst [vmem:[%s228 + $0x240] sm:$0xff] %v4006
        %4135 = vst [vmem:[%s228 + $0x248] sm:$0xff] %v4007
        %4136 = vst [vmem:[%s228 + $0x250] sm:$0xff] %v4008
        %4137 = vst [vmem:[%s228 + $0x258] sm:$0xff] %v4009
        %4138 = vst [vmem:[%s228 + $0x260] sm:$0xff] %v4010
        %4139 = vst [vmem:[%s228 + $0x268] sm:$0xff] %v4011
        %4140 = vst [vmem:[%s228 + $0x270] sm:$0xff] %v4012
        %4141 = vst [vmem:[%s228 + $0x278] sm:$0xff] %v4013
        %4142 = vst [vmem:[%s228 + $0x280] sm:$0xff] %v4014
        %4143 = vst [vmem:[%s228 + $0x288] sm:$0xff] %v4015
        %4144 = vst [vmem:[%s228 + $0x290] sm:$0xff] %v4016
        %4145 = vst [vmem:[%s228 + $0x298] sm:$0xff] %v4017
        %4146 = vst [vmem:[%s228 + $0x2a0] sm:$0xff] %v4018
        %4147 = vst [vmem:[%s228 + $0x2a8] sm:$0xff] %v4019
        %4148 = vst [vmem:[%s228 + $0x2b0] sm:$0xff] %v4020
        %4149 = vst [vmem:[%s228 + $0x2b8] sm:$0xff] %v4021
        %4150 = vst [vmem:[%s228 + $0x2c0] sm:$0xff] %v4022
        %4151 = vst [vmem:[%s228 + $0x2c8] sm:$0xff] %v4023
        %4152 = vst [vmem:[%s228 + $0x2d0] sm:$0xff] %v4024
        %4153 = vst [vmem:[%s228 + $0x2d8] sm:$0xff] %v4025
        %4154 = vst [vmem:[%s228 + $0x2e0] sm:$0xff] %v4026
        %4155 = vst [vmem:[%s228 + $0x2e8] sm:$0xff] %v4027
        %4156 = vst [vmem:[%s228 + $0x2f0] sm:$0xff] %v4028
        %4157 = vst [vmem:[%s228 + $0x2f8] sm:$0xff] %v4029
        %4158 = vst [vmem:[%s228 + $0x300] sm:$0xff] %v4030
        %4159 = vst [vmem:[%s228 + $0x308] sm:$0xff] %v4031
        %4160 = vst [vmem:[%s228 + $0x310] sm:$0xff] %v4032
        %4161 = vst [vmem:[%s228 + $0x318] sm:$0xff] %v4033
        %4162 = vst [vmem:[%s228 + $0x320] sm:$0xff] %v4034
        %4163 = vst [vmem:[%s228 + $0x328] sm:$0xff] %v4035
        %4164 = vst [vmem:[%s228 + $0x330] sm:$0xff] %v4036
        %4165 = vst [vmem:[%s228 + $0x338] sm:$0xff] %v4037
        %4166 = vst [vmem:[%s228 + $0x340] sm:$0xff] %v4038
        %4167 = vst [vmem:[%s228 + $0x348] sm:$0xff] %v4039
        %4168 = vst [vmem:[%s228 + $0x350] sm:$0xff] %v4040
        %4169 = vst [vmem:[%s228 + $0x358] sm:$0xff] %v4041
        %4170 = vst [vmem:[%s228 + $0x360] sm:$0xff] %v4042
        %4171 = vst [vmem:[%s228 + $0x368] sm:$0xff] %v4043
        %4172 = vst [vmem:[%s228 + $0x370] sm:$0xff] %v4044
        %4173 = vst [vmem:[%s228 + $0x378] sm:$0xff] %v4045
        %4174 = vst [vmem:[%s228 + $0x380] sm:$0xff] %v4046
        %4175 = vst [vmem:[%s228 + $0x388] sm:$0xff] %v4047
        %4176 = vst [vmem:[%s228 + $0x390] sm:$0xff] %v4048
        %4177 = vst [vmem:[%s228 + $0x398] sm:$0xff] %v4049
        %4178 = vst [vmem:[%s228 + $0x3a0] sm:$0xff] %v4050
        %4179 = vst [vmem:[%s228 + $0x3a8] sm:$0xff] %v4051
        %4180 = vst [vmem:[%s228 + $0x3b0] sm:$0xff] %v4052
        %4181 = vst [vmem:[%s228 + $0x3b8] sm:$0xff] %v4053
        %4182 = vst [vmem:[%s228 + $0x3c0] sm:$0xff] %v4054
        %4183 = vst [vmem:[%s228 + $0x3c8] sm:$0xff] %v4055
        %4184 = vst [vmem:[%s228 + $0x3d0] sm:$0xff] %v4056
        %4185 = vst [vmem:[%s228 + $0x3d8] sm:$0xff] %v4057
        %4186 = vst [vmem:[%s228 + $0x3e0] sm:$0xff] %v4058
        %4187 = vst [vmem:[%s228 + $0x3e8] sm:$0xff] %v4059
        %4188 = vst [vmem:[%s228 + $0x3f0] sm:$0xff] %v4060
        %4189 = vst [vmem:[%s228 + $0x3f8] sm:$0xff] %v4061
        %s4190 = sand.u32 %s122, 1
        %s4191 = scalar_lea.sflag [#allocation10], %s4190
        %s4192 = sand.u32 %s122, 1
        %s4193 = smul.addr %s4192, 1024
        %s4194 = scalar_lea.vmem [#allocation9], %s4193
        // Predicated region
        $region37: #{model_forward.2} parent=35 // pred_check
          %p4195 = pneg %p132
        $region38: #{model_forward.2} parent=35 // pred_check_branch
          %4197 = sbr.rel (%p4195) target = $region40
        $region39: #{model_forward.2} parent=35 // pred_region
          %s4198 = smul.u32 32, %s20
          %s4200 = ssub.s32 16384, 16384
          %4201 = vsyncadd %s4191, %s4200
          %s4202 = smul.addr %s4198, 4
          %s4203 = smul.addr %s4202, 128
          %s4204 = scalar_lea.hbm %s4, %s4203
          %s4205 = sshll.u32 %s4194, 4
          %s4206 = int_to_ptr.vmem [resolvable:$true] %s4205
          %4211 = dma.vmem_to_hbm [thread:$0]  %s4206, 16384, %s4204, %s4191, 512, 512, 32
        $region40: #{model_forward.2} parent=35 // pred_fallthru
          _
      $region36: #{model_forward.2} parent=5 // pred_fallthru
        _
      %p4212 = scmp.le.s32.totalorder 2, %s15
      // Predicated region
      $region41: #{model_forward.2} parent=5 // pred_check
        %p4213 = pneg %p4212
      $region42: #{model_forward.2} parent=5 // pred_check_branch
        %4215 = sbr.rel (%p4213) target = $region44
      $region43: #{model_forward.2} parent=5 // pred_region
        %s4216 = ssub.s32 %s15, 2
        // Predicated region
        $region45: #{model_forward.2} parent=43 // pred_check
          %p4217 = pneg %p138
        $region46: #{model_forward.2} parent=43 // pred_check_branch
          %4219 = sbr.rel (%p4217) target = $region48
        $region47: #{model_forward.2} parent=43 // pred_region
          %s4220 = sand.u32 %s123, 1
          %s4221 = scalar_lea.sflag [#allocation10], %s4220
          %s4222 = sand.u32 %s123, 1
          %s4223 = smul.addr %s4222, 1024
          %s4224 = scalar_lea.vmem [#allocation9], %s4223
          %4225 = dma.done %s4221, 16384
        $region48: #{model_forward.2} parent=43 // pred_fallthru
          _
      $region44: #{model_forward.2} parent=5 // pred_fallthru
        _
    $region6: #{model_forward.2} parent=1 // loop_footer
      %s19 = sadd.s32 1, %s15
    $region7: #{model_forward.2} parent=1 // loop_footer_branch
      %14 = sbr.rel target = $region3
    $region8: #{model_forward.2} parent=1 // loop_exit
      _
    %4226 = vsyncpa [#allocation10], 1
    %s4227 = scalar_lea.sflag [#allocation10], 1
    %4228 = vsyncpa %s4227, 1

</llo_original>
